<compile_context>
chip_gen: v7x
topology: tpu7x:2x2x1
jax: 0.10.0
libtpu: 0.0.40
codegen_flags: <defaults>
</compile_context>

<pallas_src>
import functools

import jax
import jax.numpy as jnp
import numpy as np
from jax.experimental import pallas as pl
from jax.experimental.pallas import tpu as pltpu

_NEG = -1e30  # finite mask sentinel (avoids -inf -> NaN rows)


def _prob_attention_kernel(xq_ref, xk_ref, xv_ref, mask_ref, cnt_ref,
                           wq_ref, wk_ref, wv_ref, wfc_ref,
                           gamma_ref, beta_ref, out_ref,
                           *, n_heads, d_k, d_v, u_k, u_q):
    f32 = jnp.float32
    H = n_heads

    xq = xq_ref[0].astype(f32)          # (Lq, D)
    xk = xk_ref[0].astype(f32)          # (Lk, D)
    xv = xv_ref[0].astype(f32)          # (Lk, D)
    Lq, D = xq.shape
    Lk = xk.shape[0]

    # ---- head-major projections (scale already folded into W_Q on host) ----
    xq_b = jnp.broadcast_to(xq, (H, Lq, D))
    xk_b = jnp.broadcast_to(xk, (H, Lk, D))
    xv_b = jnp.broadcast_to(xv, (H, Lk, D))
    Q = jnp.einsum('hqe,hde->hqd', xq_b, wq_ref[...],
                   preferred_element_type=f32)            # (H, Lq, d_k)
    K = jnp.einsum('hke,hde->hkd', xk_b, wk_ref[...],
                   preferred_element_type=f32)            # (H, Lk, d_k)
    V = jnp.einsum('hke,hve->hkv', xv_b, wv_ref[...],
                   preferred_element_type=f32)            # (H, Lk, d_v)

    # ---- scaled scores for every query row (MXU, batched over heads) ----
    S = jnp.einsum('hqd,hkd->hqk', Q, K,
                   preferred_element_type=f32)            # (H, Lq, Lk)

    # ---- sparsity measure M over the randomly sampled keys ----
    cnt = cnt_ref[...]                                    # (Lq, Lk) sample counts
    samp_sum = jnp.sum(S * cnt[None, :, :], axis=-1)      # (H, Lq)
    samp_max = jnp.max(jnp.where(cnt[None, :, :] > 0.0, S, _NEG), axis=-1)
    M = samp_max - samp_sum * (1.0 / float(max(u_k, 1)))  # (H, Lq)

    # ---- top-u_q query selection per head via rank counting ----
    qid = jax.lax.broadcasted_iota(jnp.int32, (Lq, Lq), 0)[None, :, :]
    pid = jax.lax.broadcasted_iota(jnp.int32, (Lq, Lq), 1)[None, :, :]
    Mq = M[:, :, None]
    Mp = M[:, None, :]
    beats = (Mp > Mq) | ((Mp == Mq) & (pid < qid))
    rank = jnp.sum(beats.astype(f32), axis=-1)            # (H, Lq)
    selected = rank < float(u_q)                          # (H, Lq) bool

    # ---- masked, unnormalised softmax weights for every row ----
    mask_b = mask_ref[0] != 0                             # (Lq, Lk) bool
    Sm = jnp.where(mask_b[None, :, :], _NEG, S)
    row_max = jnp.max(Sm, axis=-1, keepdims=True)
    p = jnp.exp(Sm - row_max)                             # (H, Lq, Lk)
    denom = jnp.sum(p, axis=-1)                           # (H, Lq)

    # ---- initial context (cumsum of V) as lower-triangular weights ----
    tri = (jax.lax.broadcasted_iota(jnp.int32, (Lq, Lk), 0) >=
           jax.lax.broadcasted_iota(jnp.int32, (Lq, Lk), 1)).astype(f32)

    # Fuse the scatter: selected rows -> attention weights, others -> cumsum.
    w_tot = jnp.where(selected[:, :, None], p, tri[None, :, :])   # (H, Lq, Lk)
    ctx = jnp.einsum('hqk,hkv->hqv', w_tot, V,
                     preferred_element_type=f32)          # (H, Lq, d_v)
    # Normalise selected rows AFTER the PV matmul (O(Lq*d_v) instead of Lq*Lk).
    inv = jnp.where(selected, 1.0 / denom, 1.0)           # (H, Lq)
    ctx = ctx * inv[:, :, None]

    # ---- output projection summed over heads (no (H,Lq,dv) transpose) ----
    outh = jnp.einsum('hqv,hve->hqe', ctx, wfc_ref[...],
                      preferred_element_type=f32)         # (H, Lq, D)
    out = jnp.sum(outh, axis=0)                           # (Lq, D)

    # ---- residual + LayerNorm (eps=1e-5, affine); dropout = identity ----
    y = out + xq
    mean = jnp.mean(y, axis=-1, keepdims=True)
    var = jnp.mean((y - mean) * (y - mean), axis=-1, keepdims=True)
    normed = (y - mean) * jax.lax.rsqrt(var + 1e-5)
    out_ref[0] = (normed * gamma_ref[...] + beta_ref[...]).astype(out_ref.dtype)


def prob_attention(input_Q, input_K, input_V, attn_mask, index_sample,
                   W_Q, W_K, W_V, W_fc, gamma, beta,
                   *, n_heads, d_k, d_v, c):
    """ProbAttention forward.

    input_Q: [B, L_Q, D]; input_K/V: [B, L_K, D]; attn_mask: [B, L_Q, L_K]
    (nonzero = masked).  index_sample: [L_Q, u_k] random key indices (the
    torch.randint sample).  Weights are in PyTorch nn.Linear layout
    ([out_features, in_features]).  gamma/beta: [D]."""
    B, L_Q, D = input_Q.shape
    L_K = input_K.shape[1]
    # The module's cumsum-context / scatter / residual path needs L_K == L_Q.
    assert L_K == L_Q and input_V.shape[1] == L_K

    u_k = int(index_sample.shape[1])
    u_q = min(int(c * np.log(L_Q)), L_Q)

    # Host-side prep (perf feedback): fold 1/sqrt(d_k) into W_Q, head-major
    # weight layouts, int8 mask, sampled-key count matrix.
    scale = 1.0 / np.sqrt(d_k)
    Wq3 = (W_Q * scale).reshape(n_heads, d_k, D)          # (H, d_k, D)
    Wk3 = W_K.reshape(n_heads, d_k, D)                    # (H, d_k, D)
    Wv3 = W_V.reshape(n_heads, d_v, D)                    # (H, d_v, D)
    Wfc3 = W_fc.reshape(D, n_heads, d_v).transpose(1, 2, 0)   # (H, d_v, D)
    mask_i8 = (attn_mask != 0).astype(jnp.int8)           # (B, L_Q, L_K)
    cnt = jax.nn.one_hot(index_sample, L_K,
                         dtype=jnp.float32).sum(axis=1)   # (L_Q, L_K)
    gamma2 = gamma.reshape(1, D)
    beta2 = beta.reshape(1, D)

    kernel = functools.partial(_prob_attention_kernel,
                               n_heads=n_heads, d_k=d_k, d_v=d_v,
                               u_k=u_k, u_q=u_q)

    grid_spec = pltpu.PrefetchScalarGridSpec(
        num_scalar_prefetch=0,
        grid=(B,),
        in_specs=[
            pl.BlockSpec((1, L_Q, D), lambda b: (b, 0, 0)),         # input_Q
            pl.BlockSpec((1, L_K, D), lambda b: (b, 0, 0)),         # input_K
            pl.BlockSpec((1, L_K, D), lambda b: (b, 0, 0)),         # input_V
            pl.BlockSpec((1, L_Q, L_K), lambda b: (b, 0, 0)),       # mask (int8)
            pl.BlockSpec((L_Q, L_K), lambda b: (0, 0)),             # sample counts
            pl.BlockSpec((n_heads, d_k, D), lambda b: (0, 0, 0)),   # W_Q (scaled)
            pl.BlockSpec((n_heads, d_k, D), lambda b: (0, 0, 0)),   # W_K
            pl.BlockSpec((n_heads, d_v, D), lambda b: (0, 0, 0)),   # W_V
            pl.BlockSpec((n_heads, d_v, D), lambda b: (0, 0, 0)),   # W_fc
            pl.BlockSpec((1, D), lambda b: (0, 0)),                 # gamma
            pl.BlockSpec((1, D), lambda b: (0, 0)),                 # beta
        ],
        out_specs=pl.BlockSpec((1, L_Q, D), lambda b: (b, 0, 0)),
    )

    return pl.pallas_call(
        kernel,
        out_shape=jax.ShapeDtypeStruct((B, L_Q, D), input_Q.dtype),
        grid_spec=grid_spec,
        compiler_params=pltpu.CompilerParams(
            dimension_semantics=("parallel",)),
    )(input_Q, input_K, input_V, mask_i8, cnt,
      Wq3, Wk3, Wv3, Wfc3, gamma2, beta2)


def prob_attention_ref(input_Q, input_K, input_V, attn_mask, index_sample,
                       W_Q, W_K, W_V, W_fc, gamma, beta,
                       *, n_heads, d_k, d_v, c):
    """Pure-JAX reference mirroring the PyTorch ProbAttention forward
    (eval mode, mix=False, same -1e30 sentinel, same key sample)."""
    B, L_Q, D = input_Q.shape
    L_K = input_K.shape[1]
    u_q = min(int(c * np.log(L_Q)), L_Q)

    Q = (input_Q @ W_Q.T).reshape(B, L_Q, n_heads, d_k).transpose(0, 2, 1, 3)
    K = (input_K @ W_K.T).reshape(B, L_K, n_heads, d_k).transpose(0, 2, 1, 3)
    V = (input_V @ W_V.T).reshape(B, L_K, n_heads, d_v).transpose(0, 2, 1, 3)

    # _prob_QK with the provided random sample indices.
    K_samp = K[:, :, index_sample, :]                         # (B,H,L_Q,u_k,d_k)
    QK_samp = jnp.einsum('bhqd,bhqjd->bhqj', Q, K_samp)
    M = QK_samp.max(axis=-1) - QK_samp.mean(axis=-1)          # (B,H,L_Q)
    idx = jax.lax.top_k(M, u_q)[1]                            # (B,H,u_q)
    Q_samp = jnp.take_along_axis(Q, idx[..., None], axis=2)   # (B,H,u_q,d_k)

    scores = jnp.einsum('bhud,bhkd->bhuk', Q_samp, K) / np.sqrt(d_k)
    mask4 = jnp.broadcast_to((attn_mask != 0)[:, None, :, :],
                             (B, n_heads, L_Q, L_K))
    mask_sel = jnp.take_along_axis(mask4, idx[..., None], axis=2)
    scores = jnp.where(mask_sel, _NEG, scores)
    attn = jax.nn.softmax(scores, axis=-1)
    values = jnp.einsum('bhuk,bhkd->bhud', attn, V)           # (B,H,u_q,d_v)

    context = jnp.cumsum(V, axis=2)                           # mask-not-None path
    b_idx = jnp.arange(B)[:, None, None]
    h_idx = jnp.arange(n_heads)[None, :, None]
    context = context.at[b_idx, h_idx, idx].set(values)
    context = context.transpose(0, 2, 1, 3).reshape(B, L_K, n_heads * d_v)

    out = context @ W_fc.T
    y = out + input_Q
    mean = jnp.mean(y, axis=-1, keepdims=True)
    var = jnp.mean((y - mean) ** 2, axis=-1, keepdims=True)
    return (y - mean) / jnp.sqrt(var + 1e-5) * gamma + beta


if __name__ == "__main__":
    # Module config (small, consistent with the forward pass).
    d_model = 32
    n_heads = 4
    d_k = 8
    d_v = 8
    c = 2.0
    B = 2
    L = 8

    key = jax.random.PRNGKey(0)
    k_wq, k_wk, k_wv, k_fc, k_q, k_k, k_v, k_samp = jax.random.split(key, 8)

    def lin_w(k, fan_out, fan_in):
        bound = 1.0 / np.sqrt(fan_in)
        # PyTorch nn.Linear layout: [out_features, in_features]
        return jax.random.uniform(k, (fan_out, fan_in), jnp.float32,
                                  -bound, bound)

    W_Q = lin_w(k_wq, n_heads * d_k, d_model)
    W_K = lin_w(k_wk, n_heads * d_k, d_model)
    W_V = lin_w(k_wv, n_heads * d_v, d_model)
    W_fc = lin_w(k_fc, d_model, n_heads * d_v)
    gamma = jnp.ones((d_model,), jnp.float32)
    beta = jnp.zeros((d_model,), jnp.float32)

    input_Q = jax.random.normal(k_q, (B, L, d_model), jnp.float32)
    input_K = jax.random.normal(k_k, (B, L, d_model), jnp.float32)
    input_V = jax.random.normal(k_v, (B, L, d_model), jnp.float32)
    # Causal-style mask: 1 (masked) above the diagonal, 0 elsewhere.
    causal = jnp.triu(jnp.ones((L, L), jnp.float32), k=1)
    attn_mask = jnp.broadcast_to(causal, (B, L, L))

    # Random key sample (plays the role of torch.randint in _prob_QK).
    u_k = min(int(c * np.log(L)), L)
    index_sample = jax.random.randint(k_samp, (L, u_k), 0, L, dtype=jnp.int32)

    out = prob_attention(input_Q, input_K, input_V, attn_mask, index_sample,
                         W_Q, W_K, W_V, W_fc, gamma, beta,
                         n_heads=n_heads, d_k=d_k, d_v=d_v, c=c)
    out = jax.block_until_ready(out)

    ref = prob_attention_ref(input_Q, input_K, input_V, attn_mask, index_sample,
                             W_Q, W_K, W_V, W_fc, gamma, beta,
                             n_heads=n_heads, d_k=d_k, d_v=d_v, c=c)
    np.testing.assert_allclose(np.asarray(out), np.asarray(ref),
                               rtol=2e-4, atol=2e-4)
    print("KERNEL_OK")
</pallas_src>

<mosaic_0001>
module attributes {stable_mosaic.version = 11 : i64} {
  func.func @_prob_attention_kernel(%arg0: i32, %arg1: memref<1x8x32xf32, #tpu.memory_space<vmem>>, %arg2: memref<1x8x32xf32, #tpu.memory_space<vmem>>, %arg3: memref<1x8x32xf32, #tpu.memory_space<vmem>>, %arg4: memref<1x8x8xi8, #tpu.memory_space<vmem>>, %arg5: memref<8x8xf32, #tpu.memory_space<vmem>>, %arg6: memref<4x8x32xf32, #tpu.memory_space<vmem>>, %arg7: memref<4x8x32xf32, #tpu.memory_space<vmem>>, %arg8: memref<4x8x32xf32, #tpu.memory_space<vmem>>, %arg9: memref<4x8x32xf32, #tpu.memory_space<vmem>>, %arg10: memref<1x32xf32, #tpu.memory_space<vmem>>, %arg11: memref<1x32xf32, #tpu.memory_space<vmem>>, %arg12: memref<1x8x32xf32, #tpu.memory_space<vmem>>) attributes {dimension_semantics = [#tpu.dimension_semantics<parallel>], iteration_bounds = array<i64: 2>, scalar_prefetch = 0 : i64, scratch_operands = 0 : i64, tpu.core_type = #tpu.core_type<tc>, window_params = [{transform_indices = @transform_0, window_bounds = array<i64: 1, 8, 32>}, {transform_indices = @transform_1, window_bounds = array<i64: 1, 8, 32>}, {transform_indices = @transform_2, window_bounds = array<i64: 1, 8, 32>}, {transform_indices = @transform_3, window_bounds = array<i64: 1, 8, 8>}, {pipeline_mode = #tpu.pipeline_mode<synchronous>, transform_indices = @transform_4, window_bounds = array<i64: 8, 8>}, {pipeline_mode = #tpu.pipeline_mode<synchronous>, transform_indices = @transform_5, window_bounds = array<i64: 4, 8, 32>}, {pipeline_mode = #tpu.pipeline_mode<synchronous>, transform_indices = @transform_6, window_bounds = array<i64: 4, 8, 32>}, {pipeline_mode = #tpu.pipeline_mode<synchronous>, transform_indices = @transform_7, window_bounds = array<i64: 4, 8, 32>}, {pipeline_mode = #tpu.pipeline_mode<synchronous>, transform_indices = @transform_8, window_bounds = array<i64: 4, 8, 32>}, {pipeline_mode = #tpu.pipeline_mode<synchronous>, transform_indices = @transform_9, window_bounds = array<i64: 1, 32>}, {pipeline_mode = #tpu.pipeline_mode<synchronous>, transform_indices = @transform_10, window_bounds = array<i64: 1, 32>}, {transform_indices = @transform_11, window_bounds = array<i64: 1, 8, 32>}]} {
    %c0 = arith.constant 0 : index
    %c0_0 = arith.constant 0 : index
    %c0_1 = arith.constant 0 : index
    %0 = vector.load %arg1[%c0, %c0_0, %c0_1] : memref<1x8x32xf32, #tpu.memory_space<vmem>>, vector<1x8x32xf32>
    %1 = vector.shape_cast %0 : vector<1x8x32xf32> to vector<8x32xf32>
    %c0_2 = arith.constant 0 : index
    %c0_3 = arith.constant 0 : index
    %c0_4 = arith.constant 0 : index
    %2 = vector.load %arg2[%c0_2, %c0_3, %c0_4] : memref<1x8x32xf32, #tpu.memory_space<vmem>>, vector<1x8x32xf32>
    %3 = vector.shape_cast %2 : vector<1x8x32xf32> to vector<8x32xf32>
    %c0_5 = arith.constant 0 : index
    %c0_6 = arith.constant 0 : index
    %c0_7 = arith.constant 0 : index
    %4 = vector.load %arg3[%c0_5, %c0_6, %c0_7] : memref<1x8x32xf32, #tpu.memory_space<vmem>>, vector<1x8x32xf32>
    %5 = vector.shape_cast %4 : vector<1x8x32xf32> to vector<8x32xf32>
    %6 = vector.shape_cast %1 : vector<8x32xf32> to vector<1x8x32xf32>
    %7 = vector.broadcast %6 : vector<1x8x32xf32> to vector<4x8x32xf32>
    %8 = vector.shape_cast %3 : vector<8x32xf32> to vector<1x8x32xf32>
    %9 = vector.broadcast %8 : vector<1x8x32xf32> to vector<4x8x32xf32>
    %10 = vector.shape_cast %5 : vector<8x32xf32> to vector<1x8x32xf32>
    %11 = vector.broadcast %10 : vector<1x8x32xf32> to vector<4x8x32xf32>
    %c0_8 = arith.constant 0 : index
    %c0_9 = arith.constant 0 : index
    %c0_10 = arith.constant 0 : index
    %12 = vector.load %arg6[%c0_8, %c0_9, %c0_10] : memref<4x8x32xf32, #tpu.memory_space<vmem>>, vector<4x8x32xf32>
    "tpu.trace_start"() <{level = 10 : i32, message = "hqe,hde->hqd"}> : () -> ()
    %cst = arith.constant dense<0.000000e+00> : vector<4x8x8xf32>
    %13 = tpu.matmul %7, %12, %cst {dimension_numbers = #tpu.dot_dimension_numbers<[2], [2], [1], [1], [0, 0, 0, 1, 1, 1], [0], [0]>} : vector<4x8x32xf32>, vector<4x8x32xf32>, vector<4x8x8xf32> -> vector<4x8x8xf32>
    "tpu.trace_stop"() : () -> ()
    %c0_11 = arith.constant 0 : index
    %c0_12 = arith.constant 0 : index
    %c0_13 = arith.constant 0 : index
    %14 = vector.load %arg7[%c0_11, %c0_12, %c0_13] : memref<4x8x32xf32, #tpu.memory_space<vmem>>, vector<4x8x32xf32>
    "tpu.trace_start"() <{level = 10 : i32, message = "hke,hde->hkd"}> : () -> ()
    %cst_14 = arith.constant dense<0.000000e+00> : vector<4x8x8xf32>
    %15 = tpu.matmul %9, %14, %cst_14 {dimension_numbers = #tpu.dot_dimension_numbers<[2], [2], [1], [1], [0, 0, 0, 1, 1, 1], [0], [0]>} : vector<4x8x32xf32>, vector<4x8x32xf32>, vector<4x8x8xf32> -> vector<4x8x8xf32>
    "tpu.trace_stop"() : () -> ()
    %c0_15 = arith.constant 0 : index
    %c0_16 = arith.constant 0 : index
    %c0_17 = arith.constant 0 : index
    %16 = vector.load %arg8[%c0_15, %c0_16, %c0_17] : memref<4x8x32xf32, #tpu.memory_space<vmem>>, vector<4x8x32xf32>
    "tpu.trace_start"() <{level = 10 : i32, message = "hke,hve->hkv"}> : () -> ()
    %cst_18 = arith.constant dense<0.000000e+00> : vector<4x8x8xf32>
    %17 = tpu.matmul %11, %16, %cst_18 {dimension_numbers = #tpu.dot_dimension_numbers<[2], [2], [1], [1], [0, 0, 0, 1, 1, 1], [0], [0]>} : vector<4x8x32xf32>, vector<4x8x32xf32>, vector<4x8x8xf32> -> vector<4x8x8xf32>
    "tpu.trace_stop"() : () -> ()
    "tpu.trace_start"() <{level = 10 : i32, message = "hqd,hkd->hqk"}> : () -> ()
    %cst_19 = arith.constant dense<0.000000e+00> : vector<4x8x8xf32>
    %18 = tpu.matmul %13, %15, %cst_19 {dimension_numbers = #tpu.dot_dimension_numbers<[2], [2], [1], [1], [0, 0, 0, 1, 1, 1], [0], [0]>} : vector<4x8x8xf32>, vector<4x8x8xf32>, vector<4x8x8xf32> -> vector<4x8x8xf32>
    "tpu.trace_stop"() : () -> ()
    %c0_20 = arith.constant 0 : index
    %c0_21 = arith.constant 0 : index
    %19 = vector.load %arg5[%c0_20, %c0_21] : memref<8x8xf32, #tpu.memory_space<vmem>>, vector<8x8xf32>
    %20 = vector.shape_cast %19 : vector<8x8xf32> to vector<1x8x8xf32>
    %21 = vector.broadcast %20 : vector<1x8x8xf32> to vector<4x8x8xf32>
    %22 = arith.mulf %18, %21 : vector<4x8x8xf32>
    %cst_22 = arith.constant dense<0.000000e+00> : vector<4x8xf32>
    %23 = vector.multi_reduction <add>, %22, %cst_22 [2] : vector<4x8x8xf32> to vector<4x8xf32>
    %24 = vector.shape_cast %19 : vector<8x8xf32> to vector<1x8x8xf32>
    %cst_23 = arith.constant 0.000000e+00 : f32
    %25 = vector.broadcast %cst_23 : f32 to vector<1x8x8xf32>
    %26 = arith.cmpf ogt, %24, %25 : vector<1x8x8xf32>
    %cst_24 = arith.constant -1.000000e+30 : f32
    %27 = vector.shape_cast %26 : vector<1x8x8xi1> to vector<1x8x8xi1>
    %28 = vector.broadcast %27 : vector<1x8x8xi1> to vector<4x8x8xi1>
    %29 = vector.broadcast %cst_24 : f32 to vector<4x8x8xf32>
    %30 = arith.select %28, %18, %29 : vector<4x8x8xi1>, vector<4x8x8xf32>
    %cst_25 = arith.constant dense<0xFF800000> : vector<4x8xf32>
    %31 = vector.multi_reduction <maximumf>, %30, %cst_25 [2] : vector<4x8x8xf32> to vector<4x8xf32>
    %cst_26 = arith.constant 2.500000e-01 : f32
    %32 = vector.broadcast %cst_26 : f32 to vector<4x8xf32>
    %33 = arith.mulf %23, %32 : vector<4x8xf32>
    %34 = arith.subf %31, %33 : vector<4x8xf32>
    %35 = tpu.iota {dimensions = array<i32: 0>} : vector<8x8xi32>
    %36 = vector.shape_cast %35 : vector<8x8xi32> to vector<1x8x8xi32>
    %37 = tpu.iota {dimensions = array<i32: 1>} : vector<8x8xi32>
    %38 = vector.shape_cast %37 : vector<8x8xi32> to vector<1x8x8xi32>
    %39 = vector.shape_cast %34 : vector<4x8xf32> to vector<4x8x1xf32>
    %40 = vector.shape_cast %34 : vector<4x8xf32> to vector<4x1x8xf32>
    %41 = vector.broadcast %40 : vector<4x1x8xf32> to vector<4x8x8xf32>
    %42 = vector.broadcast %39 : vector<4x8x1xf32> to vector<4x8x8xf32>
    %43 = arith.cmpf ogt, %41, %42 : vector<4x8x8xf32>
    %44 = vector.broadcast %40 : vector<4x1x8xf32> to vector<4x8x8xf32>
    %45 = vector.broadcast %39 : vector<4x8x1xf32> to vector<4x8x8xf32>
    %46 = arith.cmpf oeq, %44, %45 : vector<4x8x8xf32>
    %47 = arith.cmpi slt, %38, %36 : vector<1x8x8xi32>
    %48 = vector.broadcast %47 : vector<1x8x8xi1> to vector<4x8x8xi1>
    %49 = arith.andi %46, %48 : vector<4x8x8xi1>
    %50 = arith.ori %43, %49 : vector<4x8x8xi1>
    %51 = arith.extui %50 : vector<4x8x8xi1> to vector<4x8x8xi32>
    %52 = arith.sitofp %51 : vector<4x8x8xi32> to vector<4x8x8xf32>
    %cst_27 = arith.constant dense<0.000000e+00> : vector<4x8xf32>
    %53 = vector.multi_reduction <add>, %52, %cst_27 [2] : vector<4x8x8xf32> to vector<4x8xf32>
    %cst_28 = arith.constant 4.000000e+00 : f32
    %54 = vector.broadcast %cst_28 : f32 to vector<4x8xf32>
    %55 = arith.cmpf olt, %53, %54 : vector<4x8xf32>
    %c0_29 = arith.constant 0 : index
    %c0_30 = arith.constant 0 : index
    %c0_31 = arith.constant 0 : index
    %56 = vector.load %arg4[%c0_29, %c0_30, %c0_31] : memref<1x8x8xi8, #tpu.memory_space<vmem>>, vector<1x8x8xi8>
    %57 = vector.shape_cast %56 : vector<1x8x8xi8> to vector<8x8xi8>
    %c0_i8 = arith.constant 0 : i8
    %58 = vector.broadcast %c0_i8 : i8 to vector<8x8xi8>
    %59 = arith.cmpi ne, %57, %58 : vector<8x8xi8>
    %60 = vector.shape_cast %59 : vector<8x8xi1> to vector<1x8x8xi1>
    %cst_32 = arith.constant -1.000000e+30 : f32
    %61 = vector.shape_cast %60 : vector<1x8x8xi1> to vector<1x8x8xi1>
    %62 = vector.broadcast %61 : vector<1x8x8xi1> to vector<4x8x8xi1>
    %63 = vector.broadcast %cst_32 : f32 to vector<4x8x8xf32>
    %64 = arith.select %62, %63, %18 : vector<4x8x8xi1>, vector<4x8x8xf32>
    %cst_33 = arith.constant dense<0xFF800000> : vector<4x8xf32>
    %65 = vector.multi_reduction <maximumf>, %64, %cst_33 [2] : vector<4x8x8xf32> to vector<4x8xf32>
    %66 = vector.shape_cast %65 : vector<4x8xf32> to vector<4x8x1xf32>
    %67 = vector.broadcast %66 : vector<4x8x1xf32> to vector<4x8x8xf32>
    %68 = arith.subf %64, %67 : vector<4x8x8xf32>
    %69 = math.exp %68 : vector<4x8x8xf32>
    %cst_34 = arith.constant dense<0.000000e+00> : vector<4x8xf32>
    %70 = vector.multi_reduction <add>, %69, %cst_34 [2] : vector<4x8x8xf32> to vector<4x8xf32>
    %71 = tpu.iota {dimensions = array<i32: 0>} : vector<8x8xi32>
    %72 = tpu.iota {dimensions = array<i32: 1>} : vector<8x8xi32>
    %73 = arith.cmpi sge, %71, %72 : vector<8x8xi32>
    %74 = arith.extui %73 : vector<8x8xi1> to vector<8x8xi32>
    %75 = arith.sitofp %74 : vector<8x8xi32> to vector<8x8xf32>
    %76 = vector.shape_cast %55 : vector<4x8xi1> to vector<4x8x1xi1>
    %77 = vector.shape_cast %75 : vector<8x8xf32> to vector<1x8x8xf32>
    %78 = vector.shape_cast %76 : vector<4x8x1xi1> to vector<4x8x1xi1>
    %79 = vector.broadcast %78 : vector<4x8x1xi1> to vector<4x8x8xi1>
    %80 = vector.shape_cast %77 : vector<1x8x8xf32> to vector<1x8x8xf32>
    %81 = vector.broadcast %80 : vector<1x8x8xf32> to vector<4x8x8xf32>
    %82 = arith.select %79, %69, %81 : vector<4x8x8xi1>, vector<4x8x8xf32>
    "tpu.trace_start"() <{level = 10 : i32, message = "hqk,hkv->hqv"}> : () -> ()
    %cst_35 = arith.constant dense<0.000000e+00> : vector<4x8x8xf32>
    %83 = tpu.matmul %82, %17, %cst_35 {dimension_numbers = #tpu.dot_dimension_numbers<[2], [1], [1], [2], [0, 0, 0, 1, 1, 2], [0], [0]>} : vector<4x8x8xf32>, vector<4x8x8xf32>, vector<4x8x8xf32> -> vector<4x8x8xf32>
    "tpu.trace_stop"() : () -> ()
    %cst_36 = arith.constant 1.000000e+00 : f32
    %84 = vector.broadcast %cst_36 : f32 to vector<4x8xf32>
    %85 = arith.divf %84, %70 : vector<4x8xf32>
    %cst_37 = arith.constant 1.000000e+00 : f32
    %86 = vector.broadcast %cst_37 : f32 to vector<4x8xf32>
    %87 = arith.select %55, %85, %86 : vector<4x8xi1>, vector<4x8xf32>
    %88 = vector.shape_cast %87 : vector<4x8xf32> to vector<4x8x1xf32>
    %89 = vector.broadcast %88 : vector<4x8x1xf32> to vector<4x8x8xf32>
    %90 = arith.mulf %83, %89 : vector<4x8x8xf32>
    %c0_38 = arith.constant 0 : index
    %c0_39 = arith.constant 0 : index
    %c0_40 = arith.constant 0 : index
    %91 = vector.load %arg9[%c0_38, %c0_39, %c0_40] : memref<4x8x32xf32, #tpu.memory_space<vmem>>, vector<4x8x32xf32>
    "tpu.trace_start"() <{level = 10 : i32, message = "hqv,hve->hqe"}> : () -> ()
    %cst_41 = arith.constant dense<0.000000e+00> : vector<4x8x32xf32>
    %92 = tpu.matmul %90, %91, %cst_41 {dimension_numbers = #tpu.dot_dimension_numbers<[2], [1], [1], [2], [0, 0, 0, 1, 1, 2], [0], [0]>} : vector<4x8x8xf32>, vector<4x8x32xf32>, vector<4x8x32xf32> -> vector<4x8x32xf32>
    "tpu.trace_stop"() : () -> ()
    %cst_42 = arith.constant dense<0.000000e+00> : vector<8x32xf32>
    %93 = vector.multi_reduction <add>, %92, %cst_42 [0] : vector<4x8x32xf32> to vector<8x32xf32>
    %94 = arith.addf %93, %1 : vector<8x32xf32>
    %cst_43 = arith.constant dense<0.000000e+00> : vector<8xf32>
    %95 = vector.multi_reduction <add>, %94, %cst_43 [1] : vector<8x32xf32> to vector<8xf32>
    %96 = vector.shape_cast %95 : vector<8xf32> to vector<8x1xf32>
    %cst_44 = arith.constant 3.200000e+01 : f32
    %97 = vector.broadcast %cst_44 : f32 to vector<8x1xf32>
    %98 = arith.divf %96, %97 : vector<8x1xf32>
    %99 = vector.broadcast %98 : vector<8x1xf32> to vector<8x32xf32>
    %100 = arith.subf %94, %99 : vector<8x32xf32>
    %101 = vector.broadcast %98 : vector<8x1xf32> to vector<8x32xf32>
    %102 = arith.subf %94, %101 : vector<8x32xf32>
    %103 = arith.mulf %100, %102 : vector<8x32xf32>
    %cst_45 = arith.constant dense<0.000000e+00> : vector<8xf32>
    %104 = vector.multi_reduction <add>, %103, %cst_45 [1] : vector<8x32xf32> to vector<8xf32>
    %105 = vector.shape_cast %104 : vector<8xf32> to vector<8x1xf32>
    %cst_46 = arith.constant 3.200000e+01 : f32
    %106 = vector.broadcast %cst_46 : f32 to vector<8x1xf32>
    %107 = arith.divf %105, %106 : vector<8x1xf32>
    %108 = vector.broadcast %98 : vector<8x1xf32> to vector<8x32xf32>
    %109 = arith.subf %94, %108 : vector<8x32xf32>
    %cst_47 = arith.constant 9.99999974E-6 : f32
    %110 = vector.broadcast %cst_47 : f32 to vector<8x1xf32>
    %111 = arith.addf %107, %110 : vector<8x1xf32>
    %112 = math.rsqrt %111 : vector<8x1xf32>
    %113 = vector.broadcast %112 : vector<8x1xf32> to vector<8x32xf32>
    %114 = arith.mulf %109, %113 : vector<8x32xf32>
    %c0_48 = arith.constant 0 : index
    %c0_49 = arith.constant 0 : index
    %115 = vector.load %arg10[%c0_48, %c0_49] : memref<1x32xf32, #tpu.memory_space<vmem>>, vector<1x32xf32>
    %116 = vector.broadcast %115 : vector<1x32xf32> to vector<8x32xf32>
    %117 = arith.mulf %114, %116 : vector<8x32xf32>
    %c0_50 = arith.constant 0 : index
    %c0_51 = arith.constant 0 : index
    %118 = vector.load %arg11[%c0_50, %c0_51] : memref<1x32xf32, #tpu.memory_space<vmem>>, vector<1x32xf32>
    %119 = vector.broadcast %118 : vector<1x32xf32> to vector<8x32xf32>
    %120 = arith.addf %117, %119 : vector<8x32xf32>
    %c0_52 = arith.constant 0 : index
    %c0_53 = arith.constant 0 : index
    %c0_54 = arith.constant 0 : index
    %121 = vector.load %arg12[%c0_52, %c0_53, %c0_54] : memref<1x8x32xf32, #tpu.memory_space<vmem>>, vector<1x8x32xf32>
    %122 = vector.shape_cast %121 : vector<1x8x32xf32> to vector<8x32xf32>
    %123 = vector.shape_cast %120 : vector<8x32xf32> to vector<1x8x32xf32>
    tpu.vector_store %arg12[%c0_52, %c0_53, %c0_54], %123 {strides = array<i32>} : memref<1x8x32xf32, #tpu.memory_space<vmem>>, vector<1x8x32xf32>,
    return
  }
  func.func @transform_0(%arg0: i32) -> (i32, i32, i32) {
    %c0_i32 = arith.constant 0 : i32
    %c0_i32_0 = arith.constant 0 : i32
    %c0_i32_1 = arith.constant 0 : i32
    return %arg0, %c0_i32, %c0_i32_0 : i32, i32, i32
  }
  func.func @transform_1(%arg0: i32) -> (i32, i32, i32) {
    %c0_i32 = arith.constant 0 : i32
    %c0_i32_0 = arith.constant 0 : i32
    %c0_i32_1 = arith.constant 0 : i32
    return %arg0, %c0_i32, %c0_i32_0 : i32, i32, i32
  }
  func.func @transform_2(%arg0: i32) -> (i32, i32, i32) {
    %c0_i32 = arith.constant 0 : i32
    %c0_i32_0 = arith.constant 0 : i32
    %c0_i32_1 = arith.constant 0 : i32
    return %arg0, %c0_i32, %c0_i32_0 : i32, i32, i32
  }
  func.func @transform_3(%arg0: i32) -> (i32, i32, i32) {
    %c0_i32 = arith.constant 0 : i32
    %c0_i32_0 = arith.constant 0 : i32
    %c0_i32_1 = arith.constant 0 : i32
    return %arg0, %c0_i32, %c0_i32_0 : i32, i32, i32
  }
  func.func @transform_4(%arg0: i32) -> (i32, i32) {
    %c0_i32 = arith.constant 0 : i32
    %c0_i32_0 = arith.constant 0 : i32
    %c0_i32_1 = arith.constant 0 : i32
    return %c0_i32, %c0_i32_0 : i32, i32
  }
  func.func @transform_5(%arg0: i32) -> (i32, i32, i32) {
    %c0_i32 = arith.constant 0 : i32
    %c0_i32_0 = arith.constant 0 : i32
    %c0_i32_1 = arith.constant 0 : i32
    %c0_i32_2 = arith.constant 0 : i32
    return %c0_i32, %c0_i32_0, %c0_i32_1 : i32, i32, i32
  }
  func.func @transform_6(%arg0: i32) -> (i32, i32, i32) {
    %c0_i32 = arith.constant 0 : i32
    %c0_i32_0 = arith.constant 0 : i32
    %c0_i32_1 = arith.constant 0 : i32
    %c0_i32_2 = arith.constant 0 : i32
    return %c0_i32, %c0_i32_0, %c0_i32_1 : i32, i32, i32
  }
  func.func @transform_7(%arg0: i32) -> (i32, i32, i32) {
    %c0_i32 = arith.constant 0 : i32
    %c0_i32_0 = arith.constant 0 : i32
    %c0_i32_1 = arith.constant 0 : i32
    %c0_i32_2 = arith.constant 0 : i32
    return %c0_i32, %c0_i32_0, %c0_i32_1 : i32, i32, i32
  }
  func.func @transform_8(%arg0: i32) -> (i32, i32, i32) {
    %c0_i32 = arith.constant 0 : i32
    %c0_i32_0 = arith.constant 0 : i32
    %c0_i32_1 = arith.constant 0 : i32
    %c0_i32_2 = arith.constant 0 : i32
    return %c0_i32, %c0_i32_0, %c0_i32_1 : i32, i32, i32
  }
  func.func @transform_9(%arg0: i32) -> (i32, i32) {
    %c0_i32 = arith.constant 0 : i32
    %c0_i32_0 = arith.constant 0 : i32
    %c0_i32_1 = arith.constant 0 : i32
    return %c0_i32, %c0_i32_0 : i32, i32
  }
  func.func @transform_10(%arg0: i32) -> (i32, i32) {
    %c0_i32 = arith.constant 0 : i32
    %c0_i32_0 = arith.constant 0 : i32
    %c0_i32_1 = arith.constant 0 : i32
    return %c0_i32, %c0_i32_0 : i32, i32
  }
  func.func @transform_11(%arg0: i32) -> (i32, i32, i32) {
    %c0_i32 = arith.constant 0 : i32
    %c0_i32_0 = arith.constant 0 : i32
    %c0_i32_1 = arith.constant 0 : i32
    return %arg0, %c0_i32, %c0_i32_0 : i32, i32, i32
  }
}

</mosaic_0001>

<llo_original>
// kernel: tpu_custom_call.1
$region0: #{tpu_custom_call.1}
  #allocation0 [shape = 'u32[]', space=smem, size = 0x4, offset = 0x4, fixed_abs, tag = 'smem constant byte address 0x4 - core index']
  #allocation1 [shape = 'u32[144,128]{1,0:T(1,128)}', space=vmem, size = 0x12000, scoped, tag = 'internal scratch']
  %s0 = inlined_call_operand.hbm [shape: f32[2,8,32], index: 0, kind: input, shape index: {}]
  %s1 = inlined_call_operand.hbm [shape: f32[2,8,32], index: 1, kind: input, shape index: {}]
  %s2 = inlined_call_operand.hbm [shape: f32[2,8,32], index: 2, kind: input, shape index: {}]
  %s3 = inlined_call_operand.vmem [shape: s8[2,8,8], index: 3, kind: input, shape index: {}]
  %s4 = inlined_call_operand.vmem [shape: f32[8,8], index: 4, kind: input, shape index: {}]
  %s5 = inlined_call_operand.hbm [shape: f32[4,8,32], index: 5, kind: input, shape index: {}]
  %s6 = inlined_call_operand.hbm [shape: f32[4,8,32], index: 6, kind: input, shape index: {}]
  %s7 = inlined_call_operand.hbm [shape: f32[4,8,32], index: 7, kind: input, shape index: {}]
  %s8 = inlined_call_operand.hbm [shape: f32[4,8,32], index: 8, kind: input, shape index: {}]
  %s9 = inlined_call_operand.vmem [shape: f32[1,32], index: 9, kind: input, shape index: {}]
  %s10 = inlined_call_operand.vmem [shape: f32[1,32], index: 10, kind: input, shape index: {}]
  %s11 = inlined_call_operand.hbm [shape: f32[2,8,32], index: 11, kind: output, shape index: {}]
  %s12 = sld [smem:[#allocation0]]
  $region105: #{tpu_custom_call.1} parent=0
    _
  %s14 = ssub.s32 1, %s12
  %s15 = scalar_select 0, %s14, %s12
  $region1: #{tpu_custom_call.1} parent=0
    #allocation2 [shape = 'u8[8192]{0}', space=vmem, size = 0x2000, scoped, tag = 'input window, operand 0']
    #allocation3 [shape = 's32[2]{0}', space=sflag, size = 0x8, scoped, tag = 'scoped memory for tpu_custom_call.1']
    #allocation4 [shape = 's32[2]{0}', space=sflag, size = 0x8, scoped, tag = 'scoped memory for tpu_custom_call.1']
    #allocation5 [shape = 'u8[8192]{0}', space=vmem, size = 0x2000, scoped, tag = 'input window, operand 1']
    #allocation6 [shape = 's32[2]{0}', space=sflag, size = 0x8, scoped, tag = 'scoped memory for tpu_custom_call.1']
    #allocation7 [shape = 'u8[8192]{0}', space=vmem, size = 0x2000, scoped, tag = 'input window, operand 2']
    #allocation8 [shape = 'u8[16384]{0}', space=vmem, size = 0x4000, scoped, tag = 'input window, operand 5, single buffered']
    #allocation9 [shape = 's32[1]{0}', space=sflag, size = 0x4, scoped, tag = 'scoped memory for tpu_custom_call.1']
    #allocation10 [shape = 'u8[16384]{0}', space=vmem, size = 0x4000, scoped, tag = 'input window, operand 6, single buffered']
    #allocation11 [shape = 'u8[16384]{0}', space=vmem, size = 0x4000, scoped, tag = 'input window, operand 7, single buffered']
    #allocation12 [shape = 's32[1]{0}', space=sflag, size = 0x4, scoped, tag = 'scoped memory for tpu_custom_call.1']
    #allocation13 [shape = 'u8[16384]{0}', space=vmem, size = 0x4000, scoped, tag = 'input window, operand 8, single buffered']
    #allocation14 [shape = 'u8[8192]{0}', space=vmem, size = 0x2000, scoped, tag = 'output window, operand 0']
    %16 = vsyncpa [#allocation3], 0
    %s17 = scalar_lea.sflag [#allocation3], 1
    %18 = vsyncpa %s17, 0
    %19 = vsyncpa [#allocation6], 0
    %s20 = scalar_lea.sflag [#allocation6], 1
    %21 = vsyncpa %s20, 0
    %22 = vsyncpa [#allocation9], 0
    %23 = vsyncpa [#allocation12], 0
    %24 = vsyncpa [#allocation4], 0
    %s25 = scalar_lea.sflag [#allocation4], 1
    %26 = vsyncpa %s25, 0
    loop: start=0, step=1, limit=4
    $region2: #{tpu_custom_call.1} parent=1 // loop_pre_header
      _
    $region3: #{tpu_custom_call.1} parent=1 // loop_header
      %s28 = sphi 0, %s32
      %p29 = scmp.ge.s32.totalorder %s28, 4
      %s38 = sphi 0, %s40
      %s41 = sphi 0, %s38
      %s42 = sphi 0, %s41
      %s58 = sphi 0, %s42
      %s64 = sphi 0, %s66
      %s67 = sphi 0, %s64
      %s68 = sphi 0, %s67
      %s84 = sphi 0, %s68
      %s90 = sphi 0, %s92
      %s93 = sphi 0, %s90
      %s94 = sphi 0, %s93
      %s110 = sphi 0, %s94
      %s116 = sphi 0, %s118
      %s119 = sphi 0, %s116
      %s120 = sphi 0, %s119
      %s136 = sphi 0, %s120
      %s140 = sphi 0, %s140
      %s142 = sphi 0, %s140
      %s143 = sphi 0, %s142
      %s157 = sphi 0, %s143
      %s161 = sphi 0, %s161
      %s163 = sphi 0, %s161
      %s164 = sphi 0, %s163
      %s178 = sphi 0, %s164
      %s182 = sphi 0, %s182
      %s184 = sphi 0, %s182
      %s185 = sphi 0, %s184
      %s199 = sphi 0, %s185
      %s203 = sphi 0, %s203
      %s205 = sphi 0, %s203
      %s206 = sphi 0, %s205
      %s220 = sphi 0, %s206
      %s224 = sphi 0, %s224
      %s226 = sphi 0, %s224
      %s227 = sphi 0, %s226
      %s241 = sphi 0, %s227
      %s245 = sphi 0, %s245
      %s247 = sphi 0, %s245
      %s248 = sphi 0, %s247
      %s262 = sphi 0, %s248
      %s266 = sphi 0, %s266
      %s268 = sphi 0, %s266
      %s269 = sphi 0, %s268
      %s283 = sphi 0, %s269
      %s289 = sphi 0, %s291
      %s292 = sphi 0, %s289
      %s293 = sphi 0, %s292
      %s309 = sphi 0, %s293
    $region4: #{tpu_custom_call.1} parent=1 // loop_header_branch
      %31 = sbr.rel (%p29) target = $region8
    $region5: #{tpu_custom_call.1} parent=1 // loop_body
      %s33 = ssub.s32 %s28, 1
      %s34 = ssub.s32 %s28, 2
      %s35 = sadd.s32 %s28, 1
      %s36 = ssub.s32 %s28, %s35
      %p37 = scmp.eq.s32.totalorder %s36, 0
      %s39 = sadd.s32 %s38, 1
      %s40 = scalar_select %p37, %s38, %s39
      %p43 = pneg %p37
      %p44 = scmp.eq.s32.totalorder %s28, 1
      %p45 = por %p43, %p44
      %p46 = scmp.ne.s32.totalorder %s38, %s41
      %p47 = scmp.eq.s32.totalorder %s28, 0
      %p48 = por %p46, %p47
      %p49 = scmp.ne.s32.totalorder %s38, %s41
      %p50 = scmp.eq.s32.totalorder %s33, 1
      %p51 = por %p49, %p50
      %p52 = scmp.ne.s32.totalorder %s41, %s42
      %p53 = scmp.eq.s32.totalorder %s33, 0
      %p54 = por %p52, %p53
      %p55 = scmp.ne.s32.totalorder %s41, %s42
      %p56 = scmp.eq.s32.totalorder %s34, 1
      %p57 = por %p55, %p56
      %p59 = scmp.ne.s32.totalorder %s42, %s58
      %p60 = scmp.eq.s32.totalorder %s34, 0
      %p61 = por %p59, %p60
      %s62 = ssub.s32 %s28, %s35
      %p63 = scmp.eq.s32.totalorder %s62, 0
      %s65 = sadd.s32 %s64, 1
      %s66 = scalar_select %p63, %s64, %s65
      %p69 = pneg %p63
      %p70 = scmp.eq.s32.totalorder %s28, 1
      %p71 = por %p69, %p70
      %p72 = scmp.ne.s32.totalorder %s64, %s67
      %p73 = scmp.eq.s32.totalorder %s28, 0
      %p74 = por %p72, %p73
      %p75 = scmp.ne.s32.totalorder %s64, %s67
      %p76 = scmp.eq.s32.totalorder %s33, 1
      %p77 = por %p75, %p76
      %p78 = scmp.ne.s32.totalorder %s67, %s68
      %p79 = scmp.eq.s32.totalorder %s33, 0
      %p80 = por %p78, %p79
      %p81 = scmp.ne.s32.totalorder %s67, %s68
      %p82 = scmp.eq.s32.totalorder %s34, 1
      %p83 = por %p81, %p82
      %p85 = scmp.ne.s32.totalorder %s68, %s84
      %p86 = scmp.eq.s32.totalorder %s34, 0
      %p87 = por %p85, %p86
      %s88 = ssub.s32 %s28, %s35
      %p89 = scmp.eq.s32.totalorder %s88, 0
      %s91 = sadd.s32 %s90, 1
      %s92 = scalar_select %p89, %s90, %s91
      %p95 = pneg %p89
      %p96 = scmp.eq.s32.totalorder %s28, 1
      %p97 = por %p95, %p96
      %p98 = scmp.ne.s32.totalorder %s90, %s93
      %p99 = scmp.eq.s32.totalorder %s28, 0
      %p100 = por %p98, %p99
      %p101 = scmp.ne.s32.totalorder %s90, %s93
      %p102 = scmp.eq.s32.totalorder %s33, 1
      %p103 = por %p101, %p102
      %p104 = scmp.ne.s32.totalorder %s93, %s94
      %p105 = scmp.eq.s32.totalorder %s33, 0
      %p106 = por %p104, %p105
      %p107 = scmp.ne.s32.totalorder %s93, %s94
      %p108 = scmp.eq.s32.totalorder %s34, 1
      %p109 = por %p107, %p108
      %p111 = scmp.ne.s32.totalorder %s94, %s110
      %p112 = scmp.eq.s32.totalorder %s34, 0
      %p113 = por %p111, %p112
      %s114 = ssub.s32 %s28, %s35
      %p115 = scmp.eq.s32.totalorder %s114, 0
      %s117 = sadd.s32 %s116, 1
      %s118 = scalar_select %p115, %s116, %s117
      %p121 = pneg %p115
      %p122 = scmp.eq.s32.totalorder %s28, 1
      %p123 = por %p121, %p122
      %p124 = scmp.ne.s32.totalorder %s116, %s119
      %p125 = scmp.eq.s32.totalorder %s28, 0
      %p126 = por %p124, %p125
      %p127 = scmp.ne.s32.totalorder %s116, %s119
      %p128 = scmp.eq.s32.totalorder %s33, 1
      %p129 = por %p127, %p128
      %p130 = scmp.ne.s32.totalorder %s119, %s120
      %p131 = scmp.eq.s32.totalorder %s33, 0
      %p132 = por %p130, %p131
      %p133 = scmp.ne.s32.totalorder %s119, %s120
      %p134 = scmp.eq.s32.totalorder %s34, 1
      %p135 = por %p133, %p134
      %p137 = scmp.ne.s32.totalorder %s120, %s136
      %p138 = scmp.eq.s32.totalorder %s34, 0
      %p139 = por %p137, %p138
      %s141 = sadd.s32 %s140, 1
      %p144 = scmp.eq.s32.totalorder %s28, 1
      %p145 = scmp.ne.s32.totalorder %s140, %s142
      %p146 = scmp.eq.s32.totalorder %s28, 0
      %p147 = por %p145, %p146
      %p148 = scmp.ne.s32.totalorder %s140, %s142
      %p149 = scmp.eq.s32.totalorder %s33, 1
      %p150 = por %p148, %p149
      %p151 = scmp.ne.s32.totalorder %s142, %s143
      %p152 = scmp.eq.s32.totalorder %s33, 0
      %p153 = por %p151, %p152
      %p154 = scmp.ne.s32.totalorder %s142, %s143
      %p155 = scmp.eq.s32.totalorder %s34, 1
      %p156 = por %p154, %p155
      %p158 = scmp.ne.s32.totalorder %s143, %s157
      %p159 = scmp.eq.s32.totalorder %s34, 0
      %p160 = por %p158, %p159
      %s162 = sadd.s32 %s161, 1
      %p165 = scmp.eq.s32.totalorder %s28, 1
      %p166 = scmp.ne.s32.totalorder %s161, %s163
      %p167 = scmp.eq.s32.totalorder %s28, 0
      %p168 = por %p166, %p167
      %p169 = scmp.ne.s32.totalorder %s161, %s163
      %p170 = scmp.eq.s32.totalorder %s33, 1
      %p171 = por %p169, %p170
      %p172 = scmp.ne.s32.totalorder %s163, %s164
      %p173 = scmp.eq.s32.totalorder %s33, 0
      %p174 = por %p172, %p173
      %p175 = scmp.ne.s32.totalorder %s163, %s164
      %p176 = scmp.eq.s32.totalorder %s34, 1
      %p177 = por %p175, %p176
      %p179 = scmp.ne.s32.totalorder %s164, %s178
      %p180 = scmp.eq.s32.totalorder %s34, 0
      %p181 = por %p179, %p180
      %s183 = sadd.s32 %s182, 1
      %p186 = scmp.eq.s32.totalorder %s28, 1
      %p187 = scmp.ne.s32.totalorder %s182, %s184
      %p188 = scmp.eq.s32.totalorder %s28, 0
      %p189 = por %p187, %p188
      %p190 = scmp.ne.s32.totalorder %s182, %s184
      %p191 = scmp.eq.s32.totalorder %s33, 1
      %p192 = por %p190, %p191
      %p193 = scmp.ne.s32.totalorder %s184, %s185
      %p194 = scmp.eq.s32.totalorder %s33, 0
      %p195 = por %p193, %p194
      %p196 = scmp.ne.s32.totalorder %s184, %s185
      %p197 = scmp.eq.s32.totalorder %s34, 1
      %p198 = por %p196, %p197
      %p200 = scmp.ne.s32.totalorder %s185, %s199
      %p201 = scmp.eq.s32.totalorder %s34, 0
      %p202 = por %p200, %p201
      %s204 = sadd.s32 %s203, 1
      %p207 = scmp.eq.s32.totalorder %s28, 1
      %p208 = scmp.ne.s32.totalorder %s203, %s205
      %p209 = scmp.eq.s32.totalorder %s28, 0
      %p210 = por %p208, %p209
      %p211 = scmp.ne.s32.totalorder %s203, %s205
      %p212 = scmp.eq.s32.totalorder %s33, 1
      %p213 = por %p211, %p212
      %p214 = scmp.ne.s32.totalorder %s205, %s206
      %p215 = scmp.eq.s32.totalorder %s33, 0
      %p216 = por %p214, %p215
      %p217 = scmp.ne.s32.totalorder %s205, %s206
      %p218 = scmp.eq.s32.totalorder %s34, 1
      %p219 = por %p217, %p218
      %p221 = scmp.ne.s32.totalorder %s206, %s220
      %p222 = scmp.eq.s32.totalorder %s34, 0
      %p223 = por %p221, %p222
      %s225 = sadd.s32 %s224, 1
      %p228 = scmp.eq.s32.totalorder %s28, 1
      %p229 = scmp.ne.s32.totalorder %s224, %s226
      %p230 = scmp.eq.s32.totalorder %s28, 0
      %p231 = por %p229, %p230
      %p232 = scmp.ne.s32.totalorder %s224, %s226
      %p233 = scmp.eq.s32.totalorder %s33, 1
      %p234 = por %p232, %p233
      %p235 = scmp.ne.s32.totalorder %s226, %s227
      %p236 = scmp.eq.s32.totalorder %s33, 0
      %p237 = por %p235, %p236
      %p238 = scmp.ne.s32.totalorder %s226, %s227
      %p239 = scmp.eq.s32.totalorder %s34, 1
      %p240 = por %p238, %p239
      %p242 = scmp.ne.s32.totalorder %s227, %s241
      %p243 = scmp.eq.s32.totalorder %s34, 0
      %p244 = por %p242, %p243
      %s246 = sadd.s32 %s245, 1
      %p249 = scmp.eq.s32.totalorder %s28, 1
      %p250 = scmp.ne.s32.totalorder %s245, %s247
      %p251 = scmp.eq.s32.totalorder %s28, 0
      %p252 = por %p250, %p251
      %p253 = scmp.ne.s32.totalorder %s245, %s247
      %p254 = scmp.eq.s32.totalorder %s33, 1
      %p255 = por %p253, %p254
      %p256 = scmp.ne.s32.totalorder %s247, %s248
      %p257 = scmp.eq.s32.totalorder %s33, 0
      %p258 = por %p256, %p257
      %p259 = scmp.ne.s32.totalorder %s247, %s248
      %p260 = scmp.eq.s32.totalorder %s34, 1
      %p261 = por %p259, %p260
      %p263 = scmp.ne.s32.totalorder %s248, %s262
      %p264 = scmp.eq.s32.totalorder %s34, 0
      %p265 = por %p263, %p264
      %s267 = sadd.s32 %s266, 1
      %p270 = scmp.eq.s32.totalorder %s28, 1
      %p271 = scmp.ne.s32.totalorder %s266, %s268
      %p272 = scmp.eq.s32.totalorder %s28, 0
      %p273 = por %p271, %p272
      %p274 = scmp.ne.s32.totalorder %s266, %s268
      %p275 = scmp.eq.s32.totalorder %s33, 1
      %p276 = por %p274, %p275
      %p277 = scmp.ne.s32.totalorder %s268, %s269
      %p278 = scmp.eq.s32.totalorder %s33, 0
      %p279 = por %p277, %p278
      %p280 = scmp.ne.s32.totalorder %s268, %s269
      %p281 = scmp.eq.s32.totalorder %s34, 1
      %p282 = por %p280, %p281
      %p284 = scmp.ne.s32.totalorder %s269, %s283
      %p285 = scmp.eq.s32.totalorder %s34, 0
      %p286 = por %p284, %p285
      %s287 = ssub.s32 %s28, %s35
      %p288 = scmp.eq.s32.totalorder %s287, 0
      %s290 = sadd.s32 %s289, 1
      %s291 = scalar_select %p288, %s289, %s290
      %p294 = pneg %p288
      %p295 = scmp.eq.s32.totalorder %s28, 1
      %p296 = por %p294, %p295
      %p297 = scmp.ne.s32.totalorder %s289, %s292
      %p298 = scmp.eq.s32.totalorder %s28, 0
      %p299 = por %p297, %p298
      %p300 = scmp.ne.s32.totalorder %s289, %s292
      %p301 = scmp.eq.s32.totalorder %s33, 1
      %p302 = por %p300, %p301
      %p303 = scmp.ne.s32.totalorder %s292, %s293
      %p304 = scmp.eq.s32.totalorder %s33, 0
      %p305 = por %p303, %p304
      %p306 = scmp.ne.s32.totalorder %s292, %s293
      %p307 = scmp.eq.s32.totalorder %s34, 1
      %p308 = por %p306, %p307
      %p310 = scmp.ne.s32.totalorder %s293, %s309
      %p311 = scmp.eq.s32.totalorder %s34, 0
      %p312 = por %p310, %p311
      %p313 = scmp.le.s32.totalorder 1, %s28
      %p314 = scmp.lt.s32.totalorder %s28, 3
      %p315 = pnand %p313, %p314
      %p316 = pneg %p315
      // Predicated region
      $region9: #{tpu_custom_call.1} parent=5 // pred_check
        _
      $region10: #{tpu_custom_call.1} parent=5 // pred_check_branch
        %318 = sbr.rel (%p315) target = $region12
      $region11: #{tpu_custom_call.1} parent=5 // pred_region
        %s319 = ssub.s32 %s28, 1
        // Predicated region
        $region13: #{tpu_custom_call.1} parent=11 // pred_check
          %p320 = pneg %p153
        $region14: #{tpu_custom_call.1} parent=11 // pred_check_branch
          %322 = sbr.rel (%p320) target = $region16
        $region15: #{tpu_custom_call.1} parent=11 // pred_region
          _
        $region16: #{tpu_custom_call.1} parent=11 // pred_fallthru
          _
        // Predicated region
        $region17: #{tpu_custom_call.1} parent=11 // pred_check
          %p323 = pneg %p174
        $region18: #{tpu_custom_call.1} parent=11 // pred_check_branch
          %325 = sbr.rel (%p323) target = $region20
        $region19: #{tpu_custom_call.1} parent=11 // pred_region
          %s327 = ssub.s32 512, 512
          %328 = vsyncadd [#allocation9], %s327
          %s329 = sshll.u32 [#allocation8], 4
          %s330 = int_to_ptr.vmem [resolvable:$true] %s329
          %335 = dma.hbm_to_vmem [thread:$0]  %s5, 512, %s330, [#allocation9], 128, 128, 8
        $region20: #{tpu_custom_call.1} parent=11 // pred_fallthru
          _
        // Predicated region
        $region21: #{tpu_custom_call.1} parent=11 // pred_check
          %p336 = pneg %p195
        $region22: #{tpu_custom_call.1} parent=11 // pred_check_branch
          %338 = sbr.rel (%p336) target = $region24
        $region23: #{tpu_custom_call.1} parent=11 // pred_region
          %s340 = ssub.s32 512, 512
          %341 = vsyncadd [#allocation9], %s340
          %s342 = sshll.u32 [#allocation10], 4
          %s343 = int_to_ptr.vmem [resolvable:$true] %s342
          %348 = dma.hbm_to_vmem [thread:$0]  %s6, 512, %s343, [#allocation9], 128, 128, 8
        $region24: #{tpu_custom_call.1} parent=11 // pred_fallthru
          _
        // Predicated region
        $region25: #{tpu_custom_call.1} parent=11 // pred_check
          %p349 = pneg %p216
        $region26: #{tpu_custom_call.1} parent=11 // pred_check_branch
          %351 = sbr.rel (%p349) target = $region28
        $region27: #{tpu_custom_call.1} parent=11 // pred_region
          %s353 = ssub.s32 512, 512
          %354 = vsyncadd [#allocation12], %s353
          %s355 = sshll.u32 [#allocation11], 4
          %s356 = int_to_ptr.vmem [resolvable:$true] %s355
          %361 = dma.hbm_to_vmem [thread:$0]  %s7, 512, %s356, [#allocation12], 128, 128, 8
        $region28: #{tpu_custom_call.1} parent=11 // pred_fallthru
          _
        // Predicated region
        $region29: #{tpu_custom_call.1} parent=11 // pred_check
          %p362 = pneg %p237
        $region30: #{tpu_custom_call.1} parent=11 // pred_check_branch
          %364 = sbr.rel (%p362) target = $region32
        $region31: #{tpu_custom_call.1} parent=11 // pred_region
          %s366 = ssub.s32 512, 512
          %367 = vsyncadd [#allocation12], %s366
          %s368 = sshll.u32 [#allocation13], 4
          %s369 = int_to_ptr.vmem [resolvable:$true] %s368
          %374 = dma.hbm_to_vmem [thread:$0]  %s8, 512, %s369, [#allocation12], 128, 128, 8
        $region32: #{tpu_custom_call.1} parent=11 // pred_fallthru
          _
        // Predicated region
        $region33: #{tpu_custom_call.1} parent=11 // pred_check
          %p375 = pneg %p258
        $region34: #{tpu_custom_call.1} parent=11 // pred_check_branch
          %377 = sbr.rel (%p375) target = $region36
        $region35: #{tpu_custom_call.1} parent=11 // pred_region
          _
        $region36: #{tpu_custom_call.1} parent=11 // pred_fallthru
          _
        // Predicated region
        $region37: #{tpu_custom_call.1} parent=11 // pred_check
          %p378 = pneg %p279
        $region38: #{tpu_custom_call.1} parent=11 // pred_check_branch
          %380 = sbr.rel (%p378) target = $region40
        $region39: #{tpu_custom_call.1} parent=11 // pred_region
          _
        $region40: #{tpu_custom_call.1} parent=11 // pred_fallthru
          _
      $region12: #{tpu_custom_call.1} parent=5 // pred_fallthru
        _
      %p381 = scmp.lt.s32.totalorder %s28, 2
      // Predicated region
      $region41: #{tpu_custom_call.1} parent=5 // pred_check
        %p382 = pneg %p381
      $region42: #{tpu_custom_call.1} parent=5 // pred_check_branch
        %384 = sbr.rel (%p382) target = $region44
      $region43: #{tpu_custom_call.1} parent=5 // pred_region
        // Predicated region
        $region45: #{tpu_custom_call.1} parent=43 // pred_check
          %p385 = pneg %p48
        $region46: #{tpu_custom_call.1} parent=43 // pred_check_branch
          %387 = sbr.rel (%p385) target = $region48
        $region47: #{tpu_custom_call.1} parent=43 // pred_region
          %s388 = sand.u32 %s38, 1
          %s389 = scalar_lea.sflag [#allocation3], %s388
          %s390 = sand.u32 %s38, 1
          %s391 = smul.addr %s390, 8
          %s392 = scalar_lea.vmem [#allocation2], %s391
          %s394 = ssub.s32 128, 128
          %395 = vsyncadd %s389, %s394
          %s396 = smul.addr %s28, 128
          %s397 = scalar_lea.hbm %s0, %s396
          %s399 = sshll.u32 %s392, 4
          %s400 = int_to_ptr.vmem [resolvable:$true] %s399
          %402 = dma.hbm_to_vmem [thread:$0]  %s397, 128, %s400, %s389
        $region48: #{tpu_custom_call.1} parent=43 // pred_fallthru
          _
        // Predicated region
        $region49: #{tpu_custom_call.1} parent=43 // pred_check
          %p403 = pneg %p74
        $region50: #{tpu_custom_call.1} parent=43 // pred_check_branch
          %405 = sbr.rel (%p403) target = $region52
        $region51: #{tpu_custom_call.1} parent=43 // pred_region
          %s406 = sand.u32 %s28, 1
          %s407 = scalar_lea.sflag [#allocation6], %s406
          %s408 = sand.u32 %s64, 1
          %s409 = smul.addr %s408, 8
          %s410 = scalar_lea.vmem [#allocation5], %s409
          %s412 = ssub.s32 128, 128
          %413 = vsyncadd %s407, %s412
          %s414 = smul.addr %s28, 128
          %s415 = scalar_lea.hbm %s1, %s414
          %s417 = sshll.u32 %s410, 4
          %s418 = int_to_ptr.vmem [resolvable:$true] %s417
          %420 = dma.hbm_to_vmem [thread:$0]  %s415, 128, %s418, %s407
        $region52: #{tpu_custom_call.1} parent=43 // pred_fallthru
          _
        // Predicated region
        $region53: #{tpu_custom_call.1} parent=43 // pred_check
          %p421 = pneg %p100
        $region54: #{tpu_custom_call.1} parent=43 // pred_check_branch
          %423 = sbr.rel (%p421) target = $region56
        $region55: #{tpu_custom_call.1} parent=43 // pred_region
          %s424 = sand.u32 %s28, 1
          %s425 = scalar_lea.sflag [#allocation6], %s424
          %s426 = sand.u32 %s90, 1
          %s427 = smul.addr %s426, 8
          %s428 = scalar_lea.vmem [#allocation7], %s427
          %s430 = ssub.s32 128, 128
          %431 = vsyncadd %s425, %s430
          %s432 = smul.addr %s28, 128
          %s433 = scalar_lea.hbm %s2, %s432
          %s435 = sshll.u32 %s428, 4
          %s436 = int_to_ptr.vmem [resolvable:$true] %s435
          %438 = dma.hbm_to_vmem [thread:$0]  %s433, 128, %s436, %s425
        $region56: #{tpu_custom_call.1} parent=43 // pred_fallthru
          _
        // Predicated region
        $region57: #{tpu_custom_call.1} parent=43 // pred_check
          %p439 = pneg %p126
        $region58: #{tpu_custom_call.1} parent=43 // pred_check_branch
          %441 = sbr.rel (%p439) target = $region60
        $region59: #{tpu_custom_call.1} parent=43 // pred_region
          %p442 = scmp.lt.s32.totalorder %s28, 1
          %s443 = scalar_select %p442, %s28, 1
          %s444 = smul.addr %s443, 2
          %s445 = scalar_lea.vmem %s3, %s444
        $region60: #{tpu_custom_call.1} parent=43 // pred_fallthru
          _
      $region44: #{tpu_custom_call.1} parent=5 // pred_fallthru
        _
      %p446 = scmp.le.s32.totalorder 1, %s28
      %p447 = scmp.lt.s32.totalorder %s28, 3
      %p448 = pnand %p446, %p447
      %p449 = pneg %p448
      // Predicated region
      $region61: #{tpu_custom_call.1} parent=5 // pred_check
        _
      $region62: #{tpu_custom_call.1} parent=5 // pred_check_branch
        %451 = sbr.rel (%p448) target = $region64
      $region63: #{tpu_custom_call.1} parent=5 // pred_region
        %s452 = ssub.s32 %s28, 1
        %s453 = sand.u32 %s41, 1
        %s454 = scalar_lea.sflag [#allocation3], %s453
        %s455 = sand.u32 %s41, 1
        %s456 = smul.addr %s455, 8
        %s457 = scalar_lea.vmem [#allocation2], %s456
        // Predicated region
        $region65: #{tpu_custom_call.1} parent=63 // pred_check
          %p458 = pneg %p54
        $region66: #{tpu_custom_call.1} parent=63 // pred_check_branch
          %460 = sbr.rel (%p458) target = $region68
        $region67: #{tpu_custom_call.1} parent=63 // pred_region
          %461 = dma.done %s454, 128
        $region68: #{tpu_custom_call.1} parent=63 // pred_fallthru
          _
        %s462 = sand.u32 %s33, 1
        %s463 = scalar_lea.sflag [#allocation6], %s462
        %s464 = sand.u32 %s67, 1
        %s465 = smul.addr %s464, 8
        %s466 = scalar_lea.vmem [#allocation5], %s465
        // Predicated region
        $region69: #{tpu_custom_call.1} parent=63 // pred_check
          %p467 = pneg %p80
        $region70: #{tpu_custom_call.1} parent=63 // pred_check_branch
          %469 = sbr.rel (%p467) target = $region72
        $region71: #{tpu_custom_call.1} parent=63 // pred_region
          %470 = dma.done %s463, 128
        $region72: #{tpu_custom_call.1} parent=63 // pred_fallthru
          _
        %s471 = sand.u32 %s33, 1
        %s472 = scalar_lea.sflag [#allocation6], %s471
        %s473 = sand.u32 %s93, 1
        %s474 = smul.addr %s473, 8
        %s475 = scalar_lea.vmem [#allocation7], %s474
        // Predicated region
        $region73: #{tpu_custom_call.1} parent=63 // pred_check
          %p476 = pneg %p106
        $region74: #{tpu_custom_call.1} parent=63 // pred_check_branch
          %478 = sbr.rel (%p476) target = $region76
        $region75: #{tpu_custom_call.1} parent=63 // pred_region
          %479 = dma.done %s472, 128
        $region76: #{tpu_custom_call.1} parent=63 // pred_fallthru
          _
        // Predicated region
        $region77: #{tpu_custom_call.1} parent=63 // pred_check
          %p480 = pneg %p174
        $region78: #{tpu_custom_call.1} parent=63 // pred_check_branch
          %482 = sbr.rel (%p480) target = $region80
        $region79: #{tpu_custom_call.1} parent=63 // pred_region
          %483 = dma.done [#allocation9], 512
        $region80: #{tpu_custom_call.1} parent=63 // pred_fallthru
          _
        // Predicated region
        $region81: #{tpu_custom_call.1} parent=63 // pred_check
          %p484 = pneg %p195
        $region82: #{tpu_custom_call.1} parent=63 // pred_check_branch
          %486 = sbr.rel (%p484) target = $region84
        $region83: #{tpu_custom_call.1} parent=63 // pred_region
          %487 = dma.done [#allocation9], 512
        $region84: #{tpu_custom_call.1} parent=63 // pred_fallthru
          _
        // Predicated region
        $region85: #{tpu_custom_call.1} parent=63 // pred_check
          %p488 = pneg %p216
        $region86: #{tpu_custom_call.1} parent=63 // pred_check_branch
          %490 = sbr.rel (%p488) target = $region88
        $region87: #{tpu_custom_call.1} parent=63 // pred_region
          %491 = dma.done [#allocation12], 512
        $region88: #{tpu_custom_call.1} parent=63 // pred_fallthru
          _
        // Predicated region
        $region89: #{tpu_custom_call.1} parent=63 // pred_check
          %p492 = pneg %p237
        $region90: #{tpu_custom_call.1} parent=63 // pred_check_branch
          %494 = sbr.rel (%p492) target = $region92
        $region91: #{tpu_custom_call.1} parent=63 // pred_region
          %495 = dma.done [#allocation12], 512
        $region92: #{tpu_custom_call.1} parent=63 // pred_fallthru
          _
        %s496 = sand.u32 %s41, 1
        %s497 = scalar_lea.sflag [#allocation3], %s496
        %s498 = sand.u32 %s41, 1
        %s499 = smul.addr %s498, 8
        %s500 = scalar_lea.vmem [#allocation2], %s499
        %p501 = pneg %p54
        %p502 = pneg %p51
        %s503 = sand.u32 %s33, 1
        %s504 = scalar_lea.sflag [#allocation6], %s503
        %s505 = sand.u32 %s67, 1
        %s506 = smul.addr %s505, 8
        %s507 = scalar_lea.vmem [#allocation5], %s506
        %p508 = pneg %p80
        %p509 = pneg %p77
        %s510 = sand.u32 %s33, 1
        %s511 = scalar_lea.sflag [#allocation6], %s510
        %s512 = sand.u32 %s93, 1
        %s513 = smul.addr %s512, 8
        %s514 = scalar_lea.vmem [#allocation7], %s513
        %p515 = pneg %p106
        %p516 = pneg %p103
        %p517 = scmp.lt.s32.totalorder %s33, 1
        %s518 = scalar_select %p517, %s33, 1
        %s519 = smul.addr %s518, 2
        %s520 = scalar_lea.vmem %s3, %s519
        %p521 = pneg %p132
        %p522 = pneg %p129
        %p523 = pneg %p153
        %p524 = pneg %p150
        %p525 = pneg %p174
        %p526 = pneg %p171
        %p527 = pneg %p195
        %p528 = pneg %p192
        %p529 = pneg %p216
        %p530 = pneg %p213
        %p531 = pneg %p237
        %p532 = pneg %p234
        %p533 = pneg %p258
        %p534 = pneg %p255
        %p535 = pneg %p279
        %p536 = pneg %p276
        %p537 = pneg %p305
        %p538 = pneg %p302
        %s539 = sand.u32 %s292, 1
        %s540 = scalar_lea.sflag [#allocation4], %s539
        %s541 = sand.u32 %s292, 1
        %s542 = smul.addr %s541, 8
        %s543 = scalar_lea.vmem [#allocation14], %s542
        %p544 = scmp.lt.s32.totalorder %s33, 1
        %s545 = scalar_select %p544, %s33, 1
        %s546 = smul.addr %s545, 2
        %s547 = scalar_lea.vmem %s3, %s546
        %v550 = vld [vmem:[%s457] sm:$0xff]
        %v551 = vld [vmem:[%s466] sm:$0xff]
        %v552 = vld [vmem:[%s475] sm:$0xff]
        %v553 = vld [vmem:[#allocation8] sm:$0xff]
        %v554 = vld [vmem:[#allocation8 + $0x8] sm:$0xff]
        %v555 = vld [vmem:[#allocation8 + $0x10] sm:$0xff]
        %v556 = vld [vmem:[#allocation8 + $0x18] sm:$0xff]
        %vm557 = vcmask 261120
        %v559 = vsel %vm557, %v550, 0
        %v562 = vsel %vm557, %v553, 0
        %564 = vmatprep.subr.mxu0 0.0
        %565 = vmatpush1.xpose.msra.mxu0 %v562
        %566 = vmatprep.subr.mxu0 0.0
        %567 = vmatpush1.xpose.msra.mxu0 0.0
        %568 = vmatprep.subr.mxu0 0.0
        %569 = vmatpush1.xpose.msra.mxu0 0.0
        %570 = vmatprep.subr.mxu0 0.0
        %571 = vmatpush1.xpose.msra.mxu0 0.0
        %572 = vmatprep.subr.mxu0 0.0
        %573 = vmatpush1.xpose.msra.mxu0 0.0
        %574 = vmatprep.subr.mxu0 0.0
        %575 = vmatpush1.xpose.msra.mxu0 0.0
        %576 = vmatprep.subr.mxu0 0.0
        %577 = vmatpush1.xpose.msra.mxu0 0.0
        %578 = vmatprep.subr.mxu0 0.0
        %579 = vmatpush1.xpose.msra.mxu0 0.0
        %580 = vmatprep.subr.mxu0 0.0
        %581 = vmatpush1.xpose.msra.mxu0 0.0
        %582 = vmatprep.subr.mxu0 0.0
        %583 = vmatpush1.xpose.msra.mxu0 0.0
        %584 = vmatprep.subr.mxu0 0.0
        %585 = vmatpush1.xpose.msra.mxu0 0.0
        %586 = vmatprep.subr.mxu0 0.0
        %587 = vmatpush1.xpose.msra.mxu0 0.0
        %588 = vmatprep.subr.mxu0 0.0
        %589 = vmatpush1.xpose.msra.mxu0 0.0
        %590 = vmatprep.subr.mxu0 0.0
        %591 = vmatpush1.xpose.msra.mxu0 0.0
        %592 = vmatprep.subr.mxu0 0.0
        %593 = vmatpush1.xpose.msra.mxu0 0.0
        %594 = vmatprep.subr.mxu0 0.0
        %595 = vmatpush1.xpose.msra.mxu0 0.0
        %596 = vmatprep.subr.mxu0 0.0
        %597 = vmatpush1.xpose.msra.mxu0 0.0
        %598 = vmatprep.subr.mxu0 0.0
        %599 = vmatpush1.xpose.msra.mxu0 0.0
        %600 = vmatprep.subr.mxu0 0.0
        %601 = vmatpush1.xpose.msra.mxu0 0.0
        %602 = vmatprep.subr.mxu0 0.0
        %603 = vmatpush1.xpose.msra.mxu0 0.0
        %604 = vmatprep.subr.mxu0 0.0
        %605 = vmatpush1.xpose.msra.mxu0 0.0
        %606 = vmatprep.subr.mxu0 0.0
        %607 = vmatpush1.xpose.msra.mxu0 0.0
        %608 = vmatprep.subr.mxu0 0.0
        %609 = vmatpush1.xpose.msra.mxu0 0.0
        %610 = vmatprep.subr.mxu0 0.0
        %611 = vmatpush1.xpose.msra.mxu0 0.0
        %612 = vmatprep.subr.mxu0 0.0
        %613 = vmatpush1.xpose.msra.mxu0 0.0
        %614 = vmatprep.subr.mxu0 0.0
        %615 = vmatpush1.xpose.msra.mxu0 0.0
        %616 = vmatprep.subr.mxu0 0.0
        %617 = vmatpush1.xpose.msra.mxu0 0.0
        %618 = vmatprep.subr.mxu0 0.0
        %619 = vmatpush1.xpose.msra.mxu0 0.0
        %620 = vmatprep.subr.mxu0 0.0
        %621 = vmatpush1.xpose.msra.mxu0 0.0
        %622 = vmatprep.subr.mxu0 0.0
        %623 = vmatpush1.xpose.msra.mxu0 0.0
        %624 = vmatprep.subr.mxu0 0.0
        %625 = vmatpush1.xpose.msra.mxu0 0.0
        %626 = vmatprep.subr.mxu0 0.0
        %627 = vmatpush1.xpose.msra.mxu0 0.0
        %628 = vmatprep.mubr.f32.mxu0 0.0
        %629 = vmatmul.mubr.f32.gmra.mrb[0].mxu0 %v559
        %v630 = vpop.f32.mrb[0].mxu0
        %v631 = vadd.f32 0.0, %v630
        %v632 = vpop.f32.mrb[0].mxu0
        %633 = vdwg.mxu0
        %v635 = vsel %vm557, %v554, 0
        %637 = vmatprep.subr.mxu0 0.0
        %638 = vmatpush1.xpose.msra.mxu0 %v635
        %639 = vmatprep.subr.mxu0 0.0
        %640 = vmatpush1.xpose.msra.mxu0 0.0
        %641 = vmatprep.subr.mxu0 0.0
        %642 = vmatpush1.xpose.msra.mxu0 0.0
        %643 = vmatprep.subr.mxu0 0.0
        %644 = vmatpush1.xpose.msra.mxu0 0.0
        %645 = vmatprep.subr.mxu0 0.0
        %646 = vmatpush1.xpose.msra.mxu0 0.0
        %647 = vmatprep.subr.mxu0 0.0
        %648 = vmatpush1.xpose.msra.mxu0 0.0
        %649 = vmatprep.subr.mxu0 0.0
        %650 = vmatpush1.xpose.msra.mxu0 0.0
        %651 = vmatprep.subr.mxu0 0.0
        %652 = vmatpush1.xpose.msra.mxu0 0.0
        %653 = vmatprep.subr.mxu0 0.0
        %654 = vmatpush1.xpose.msra.mxu0 0.0
        %655 = vmatprep.subr.mxu0 0.0
        %656 = vmatpush1.xpose.msra.mxu0 0.0
        %657 = vmatprep.subr.mxu0 0.0
        %658 = vmatpush1.xpose.msra.mxu0 0.0
        %659 = vmatprep.subr.mxu0 0.0
        %660 = vmatpush1.xpose.msra.mxu0 0.0
        %661 = vmatprep.subr.mxu0 0.0
        %662 = vmatpush1.xpose.msra.mxu0 0.0
        %663 = vmatprep.subr.mxu0 0.0
        %664 = vmatpush1.xpose.msra.mxu0 0.0
        %665 = vmatprep.subr.mxu0 0.0
        %666 = vmatpush1.xpose.msra.mxu0 0.0
        %667 = vmatprep.subr.mxu0 0.0
        %668 = vmatpush1.xpose.msra.mxu0 0.0
        %669 = vmatprep.subr.mxu0 0.0
        %670 = vmatpush1.xpose.msra.mxu0 0.0
        %671 = vmatprep.subr.mxu0 0.0
        %672 = vmatpush1.xpose.msra.mxu0 0.0
        %673 = vmatprep.subr.mxu0 0.0
        %674 = vmatpush1.xpose.msra.mxu0 0.0
        %675 = vmatprep.subr.mxu0 0.0
        %676 = vmatpush1.xpose.msra.mxu0 0.0
        %677 = vmatprep.subr.mxu0 0.0
        %678 = vmatpush1.xpose.msra.mxu0 0.0
        %679 = vmatprep.subr.mxu0 0.0
        %680 = vmatpush1.xpose.msra.mxu0 0.0
        %681 = vmatprep.subr.mxu0 0.0
        %682 = vmatpush1.xpose.msra.mxu0 0.0
        %683 = vmatprep.subr.mxu0 0.0
        %684 = vmatpush1.xpose.msra.mxu0 0.0
        %685 = vmatprep.subr.mxu0 0.0
        %686 = vmatpush1.xpose.msra.mxu0 0.0
        %687 = vmatprep.subr.mxu0 0.0
        %688 = vmatpush1.xpose.msra.mxu0 0.0
        %689 = vmatprep.subr.mxu0 0.0
        %690 = vmatpush1.xpose.msra.mxu0 0.0
        %691 = vmatprep.subr.mxu0 0.0
        %692 = vmatpush1.xpose.msra.mxu0 0.0
        %693 = vmatprep.subr.mxu0 0.0
        %694 = vmatpush1.xpose.msra.mxu0 0.0
        %695 = vmatprep.subr.mxu0 0.0
        %696 = vmatpush1.xpose.msra.mxu0 0.0
        %697 = vmatprep.subr.mxu0 0.0
        %698 = vmatpush1.xpose.msra.mxu0 0.0
        %699 = vmatprep.subr.mxu0 0.0
        %700 = vmatpush1.xpose.msra.mxu0 0.0
        %701 = vmatprep.mubr.f32.mxu0 0.0
        %702 = vmatmul.mubr.f32.gmra.mrb[0].mxu0 %v559
        %v703 = vpop.f32.mrb[0].mxu0
        %v704 = vadd.f32 0.0, %v703
        %v705 = vpop.f32.mrb[0].mxu0
        %706 = vdwg.mxu0
        %v708 = vsel %vm557, %v555, 0
        %710 = vmatprep.subr.mxu0 0.0
        %711 = vmatpush1.xpose.msra.mxu0 %v708
        %712 = vmatprep.subr.mxu0 0.0
        %713 = vmatpush1.xpose.msra.mxu0 0.0
        %714 = vmatprep.subr.mxu0 0.0
        %715 = vmatpush1.xpose.msra.mxu0 0.0
        %716 = vmatprep.subr.mxu0 0.0
        %717 = vmatpush1.xpose.msra.mxu0 0.0
        %718 = vmatprep.subr.mxu0 0.0
        %719 = vmatpush1.xpose.msra.mxu0 0.0
        %720 = vmatprep.subr.mxu0 0.0
        %721 = vmatpush1.xpose.msra.mxu0 0.0
        %722 = vmatprep.subr.mxu0 0.0
        %723 = vmatpush1.xpose.msra.mxu0 0.0
        %724 = vmatprep.subr.mxu0 0.0
        %725 = vmatpush1.xpose.msra.mxu0 0.0
        %726 = vmatprep.subr.mxu0 0.0
        %727 = vmatpush1.xpose.msra.mxu0 0.0
        %728 = vmatprep.subr.mxu0 0.0
        %729 = vmatpush1.xpose.msra.mxu0 0.0
        %730 = vmatprep.subr.mxu0 0.0
        %731 = vmatpush1.xpose.msra.mxu0 0.0
        %732 = vmatprep.subr.mxu0 0.0
        %733 = vmatpush1.xpose.msra.mxu0 0.0
        %734 = vmatprep.subr.mxu0 0.0
        %735 = vmatpush1.xpose.msra.mxu0 0.0
        %736 = vmatprep.subr.mxu0 0.0
        %737 = vmatpush1.xpose.msra.mxu0 0.0
        %738 = vmatprep.subr.mxu0 0.0
        %739 = vmatpush1.xpose.msra.mxu0 0.0
        %740 = vmatprep.subr.mxu0 0.0
        %741 = vmatpush1.xpose.msra.mxu0 0.0
        %742 = vmatprep.subr.mxu0 0.0
        %743 = vmatpush1.xpose.msra.mxu0 0.0
        %744 = vmatprep.subr.mxu0 0.0
        %745 = vmatpush1.xpose.msra.mxu0 0.0
        %746 = vmatprep.subr.mxu0 0.0
        %747 = vmatpush1.xpose.msra.mxu0 0.0
        %748 = vmatprep.subr.mxu0 0.0
        %749 = vmatpush1.xpose.msra.mxu0 0.0
        %750 = vmatprep.subr.mxu0 0.0
        %751 = vmatpush1.xpose.msra.mxu0 0.0
        %752 = vmatprep.subr.mxu0 0.0
        %753 = vmatpush1.xpose.msra.mxu0 0.0
        %754 = vmatprep.subr.mxu0 0.0
        %755 = vmatpush1.xpose.msra.mxu0 0.0
        %756 = vmatprep.subr.mxu0 0.0
        %757 = vmatpush1.xpose.msra.mxu0 0.0
        %758 = vmatprep.subr.mxu0 0.0
        %759 = vmatpush1.xpose.msra.mxu0 0.0
        %760 = vmatprep.subr.mxu0 0.0
        %761 = vmatpush1.xpose.msra.mxu0 0.0
        %762 = vmatprep.subr.mxu0 0.0
        %763 = vmatpush1.xpose.msra.mxu0 0.0
        %764 = vmatprep.subr.mxu0 0.0
        %765 = vmatpush1.xpose.msra.mxu0 0.0
        %766 = vmatprep.subr.mxu0 0.0
        %767 = vmatpush1.xpose.msra.mxu0 0.0
        %768 = vmatprep.subr.mxu0 0.0
        %769 = vmatpush1.xpose.msra.mxu0 0.0
        %770 = vmatprep.subr.mxu0 0.0
        %771 = vmatpush1.xpose.msra.mxu0 0.0
        %772 = vmatprep.subr.mxu0 0.0
        %773 = vmatpush1.xpose.msra.mxu0 0.0
        %774 = vmatprep.mubr.f32.mxu0 0.0
        %775 = vmatmul.mubr.f32.gmra.mrb[0].mxu0 %v559
        %v776 = vpop.f32.mrb[0].mxu0
        %v777 = vadd.f32 0.0, %v776
        %v778 = vpop.f32.mrb[0].mxu0
        %779 = vdwg.mxu0
        %v781 = vsel %vm557, %v556, 0
        %783 = vmatprep.subr.mxu0 0.0
        %784 = vmatpush1.xpose.msra.mxu0 %v781
        %785 = vmatprep.subr.mxu0 0.0
        %786 = vmatpush1.xpose.msra.mxu0 0.0
        %787 = vmatprep.subr.mxu0 0.0
        %788 = vmatpush1.xpose.msra.mxu0 0.0
        %789 = vmatprep.subr.mxu0 0.0
        %790 = vmatpush1.xpose.msra.mxu0 0.0
        %791 = vmatprep.subr.mxu0 0.0
        %792 = vmatpush1.xpose.msra.mxu0 0.0
        %793 = vmatprep.subr.mxu0 0.0
        %794 = vmatpush1.xpose.msra.mxu0 0.0
        %795 = vmatprep.subr.mxu0 0.0
        %796 = vmatpush1.xpose.msra.mxu0 0.0
        %797 = vmatprep.subr.mxu0 0.0
        %798 = vmatpush1.xpose.msra.mxu0 0.0
        %799 = vmatprep.subr.mxu0 0.0
        %800 = vmatpush1.xpose.msra.mxu0 0.0
        %801 = vmatprep.subr.mxu0 0.0
        %802 = vmatpush1.xpose.msra.mxu0 0.0
        %803 = vmatprep.subr.mxu0 0.0
        %804 = vmatpush1.xpose.msra.mxu0 0.0
        %805 = vmatprep.subr.mxu0 0.0
        %806 = vmatpush1.xpose.msra.mxu0 0.0
        %807 = vmatprep.subr.mxu0 0.0
        %808 = vmatpush1.xpose.msra.mxu0 0.0
        %809 = vmatprep.subr.mxu0 0.0
        %810 = vmatpush1.xpose.msra.mxu0 0.0
        %811 = vmatprep.subr.mxu0 0.0
        %812 = vmatpush1.xpose.msra.mxu0 0.0
        %813 = vmatprep.subr.mxu0 0.0
        %814 = vmatpush1.xpose.msra.mxu0 0.0
        %815 = vmatprep.subr.mxu0 0.0
        %816 = vmatpush1.xpose.msra.mxu0 0.0
        %817 = vmatprep.subr.mxu0 0.0
        %818 = vmatpush1.xpose.msra.mxu0 0.0
        %819 = vmatprep.subr.mxu0 0.0
        %820 = vmatpush1.xpose.msra.mxu0 0.0
        %821 = vmatprep.subr.mxu0 0.0
        %822 = vmatpush1.xpose.msra.mxu0 0.0
        %823 = vmatprep.subr.mxu0 0.0
        %824 = vmatpush1.xpose.msra.mxu0 0.0
        %825 = vmatprep.subr.mxu0 0.0
        %826 = vmatpush1.xpose.msra.mxu0 0.0
        %827 = vmatprep.subr.mxu0 0.0
        %828 = vmatpush1.xpose.msra.mxu0 0.0
        %829 = vmatprep.subr.mxu0 0.0
        %830 = vmatpush1.xpose.msra.mxu0 0.0
        %831 = vmatprep.subr.mxu0 0.0
        %832 = vmatpush1.xpose.msra.mxu0 0.0
        %833 = vmatprep.subr.mxu0 0.0
        %834 = vmatpush1.xpose.msra.mxu0 0.0
        %835 = vmatprep.subr.mxu0 0.0
        %836 = vmatpush1.xpose.msra.mxu0 0.0
        %837 = vmatprep.subr.mxu0 0.0
        %838 = vmatpush1.xpose.msra.mxu0 0.0
        %839 = vmatprep.subr.mxu0 0.0
        %840 = vmatpush1.xpose.msra.mxu0 0.0
        %841 = vmatprep.subr.mxu0 0.0
        %842 = vmatpush1.xpose.msra.mxu0 0.0
        %843 = vmatprep.subr.mxu0 0.0
        %844 = vmatpush1.xpose.msra.mxu0 0.0
        %845 = vmatprep.subr.mxu0 0.0
        %846 = vmatpush1.xpose.msra.mxu0 0.0
        %847 = vmatprep.mubr.f32.mxu0 0.0
        %848 = vmatmul.mubr.f32.gmra.mrb[0].mxu0 %v559
        %v849 = vpop.f32.mrb[0].mxu0
        %v850 = vadd.f32 0.0, %v849
        %v851 = vpop.f32.mrb[0].mxu0
        %852 = vdwg.mxu0
        %v853 = vld [vmem:[#allocation10] sm:$0xff]
        %v854 = vld [vmem:[#allocation10 + $0x8] sm:$0xff]
        %v855 = vld [vmem:[#allocation10 + $0x10] sm:$0xff]
        %v856 = vld [vmem:[#allocation10 + $0x18] sm:$0xff]
        %v858 = vsel %vm557, %v551, 0
        %v861 = vsel %vm557, %v853, 0
        %863 = vmatprep.subr.mxu0 0.0
        %864 = vmatpush1.xpose.msra.mxu0 %v861
        %865 = vmatprep.subr.mxu0 0.0
        %866 = vmatpush1.xpose.msra.mxu0 0.0
        %867 = vmatprep.subr.mxu0 0.0
        %868 = vmatpush1.xpose.msra.mxu0 0.0
        %869 = vmatprep.subr.mxu0 0.0
        %870 = vmatpush1.xpose.msra.mxu0 0.0
        %871 = vmatprep.subr.mxu0 0.0
        %872 = vmatpush1.xpose.msra.mxu0 0.0
        %873 = vmatprep.subr.mxu0 0.0
        %874 = vmatpush1.xpose.msra.mxu0 0.0
        %875 = vmatprep.subr.mxu0 0.0
        %876 = vmatpush1.xpose.msra.mxu0 0.0
        %877 = vmatprep.subr.mxu0 0.0
        %878 = vmatpush1.xpose.msra.mxu0 0.0
        %879 = vmatprep.subr.mxu0 0.0
        %880 = vmatpush1.xpose.msra.mxu0 0.0
        %881 = vmatprep.subr.mxu0 0.0
        %882 = vmatpush1.xpose.msra.mxu0 0.0
        %883 = vmatprep.subr.mxu0 0.0
        %884 = vmatpush1.xpose.msra.mxu0 0.0
        %885 = vmatprep.subr.mxu0 0.0
        %886 = vmatpush1.xpose.msra.mxu0 0.0
        %887 = vmatprep.subr.mxu0 0.0
        %888 = vmatpush1.xpose.msra.mxu0 0.0
        %889 = vmatprep.subr.mxu0 0.0
        %890 = vmatpush1.xpose.msra.mxu0 0.0
        %891 = vmatprep.subr.mxu0 0.0
        %892 = vmatpush1.xpose.msra.mxu0 0.0
        %893 = vmatprep.subr.mxu0 0.0
        %894 = vmatpush1.xpose.msra.mxu0 0.0
        %895 = vmatprep.subr.mxu0 0.0
        %896 = vmatpush1.xpose.msra.mxu0 0.0
        %897 = vmatprep.subr.mxu0 0.0
        %898 = vmatpush1.xpose.msra.mxu0 0.0
        %899 = vmatprep.subr.mxu0 0.0
        %900 = vmatpush1.xpose.msra.mxu0 0.0
        %901 = vmatprep.subr.mxu0 0.0
        %902 = vmatpush1.xpose.msra.mxu0 0.0
        %903 = vmatprep.subr.mxu0 0.0
        %904 = vmatpush1.xpose.msra.mxu0 0.0
        %905 = vmatprep.subr.mxu0 0.0
        %906 = vmatpush1.xpose.msra.mxu0 0.0
        %907 = vmatprep.subr.mxu0 0.0
        %908 = vmatpush1.xpose.msra.mxu0 0.0
        %909 = vmatprep.subr.mxu0 0.0
        %910 = vmatpush1.xpose.msra.mxu0 0.0
        %911 = vmatprep.subr.mxu0 0.0
        %912 = vmatpush1.xpose.msra.mxu0 0.0
        %913 = vmatprep.subr.mxu0 0.0
        %914 = vmatpush1.xpose.msra.mxu0 0.0
        %915 = vmatprep.subr.mxu0 0.0
        %916 = vmatpush1.xpose.msra.mxu0 0.0
        %917 = vmatprep.subr.mxu0 0.0
        %918 = vmatpush1.xpose.msra.mxu0 0.0
        %919 = vmatprep.subr.mxu0 0.0
        %920 = vmatpush1.xpose.msra.mxu0 0.0
        %921 = vmatprep.subr.mxu0 0.0
        %922 = vmatpush1.xpose.msra.mxu0 0.0
        %923 = vmatprep.subr.mxu0 0.0
        %924 = vmatpush1.xpose.msra.mxu0 0.0
        %925 = vmatprep.subr.mxu0 0.0
        %926 = vmatpush1.xpose.msra.mxu0 0.0
        %927 = vmatprep.mubr.f32.mxu0 0.0
        %928 = vmatmul.mubr.f32.gmra.mrb[0].mxu0 %v858
        %v929 = vpop.f32.mrb[0].mxu0
        %v930 = vadd.f32 0.0, %v929
        %v931 = vpop.f32.mrb[0].mxu0
        %932 = vdwg.mxu0
        %v934 = vsel %vm557, %v854, 0
        %936 = vmatprep.subr.mxu0 0.0
        %937 = vmatpush1.xpose.msra.mxu0 %v934
        %938 = vmatprep.subr.mxu0 0.0
        %939 = vmatpush1.xpose.msra.mxu0 0.0
        %940 = vmatprep.subr.mxu0 0.0
        %941 = vmatpush1.xpose.msra.mxu0 0.0
        %942 = vmatprep.subr.mxu0 0.0
        %943 = vmatpush1.xpose.msra.mxu0 0.0
        %944 = vmatprep.subr.mxu0 0.0
        %945 = vmatpush1.xpose.msra.mxu0 0.0
        %946 = vmatprep.subr.mxu0 0.0
        %947 = vmatpush1.xpose.msra.mxu0 0.0
        %948 = vmatprep.subr.mxu0 0.0
        %949 = vmatpush1.xpose.msra.mxu0 0.0
        %950 = vmatprep.subr.mxu0 0.0
        %951 = vmatpush1.xpose.msra.mxu0 0.0
        %952 = vmatprep.subr.mxu0 0.0
        %953 = vmatpush1.xpose.msra.mxu0 0.0
        %954 = vmatprep.subr.mxu0 0.0
        %955 = vmatpush1.xpose.msra.mxu0 0.0
        %956 = vmatprep.subr.mxu0 0.0
        %957 = vmatpush1.xpose.msra.mxu0 0.0
        %958 = vmatprep.subr.mxu0 0.0
        %959 = vmatpush1.xpose.msra.mxu0 0.0
        %960 = vmatprep.subr.mxu0 0.0
        %961 = vmatpush1.xpose.msra.mxu0 0.0
        %962 = vmatprep.subr.mxu0 0.0
        %963 = vmatpush1.xpose.msra.mxu0 0.0
        %964 = vmatprep.subr.mxu0 0.0
        %965 = vmatpush1.xpose.msra.mxu0 0.0
        %966 = vmatprep.subr.mxu0 0.0
        %967 = vmatpush1.xpose.msra.mxu0 0.0
        %968 = vmatprep.subr.mxu0 0.0
        %969 = vmatpush1.xpose.msra.mxu0 0.0
        %970 = vmatprep.subr.mxu0 0.0
        %971 = vmatpush1.xpose.msra.mxu0 0.0
        %972 = vmatprep.subr.mxu0 0.0
        %973 = vmatpush1.xpose.msra.mxu0 0.0
        %974 = vmatprep.subr.mxu0 0.0
        %975 = vmatpush1.xpose.msra.mxu0 0.0
        %976 = vmatprep.subr.mxu0 0.0
        %977 = vmatpush1.xpose.msra.mxu0 0.0
        %978 = vmatprep.subr.mxu0 0.0
        %979 = vmatpush1.xpose.msra.mxu0 0.0
        %980 = vmatprep.subr.mxu0 0.0
        %981 = vmatpush1.xpose.msra.mxu0 0.0
        %982 = vmatprep.subr.mxu0 0.0
        %983 = vmatpush1.xpose.msra.mxu0 0.0
        %984 = vmatprep.subr.mxu0 0.0
        %985 = vmatpush1.xpose.msra.mxu0 0.0
        %986 = vmatprep.subr.mxu0 0.0
        %987 = vmatpush1.xpose.msra.mxu0 0.0
        %988 = vmatprep.subr.mxu0 0.0
        %989 = vmatpush1.xpose.msra.mxu0 0.0
        %990 = vmatprep.subr.mxu0 0.0
        %991 = vmatpush1.xpose.msra.mxu0 0.0
        %992 = vmatprep.subr.mxu0 0.0
        %993 = vmatpush1.xpose.msra.mxu0 0.0
        %994 = vmatprep.subr.mxu0 0.0
        %995 = vmatpush1.xpose.msra.mxu0 0.0
        %996 = vmatprep.subr.mxu0 0.0
        %997 = vmatpush1.xpose.msra.mxu0 0.0
        %998 = vmatprep.subr.mxu0 0.0
        %999 = vmatpush1.xpose.msra.mxu0 0.0
        %1000 = vmatprep.mubr.f32.mxu0 0.0
        %1001 = vmatmul.mubr.f32.gmra.mrb[0].mxu0 %v858
        %v1002 = vpop.f32.mrb[0].mxu0
        %v1003 = vadd.f32 0.0, %v1002
        %v1004 = vpop.f32.mrb[0].mxu0
        %1005 = vdwg.mxu0
        %v1007 = vsel %vm557, %v855, 0
        %1009 = vmatprep.subr.mxu0 0.0
        %1010 = vmatpush1.xpose.msra.mxu0 %v1007
        %1011 = vmatprep.subr.mxu0 0.0
        %1012 = vmatpush1.xpose.msra.mxu0 0.0
        %1013 = vmatprep.subr.mxu0 0.0
        %1014 = vmatpush1.xpose.msra.mxu0 0.0
        %1015 = vmatprep.subr.mxu0 0.0
        %1016 = vmatpush1.xpose.msra.mxu0 0.0
        %1017 = vmatprep.subr.mxu0 0.0
        %1018 = vmatpush1.xpose.msra.mxu0 0.0
        %1019 = vmatprep.subr.mxu0 0.0
        %1020 = vmatpush1.xpose.msra.mxu0 0.0
        %1021 = vmatprep.subr.mxu0 0.0
        %1022 = vmatpush1.xpose.msra.mxu0 0.0
        %1023 = vmatprep.subr.mxu0 0.0
        %1024 = vmatpush1.xpose.msra.mxu0 0.0
        %1025 = vmatprep.subr.mxu0 0.0
        %1026 = vmatpush1.xpose.msra.mxu0 0.0
        %1027 = vmatprep.subr.mxu0 0.0
        %1028 = vmatpush1.xpose.msra.mxu0 0.0
        %1029 = vmatprep.subr.mxu0 0.0
        %1030 = vmatpush1.xpose.msra.mxu0 0.0
        %1031 = vmatprep.subr.mxu0 0.0
        %1032 = vmatpush1.xpose.msra.mxu0 0.0
        %1033 = vmatprep.subr.mxu0 0.0
        %1034 = vmatpush1.xpose.msra.mxu0 0.0
        %1035 = vmatprep.subr.mxu0 0.0
        %1036 = vmatpush1.xpose.msra.mxu0 0.0
        %1037 = vmatprep.subr.mxu0 0.0
        %1038 = vmatpush1.xpose.msra.mxu0 0.0
        %1039 = vmatprep.subr.mxu0 0.0
        %1040 = vmatpush1.xpose.msra.mxu0 0.0
        %1041 = vmatprep.subr.mxu0 0.0
        %1042 = vmatpush1.xpose.msra.mxu0 0.0
        %1043 = vmatprep.subr.mxu0 0.0
        %1044 = vmatpush1.xpose.msra.mxu0 0.0
        %1045 = vmatprep.subr.mxu0 0.0
        %1046 = vmatpush1.xpose.msra.mxu0 0.0
        %1047 = vmatprep.subr.mxu0 0.0
        %1048 = vmatpush1.xpose.msra.mxu0 0.0
        %1049 = vmatprep.subr.mxu0 0.0
        %1050 = vmatpush1.xpose.msra.mxu0 0.0
        %1051 = vmatprep.subr.mxu0 0.0
        %1052 = vmatpush1.xpose.msra.mxu0 0.0
        %1053 = vmatprep.subr.mxu0 0.0
        %1054 = vmatpush1.xpose.msra.mxu0 0.0
        %1055 = vmatprep.subr.mxu0 0.0
        %1056 = vmatpush1.xpose.msra.mxu0 0.0
        %1057 = vmatprep.subr.mxu0 0.0
        %1058 = vmatpush1.xpose.msra.mxu0 0.0
        %1059 = vmatprep.subr.mxu0 0.0
        %1060 = vmatpush1.xpose.msra.mxu0 0.0
        %1061 = vmatprep.subr.mxu0 0.0
        %1062 = vmatpush1.xpose.msra.mxu0 0.0
        %1063 = vmatprep.subr.mxu0 0.0
        %1064 = vmatpush1.xpose.msra.mxu0 0.0
        %1065 = vmatprep.subr.mxu0 0.0
        %1066 = vmatpush1.xpose.msra.mxu0 0.0
        %1067 = vmatprep.subr.mxu0 0.0
        %1068 = vmatpush1.xpose.msra.mxu0 0.0
        %1069 = vmatprep.subr.mxu0 0.0
        %1070 = vmatpush1.xpose.msra.mxu0 0.0
        %1071 = vmatprep.subr.mxu0 0.0
        %1072 = vmatpush1.xpose.msra.mxu0 0.0
        %1073 = vmatprep.mubr.f32.mxu0 0.0
        %1074 = vmatmul.mubr.f32.gmra.mrb[0].mxu0 %v858
        %v1075 = vpop.f32.mrb[0].mxu0
        %v1076 = vadd.f32 0.0, %v1075
        %v1077 = vpop.f32.mrb[0].mxu0
        %1078 = vdwg.mxu0
        %v1080 = vsel %vm557, %v856, 0
        %1082 = vmatprep.subr.mxu0 0.0
        %1083 = vmatpush1.xpose.msra.mxu0 %v1080
        %1084 = vmatprep.subr.mxu0 0.0
        %1085 = vmatpush1.xpose.msra.mxu0 0.0
        %1086 = vmatprep.subr.mxu0 0.0
        %1087 = vmatpush1.xpose.msra.mxu0 0.0
        %1088 = vmatprep.subr.mxu0 0.0
        %1089 = vmatpush1.xpose.msra.mxu0 0.0
        %1090 = vmatprep.subr.mxu0 0.0
        %1091 = vmatpush1.xpose.msra.mxu0 0.0
        %1092 = vmatprep.subr.mxu0 0.0
        %1093 = vmatpush1.xpose.msra.mxu0 0.0
        %1094 = vmatprep.subr.mxu0 0.0
        %1095 = vmatpush1.xpose.msra.mxu0 0.0
        %1096 = vmatprep.subr.mxu0 0.0
        %1097 = vmatpush1.xpose.msra.mxu0 0.0
        %1098 = vmatprep.subr.mxu0 0.0
        %1099 = vmatpush1.xpose.msra.mxu0 0.0
        %1100 = vmatprep.subr.mxu0 0.0
        %1101 = vmatpush1.xpose.msra.mxu0 0.0
        %1102 = vmatprep.subr.mxu0 0.0
        %1103 = vmatpush1.xpose.msra.mxu0 0.0
        %1104 = vmatprep.subr.mxu0 0.0
        %1105 = vmatpush1.xpose.msra.mxu0 0.0
        %1106 = vmatprep.subr.mxu0 0.0
        %1107 = vmatpush1.xpose.msra.mxu0 0.0
        %1108 = vmatprep.subr.mxu0 0.0
        %1109 = vmatpush1.xpose.msra.mxu0 0.0
        %1110 = vmatprep.subr.mxu0 0.0
        %1111 = vmatpush1.xpose.msra.mxu0 0.0
        %1112 = vmatprep.subr.mxu0 0.0
        %1113 = vmatpush1.xpose.msra.mxu0 0.0
        %1114 = vmatprep.subr.mxu0 0.0
        %1115 = vmatpush1.xpose.msra.mxu0 0.0
        %1116 = vmatprep.subr.mxu0 0.0
        %1117 = vmatpush1.xpose.msra.mxu0 0.0
        %1118 = vmatprep.subr.mxu0 0.0
        %1119 = vmatpush1.xpose.msra.mxu0 0.0
        %1120 = vmatprep.subr.mxu0 0.0
        %1121 = vmatpush1.xpose.msra.mxu0 0.0
        %1122 = vmatprep.subr.mxu0 0.0
        %1123 = vmatpush1.xpose.msra.mxu0 0.0
        %1124 = vmatprep.subr.mxu0 0.0
        %1125 = vmatpush1.xpose.msra.mxu0 0.0
        %1126 = vmatprep.subr.mxu0 0.0
        %1127 = vmatpush1.xpose.msra.mxu0 0.0
        %1128 = vmatprep.subr.mxu0 0.0
        %1129 = vmatpush1.xpose.msra.mxu0 0.0
        %1130 = vmatprep.subr.mxu0 0.0
        %1131 = vmatpush1.xpose.msra.mxu0 0.0
        %1132 = vmatprep.subr.mxu0 0.0
        %1133 = vmatpush1.xpose.msra.mxu0 0.0
        %1134 = vmatprep.subr.mxu0 0.0
        %1135 = vmatpush1.xpose.msra.mxu0 0.0
        %1136 = vmatprep.subr.mxu0 0.0
        %1137 = vmatpush1.xpose.msra.mxu0 0.0
        %1138 = vmatprep.subr.mxu0 0.0
        %1139 = vmatpush1.xpose.msra.mxu0 0.0
        %1140 = vmatprep.subr.mxu0 0.0
        %1141 = vmatpush1.xpose.msra.mxu0 0.0
        %1142 = vmatprep.subr.mxu0 0.0
        %1143 = vmatpush1.xpose.msra.mxu0 0.0
        %1144 = vmatprep.subr.mxu0 0.0
        %1145 = vmatpush1.xpose.msra.mxu0 0.0
        %1146 = vmatprep.mubr.f32.mxu0 0.0
        %1147 = vmatmul.mubr.f32.gmra.mrb[0].mxu0 %v858
        %v1148 = vpop.f32.mrb[0].mxu0
        %v1149 = vadd.f32 0.0, %v1148
        %v1150 = vpop.f32.mrb[0].mxu0
        %1151 = vdwg.mxu0
        %v1152 = vld [vmem:[#allocation11] sm:$0xff]
        %v1153 = vld [vmem:[#allocation11 + $0x8] sm:$0xff]
        %v1154 = vld [vmem:[#allocation11 + $0x10] sm:$0xff]
        %v1155 = vld [vmem:[#allocation11 + $0x18] sm:$0xff]
        %v1157 = vsel %vm557, %v552, 0
        %v1160 = vsel %vm557, %v1152, 0
        %1162 = vmatprep.subr.mxu0 0.0
        %1163 = vmatpush1.xpose.msra.mxu0 %v1160
        %1164 = vmatprep.subr.mxu0 0.0
        %1165 = vmatpush1.xpose.msra.mxu0 0.0
        %1166 = vmatprep.subr.mxu0 0.0
        %1167 = vmatpush1.xpose.msra.mxu0 0.0
        %1168 = vmatprep.subr.mxu0 0.0
        %1169 = vmatpush1.xpose.msra.mxu0 0.0
        %1170 = vmatprep.subr.mxu0 0.0
        %1171 = vmatpush1.xpose.msra.mxu0 0.0
        %1172 = vmatprep.subr.mxu0 0.0
        %1173 = vmatpush1.xpose.msra.mxu0 0.0
        %1174 = vmatprep.subr.mxu0 0.0
        %1175 = vmatpush1.xpose.msra.mxu0 0.0
        %1176 = vmatprep.subr.mxu0 0.0
        %1177 = vmatpush1.xpose.msra.mxu0 0.0
        %1178 = vmatprep.subr.mxu0 0.0
        %1179 = vmatpush1.xpose.msra.mxu0 0.0
        %1180 = vmatprep.subr.mxu0 0.0
        %1181 = vmatpush1.xpose.msra.mxu0 0.0
        %1182 = vmatprep.subr.mxu0 0.0
        %1183 = vmatpush1.xpose.msra.mxu0 0.0
        %1184 = vmatprep.subr.mxu0 0.0
        %1185 = vmatpush1.xpose.msra.mxu0 0.0
        %1186 = vmatprep.subr.mxu0 0.0
        %1187 = vmatpush1.xpose.msra.mxu0 0.0
        %1188 = vmatprep.subr.mxu0 0.0
        %1189 = vmatpush1.xpose.msra.mxu0 0.0
        %1190 = vmatprep.subr.mxu0 0.0
        %1191 = vmatpush1.xpose.msra.mxu0 0.0
        %1192 = vmatprep.subr.mxu0 0.0
        %1193 = vmatpush1.xpose.msra.mxu0 0.0
        %1194 = vmatprep.subr.mxu0 0.0
        %1195 = vmatpush1.xpose.msra.mxu0 0.0
        %1196 = vmatprep.subr.mxu0 0.0
        %1197 = vmatpush1.xpose.msra.mxu0 0.0
        %1198 = vmatprep.subr.mxu0 0.0
        %1199 = vmatpush1.xpose.msra.mxu0 0.0
        %1200 = vmatprep.subr.mxu0 0.0
        %1201 = vmatpush1.xpose.msra.mxu0 0.0
        %1202 = vmatprep.subr.mxu0 0.0
        %1203 = vmatpush1.xpose.msra.mxu0 0.0
        %1204 = vmatprep.subr.mxu0 0.0
        %1205 = vmatpush1.xpose.msra.mxu0 0.0
        %1206 = vmatprep.subr.mxu0 0.0
        %1207 = vmatpush1.xpose.msra.mxu0 0.0
        %1208 = vmatprep.subr.mxu0 0.0
        %1209 = vmatpush1.xpose.msra.mxu0 0.0
        %1210 = vmatprep.subr.mxu0 0.0
        %1211 = vmatpush1.xpose.msra.mxu0 0.0
        %1212 = vmatprep.subr.mxu0 0.0
        %1213 = vmatpush1.xpose.msra.mxu0 0.0
        %1214 = vmatprep.subr.mxu0 0.0
        %1215 = vmatpush1.xpose.msra.mxu0 0.0
        %1216 = vmatprep.subr.mxu0 0.0
        %1217 = vmatpush1.xpose.msra.mxu0 0.0
        %1218 = vmatprep.subr.mxu0 0.0
        %1219 = vmatpush1.xpose.msra.mxu0 0.0
        %1220 = vmatprep.subr.mxu0 0.0
        %1221 = vmatpush1.xpose.msra.mxu0 0.0
        %1222 = vmatprep.subr.mxu0 0.0
        %1223 = vmatpush1.xpose.msra.mxu0 0.0
        %1224 = vmatprep.subr.mxu0 0.0
        %1225 = vmatpush1.xpose.msra.mxu0 0.0
        %1226 = vmatprep.mubr.f32.mxu0 0.0
        %1227 = vmatmul.mubr.f32.gmra.mrb[0].mxu0 %v1157
        %v1228 = vpop.f32.mrb[0].mxu0
        %v1229 = vadd.f32 0.0, %v1228
        %v1230 = vpop.f32.mrb[0].mxu0
        %1231 = vdwg.mxu0
        %v1233 = vsel %vm557, %v1153, 0
        %1235 = vmatprep.subr.mxu0 0.0
        %1236 = vmatpush1.xpose.msra.mxu0 %v1233
        %1237 = vmatprep.subr.mxu0 0.0
        %1238 = vmatpush1.xpose.msra.mxu0 0.0
        %1239 = vmatprep.subr.mxu0 0.0
        %1240 = vmatpush1.xpose.msra.mxu0 0.0
        %1241 = vmatprep.subr.mxu0 0.0
        %1242 = vmatpush1.xpose.msra.mxu0 0.0
        %1243 = vmatprep.subr.mxu0 0.0
        %1244 = vmatpush1.xpose.msra.mxu0 0.0
        %1245 = vmatprep.subr.mxu0 0.0
        %1246 = vmatpush1.xpose.msra.mxu0 0.0
        %1247 = vmatprep.subr.mxu0 0.0
        %1248 = vmatpush1.xpose.msra.mxu0 0.0
        %1249 = vmatprep.subr.mxu0 0.0
        %1250 = vmatpush1.xpose.msra.mxu0 0.0
        %1251 = vmatprep.subr.mxu0 0.0
        %1252 = vmatpush1.xpose.msra.mxu0 0.0
        %1253 = vmatprep.subr.mxu0 0.0
        %1254 = vmatpush1.xpose.msra.mxu0 0.0
        %1255 = vmatprep.subr.mxu0 0.0
        %1256 = vmatpush1.xpose.msra.mxu0 0.0
        %1257 = vmatprep.subr.mxu0 0.0
        %1258 = vmatpush1.xpose.msra.mxu0 0.0
        %1259 = vmatprep.subr.mxu0 0.0
        %1260 = vmatpush1.xpose.msra.mxu0 0.0
        %1261 = vmatprep.subr.mxu0 0.0
        %1262 = vmatpush1.xpose.msra.mxu0 0.0
        %1263 = vmatprep.subr.mxu0 0.0
        %1264 = vmatpush1.xpose.msra.mxu0 0.0
        %1265 = vmatprep.subr.mxu0 0.0
        %1266 = vmatpush1.xpose.msra.mxu0 0.0
        %1267 = vmatprep.subr.mxu0 0.0
        %1268 = vmatpush1.xpose.msra.mxu0 0.0
        %1269 = vmatprep.subr.mxu0 0.0
        %1270 = vmatpush1.xpose.msra.mxu0 0.0
        %1271 = vmatprep.subr.mxu0 0.0
        %1272 = vmatpush1.xpose.msra.mxu0 0.0
        %1273 = vmatprep.subr.mxu0 0.0
        %1274 = vmatpush1.xpose.msra.mxu0 0.0
        %1275 = vmatprep.subr.mxu0 0.0
        %1276 = vmatpush1.xpose.msra.mxu0 0.0
        %1277 = vmatprep.subr.mxu0 0.0
        %1278 = vmatpush1.xpose.msra.mxu0 0.0
        %1279 = vmatprep.subr.mxu0 0.0
        %1280 = vmatpush1.xpose.msra.mxu0 0.0
        %1281 = vmatprep.subr.mxu0 0.0
        %1282 = vmatpush1.xpose.msra.mxu0 0.0
        %1283 = vmatprep.subr.mxu0 0.0
        %1284 = vmatpush1.xpose.msra.mxu0 0.0
        %1285 = vmatprep.subr.mxu0 0.0
        %1286 = vmatpush1.xpose.msra.mxu0 0.0
        %1287 = vmatprep.subr.mxu0 0.0
        %1288 = vmatpush1.xpose.msra.mxu0 0.0
        %1289 = vmatprep.subr.mxu0 0.0
        %1290 = vmatpush1.xpose.msra.mxu0 0.0
        %1291 = vmatprep.subr.mxu0 0.0
        %1292 = vmatpush1.xpose.msra.mxu0 0.0
        %1293 = vmatprep.subr.mxu0 0.0
        %1294 = vmatpush1.xpose.msra.mxu0 0.0
        %1295 = vmatprep.subr.mxu0 0.0
        %1296 = vmatpush1.xpose.msra.mxu0 0.0
        %1297 = vmatprep.subr.mxu0 0.0
        %1298 = vmatpush1.xpose.msra.mxu0 0.0
        %1299 = vmatprep.mubr.f32.mxu0 0.0
        %1300 = vmatmul.mubr.f32.gmra.mrb[0].mxu0 %v1157
        %v1301 = vpop.f32.mrb[0].mxu0
        %v1302 = vadd.f32 0.0, %v1301
        %v1303 = vpop.f32.mrb[0].mxu0
        %1304 = vdwg.mxu0
        %v1306 = vsel %vm557, %v1154, 0
        %1308 = vmatprep.subr.mxu0 0.0
        %1309 = vmatpush1.xpose.msra.mxu0 %v1306
        %1310 = vmatprep.subr.mxu0 0.0
        %1311 = vmatpush1.xpose.msra.mxu0 0.0
        %1312 = vmatprep.subr.mxu0 0.0
        %1313 = vmatpush1.xpose.msra.mxu0 0.0
        %1314 = vmatprep.subr.mxu0 0.0
        %1315 = vmatpush1.xpose.msra.mxu0 0.0
        %1316 = vmatprep.subr.mxu0 0.0
        %1317 = vmatpush1.xpose.msra.mxu0 0.0
        %1318 = vmatprep.subr.mxu0 0.0
        %1319 = vmatpush1.xpose.msra.mxu0 0.0
        %1320 = vmatprep.subr.mxu0 0.0
        %1321 = vmatpush1.xpose.msra.mxu0 0.0
        %1322 = vmatprep.subr.mxu0 0.0
        %1323 = vmatpush1.xpose.msra.mxu0 0.0
        %1324 = vmatprep.subr.mxu0 0.0
        %1325 = vmatpush1.xpose.msra.mxu0 0.0
        %1326 = vmatprep.subr.mxu0 0.0
        %1327 = vmatpush1.xpose.msra.mxu0 0.0
        %1328 = vmatprep.subr.mxu0 0.0
        %1329 = vmatpush1.xpose.msra.mxu0 0.0
        %1330 = vmatprep.subr.mxu0 0.0
        %1331 = vmatpush1.xpose.msra.mxu0 0.0
        %1332 = vmatprep.subr.mxu0 0.0
        %1333 = vmatpush1.xpose.msra.mxu0 0.0
        %1334 = vmatprep.subr.mxu0 0.0
        %1335 = vmatpush1.xpose.msra.mxu0 0.0
        %1336 = vmatprep.subr.mxu0 0.0
        %1337 = vmatpush1.xpose.msra.mxu0 0.0
        %1338 = vmatprep.subr.mxu0 0.0
        %1339 = vmatpush1.xpose.msra.mxu0 0.0
        %1340 = vmatprep.subr.mxu0 0.0
        %1341 = vmatpush1.xpose.msra.mxu0 0.0
        %1342 = vmatprep.subr.mxu0 0.0
        %1343 = vmatpush1.xpose.msra.mxu0 0.0
        %1344 = vmatprep.subr.mxu0 0.0
        %1345 = vmatpush1.xpose.msra.mxu0 0.0
        %1346 = vmatprep.subr.mxu0 0.0
        %1347 = vmatpush1.xpose.msra.mxu0 0.0
        %1348 = vmatprep.subr.mxu0 0.0
        %1349 = vmatpush1.xpose.msra.mxu0 0.0
        %1350 = vmatprep.subr.mxu0 0.0
        %1351 = vmatpush1.xpose.msra.mxu0 0.0
        %1352 = vmatprep.subr.mxu0 0.0
        %1353 = vmatpush1.xpose.msra.mxu0 0.0
        %1354 = vmatprep.subr.mxu0 0.0
        %1355 = vmatpush1.xpose.msra.mxu0 0.0
        %1356 = vmatprep.subr.mxu0 0.0
        %1357 = vmatpush1.xpose.msra.mxu0 0.0
        %1358 = vmatprep.subr.mxu0 0.0
        %1359 = vmatpush1.xpose.msra.mxu0 0.0
        %1360 = vmatprep.subr.mxu0 0.0
        %1361 = vmatpush1.xpose.msra.mxu0 0.0
        %1362 = vmatprep.subr.mxu0 0.0
        %1363 = vmatpush1.xpose.msra.mxu0 0.0
        %1364 = vmatprep.subr.mxu0 0.0
        %1365 = vmatpush1.xpose.msra.mxu0 0.0
        %1366 = vmatprep.subr.mxu0 0.0
        %1367 = vmatpush1.xpose.msra.mxu0 0.0
        %1368 = vmatprep.subr.mxu0 0.0
        %1369 = vmatpush1.xpose.msra.mxu0 0.0
        %1370 = vmatprep.subr.mxu0 0.0
        %1371 = vmatpush1.xpose.msra.mxu0 0.0
        %1372 = vmatprep.mubr.f32.mxu0 0.0
        %1373 = vmatmul.mubr.f32.gmra.mrb[0].mxu0 %v1157
        %v1374 = vpop.f32.mrb[0].mxu0
        %v1375 = vadd.f32 0.0, %v1374
        %v1376 = vpop.f32.mrb[0].mxu0
        %1377 = vdwg.mxu0
        %v1379 = vsel %vm557, %v1155, 0
        %1381 = vmatprep.subr.mxu0 0.0
        %1382 = vmatpush1.xpose.msra.mxu0 %v1379
        %1383 = vmatprep.subr.mxu0 0.0
        %1384 = vmatpush1.xpose.msra.mxu0 0.0
        %1385 = vmatprep.subr.mxu0 0.0
        %1386 = vmatpush1.xpose.msra.mxu0 0.0
        %1387 = vmatprep.subr.mxu0 0.0
        %1388 = vmatpush1.xpose.msra.mxu0 0.0
        %1389 = vmatprep.subr.mxu0 0.0
        %1390 = vmatpush1.xpose.msra.mxu0 0.0
        %1391 = vmatprep.subr.mxu0 0.0
        %1392 = vmatpush1.xpose.msra.mxu0 0.0
        %1393 = vmatprep.subr.mxu0 0.0
        %1394 = vmatpush1.xpose.msra.mxu0 0.0
        %1395 = vmatprep.subr.mxu0 0.0
        %1396 = vmatpush1.xpose.msra.mxu0 0.0
        %1397 = vmatprep.subr.mxu0 0.0
        %1398 = vmatpush1.xpose.msra.mxu0 0.0
        %1399 = vmatprep.subr.mxu0 0.0
        %1400 = vmatpush1.xpose.msra.mxu0 0.0
        %1401 = vmatprep.subr.mxu0 0.0
        %1402 = vmatpush1.xpose.msra.mxu0 0.0
        %1403 = vmatprep.subr.mxu0 0.0
        %1404 = vmatpush1.xpose.msra.mxu0 0.0
        %1405 = vmatprep.subr.mxu0 0.0
        %1406 = vmatpush1.xpose.msra.mxu0 0.0
        %1407 = vmatprep.subr.mxu0 0.0
        %1408 = vmatpush1.xpose.msra.mxu0 0.0
        %1409 = vmatprep.subr.mxu0 0.0
        %1410 = vmatpush1.xpose.msra.mxu0 0.0
        %1411 = vmatprep.subr.mxu0 0.0
        %1412 = vmatpush1.xpose.msra.mxu0 0.0
        %1413 = vmatprep.subr.mxu0 0.0
        %1414 = vmatpush1.xpose.msra.mxu0 0.0
        %1415 = vmatprep.subr.mxu0 0.0
        %1416 = vmatpush1.xpose.msra.mxu0 0.0
        %1417 = vmatprep.subr.mxu0 0.0
        %1418 = vmatpush1.xpose.msra.mxu0 0.0
        %1419 = vmatprep.subr.mxu0 0.0
        %1420 = vmatpush1.xpose.msra.mxu0 0.0
        %1421 = vmatprep.subr.mxu0 0.0
        %1422 = vmatpush1.xpose.msra.mxu0 0.0
        %1423 = vmatprep.subr.mxu0 0.0
        %1424 = vmatpush1.xpose.msra.mxu0 0.0
        %1425 = vmatprep.subr.mxu0 0.0
        %1426 = vmatpush1.xpose.msra.mxu0 0.0
        %1427 = vmatprep.subr.mxu0 0.0
        %1428 = vmatpush1.xpose.msra.mxu0 0.0
        %1429 = vmatprep.subr.mxu0 0.0
        %1430 = vmatpush1.xpose.msra.mxu0 0.0
        %1431 = vmatprep.subr.mxu0 0.0
        %1432 = vmatpush1.xpose.msra.mxu0 0.0
        %1433 = vmatprep.subr.mxu0 0.0
        %1434 = vmatpush1.xpose.msra.mxu0 0.0
        %1435 = vmatprep.subr.mxu0 0.0
        %1436 = vmatpush1.xpose.msra.mxu0 0.0
        %1437 = vmatprep.subr.mxu0 0.0
        %1438 = vmatpush1.xpose.msra.mxu0 0.0
        %1439 = vmatprep.subr.mxu0 0.0
        %1440 = vmatpush1.xpose.msra.mxu0 0.0
        %1441 = vmatprep.subr.mxu0 0.0
        %1442 = vmatpush1.xpose.msra.mxu0 0.0
        %1443 = vmatprep.subr.mxu0 0.0
        %1444 = vmatpush1.xpose.msra.mxu0 0.0
        %1445 = vmatprep.mubr.f32.mxu0 0.0
        %1446 = vmatmul.mubr.f32.gmra.mrb[0].mxu0 %v1157
        %v1447 = vpop.f32.mrb[0].mxu0
        %v1448 = vadd.f32 0.0, %v1447
        %v1449 = vpop.f32.mrb[0].mxu0
        %1450 = vdwg.mxu0
        %vm1451 = vcmask 64512
        %v1453 = vsel %vm1451, %v631, 0
        %v1456 = vsel %vm1451, %v930, 0
        %1458 = vmatprep.subr.mxu0 0.0
        %1459 = vmatpush1.xpose.msra.mxu0 %v1456
        %1460 = vmatprep.subr.mxu0 0.0
        %1461 = vmatpush1.xpose.msra.mxu0 0.0
        %1462 = vmatprep.subr.mxu0 0.0
        %1463 = vmatpush1.xpose.msra.mxu0 0.0
        %1464 = vmatprep.subr.mxu0 0.0
        %1465 = vmatpush1.xpose.msra.mxu0 0.0
        %1466 = vmatprep.subr.mxu0 0.0
        %1467 = vmatpush1.xpose.msra.mxu0 0.0
        %1468 = vmatprep.subr.mxu0 0.0
        %1469 = vmatpush1.xpose.msra.mxu0 0.0
        %1470 = vmatprep.subr.mxu0 0.0
        %1471 = vmatpush1.xpose.msra.mxu0 0.0
        %1472 = vmatprep.subr.mxu0 0.0
        %1473 = vmatpush1.xpose.msra.mxu0 0.0
        %1474 = vmatprep.subr.mxu0 0.0
        %1475 = vmatpush1.xpose.msra.mxu0 0.0
        %1476 = vmatprep.subr.mxu0 0.0
        %1477 = vmatpush1.xpose.msra.mxu0 0.0
        %1478 = vmatprep.subr.mxu0 0.0
        %1479 = vmatpush1.xpose.msra.mxu0 0.0
        %1480 = vmatprep.subr.mxu0 0.0
        %1481 = vmatpush1.xpose.msra.mxu0 0.0
        %1482 = vmatprep.subr.mxu0 0.0
        %1483 = vmatpush1.xpose.msra.mxu0 0.0
        %1484 = vmatprep.subr.mxu0 0.0
        %1485 = vmatpush1.xpose.msra.mxu0 0.0
        %1486 = vmatprep.subr.mxu0 0.0
        %1487 = vmatpush1.xpose.msra.mxu0 0.0
        %1488 = vmatprep.subr.mxu0 0.0
        %1489 = vmatpush1.xpose.msra.mxu0 0.0
        %1490 = vmatprep.subr.mxu0 0.0
        %1491 = vmatpush1.xpose.msra.mxu0 0.0
        %1492 = vmatprep.subr.mxu0 0.0
        %1493 = vmatpush1.xpose.msra.mxu0 0.0
        %1494 = vmatprep.subr.mxu0 0.0
        %1495 = vmatpush1.xpose.msra.mxu0 0.0
        %1496 = vmatprep.subr.mxu0 0.0
        %1497 = vmatpush1.xpose.msra.mxu0 0.0
        %1498 = vmatprep.subr.mxu0 0.0
        %1499 = vmatpush1.xpose.msra.mxu0 0.0
        %1500 = vmatprep.subr.mxu0 0.0
        %1501 = vmatpush1.xpose.msra.mxu0 0.0
        %1502 = vmatprep.subr.mxu0 0.0
        %1503 = vmatpush1.xpose.msra.mxu0 0.0
        %1504 = vmatprep.subr.mxu0 0.0
        %1505 = vmatpush1.xpose.msra.mxu0 0.0
        %1506 = vmatprep.subr.mxu0 0.0
        %1507 = vmatpush1.xpose.msra.mxu0 0.0
        %1508 = vmatprep.subr.mxu0 0.0
        %1509 = vmatpush1.xpose.msra.mxu0 0.0
        %1510 = vmatprep.subr.mxu0 0.0
        %1511 = vmatpush1.xpose.msra.mxu0 0.0
        %1512 = vmatprep.subr.mxu0 0.0
        %1513 = vmatpush1.xpose.msra.mxu0 0.0
        %1514 = vmatprep.subr.mxu0 0.0
        %1515 = vmatpush1.xpose.msra.mxu0 0.0
        %1516 = vmatprep.subr.mxu0 0.0
        %1517 = vmatpush1.xpose.msra.mxu0 0.0
        %1518 = vmatprep.subr.mxu0 0.0
        %1519 = vmatpush1.xpose.msra.mxu0 0.0
        %1520 = vmatprep.subr.mxu0 0.0
        %1521 = vmatpush1.xpose.msra.mxu0 0.0
        %1522 = vmatprep.mubr.f32.mxu0 0.0
        %1523 = vmatmul.mubr.f32.gmra.mrb[0].mxu0 %v1453
        %v1524 = vpop.f32.mrb[0].mxu0
        %v1525 = vadd.f32 0.0, %v1524
        %v1526 = vpop.f32.mrb[0].mxu0
        %1527 = vdwg.mxu0
        %v1529 = vsel %vm1451, %v704, 0
        %v1532 = vsel %vm1451, %v1003, 0
        %1534 = vmatprep.subr.mxu0 0.0
        %1535 = vmatpush1.xpose.msra.mxu0 %v1532
        %1536 = vmatprep.subr.mxu0 0.0
        %1537 = vmatpush1.xpose.msra.mxu0 0.0
        %1538 = vmatprep.subr.mxu0 0.0
        %1539 = vmatpush1.xpose.msra.mxu0 0.0
        %1540 = vmatprep.subr.mxu0 0.0
        %1541 = vmatpush1.xpose.msra.mxu0 0.0
        %1542 = vmatprep.subr.mxu0 0.0
        %1543 = vmatpush1.xpose.msra.mxu0 0.0
        %1544 = vmatprep.subr.mxu0 0.0
        %1545 = vmatpush1.xpose.msra.mxu0 0.0
        %1546 = vmatprep.subr.mxu0 0.0
        %1547 = vmatpush1.xpose.msra.mxu0 0.0
        %1548 = vmatprep.subr.mxu0 0.0
        %1549 = vmatpush1.xpose.msra.mxu0 0.0
        %1550 = vmatprep.subr.mxu0 0.0
        %1551 = vmatpush1.xpose.msra.mxu0 0.0
        %1552 = vmatprep.subr.mxu0 0.0
        %1553 = vmatpush1.xpose.msra.mxu0 0.0
        %1554 = vmatprep.subr.mxu0 0.0
        %1555 = vmatpush1.xpose.msra.mxu0 0.0
        %1556 = vmatprep.subr.mxu0 0.0
        %1557 = vmatpush1.xpose.msra.mxu0 0.0
        %1558 = vmatprep.subr.mxu0 0.0
        %1559 = vmatpush1.xpose.msra.mxu0 0.0
        %1560 = vmatprep.subr.mxu0 0.0
        %1561 = vmatpush1.xpose.msra.mxu0 0.0
        %1562 = vmatprep.subr.mxu0 0.0
        %1563 = vmatpush1.xpose.msra.mxu0 0.0
        %1564 = vmatprep.subr.mxu0 0.0
        %1565 = vmatpush1.xpose.msra.mxu0 0.0
        %1566 = vmatprep.subr.mxu0 0.0
        %1567 = vmatpush1.xpose.msra.mxu0 0.0
        %1568 = vmatprep.subr.mxu0 0.0
        %1569 = vmatpush1.xpose.msra.mxu0 0.0
        %1570 = vmatprep.subr.mxu0 0.0
        %1571 = vmatpush1.xpose.msra.mxu0 0.0
        %1572 = vmatprep.subr.mxu0 0.0
        %1573 = vmatpush1.xpose.msra.mxu0 0.0
        %1574 = vmatprep.subr.mxu0 0.0
        %1575 = vmatpush1.xpose.msra.mxu0 0.0
        %1576 = vmatprep.subr.mxu0 0.0
        %1577 = vmatpush1.xpose.msra.mxu0 0.0
        %1578 = vmatprep.subr.mxu0 0.0
        %1579 = vmatpush1.xpose.msra.mxu0 0.0
        %1580 = vmatprep.subr.mxu0 0.0
        %1581 = vmatpush1.xpose.msra.mxu0 0.0
        %1582 = vmatprep.subr.mxu0 0.0
        %1583 = vmatpush1.xpose.msra.mxu0 0.0
        %1584 = vmatprep.subr.mxu0 0.0
        %1585 = vmatpush1.xpose.msra.mxu0 0.0
        %1586 = vmatprep.subr.mxu0 0.0
        %1587 = vmatpush1.xpose.msra.mxu0 0.0
        %1588 = vmatprep.subr.mxu0 0.0
        %1589 = vmatpush1.xpose.msra.mxu0 0.0
        %1590 = vmatprep.subr.mxu0 0.0
        %1591 = vmatpush1.xpose.msra.mxu0 0.0
        %1592 = vmatprep.subr.mxu0 0.0
        %1593 = vmatpush1.xpose.msra.mxu0 0.0
        %1594 = vmatprep.subr.mxu0 0.0
        %1595 = vmatpush1.xpose.msra.mxu0 0.0
        %1596 = vmatprep.subr.mxu0 0.0
        %1597 = vmatpush1.xpose.msra.mxu0 0.0
        %1598 = vmatprep.mubr.f32.mxu0 0.0
        %1599 = vmatmul.mubr.f32.gmra.mrb[0].mxu0 %v1529
        %v1600 = vpop.f32.mrb[0].mxu0
        %v1601 = vadd.f32 0.0, %v1600
        %v1602 = vpop.f32.mrb[0].mxu0
        %1603 = vdwg.mxu0
        %v1605 = vsel %vm1451, %v777, 0
        %v1608 = vsel %vm1451, %v1076, 0
        %1610 = vmatprep.subr.mxu0 0.0
        %1611 = vmatpush1.xpose.msra.mxu0 %v1608
        %1612 = vmatprep.subr.mxu0 0.0
        %1613 = vmatpush1.xpose.msra.mxu0 0.0
        %1614 = vmatprep.subr.mxu0 0.0
        %1615 = vmatpush1.xpose.msra.mxu0 0.0
        %1616 = vmatprep.subr.mxu0 0.0
        %1617 = vmatpush1.xpose.msra.mxu0 0.0
        %1618 = vmatprep.subr.mxu0 0.0
        %1619 = vmatpush1.xpose.msra.mxu0 0.0
        %1620 = vmatprep.subr.mxu0 0.0
        %1621 = vmatpush1.xpose.msra.mxu0 0.0
        %1622 = vmatprep.subr.mxu0 0.0
        %1623 = vmatpush1.xpose.msra.mxu0 0.0
        %1624 = vmatprep.subr.mxu0 0.0
        %1625 = vmatpush1.xpose.msra.mxu0 0.0
        %1626 = vmatprep.subr.mxu0 0.0
        %1627 = vmatpush1.xpose.msra.mxu0 0.0
        %1628 = vmatprep.subr.mxu0 0.0
        %1629 = vmatpush1.xpose.msra.mxu0 0.0
        %1630 = vmatprep.subr.mxu0 0.0
        %1631 = vmatpush1.xpose.msra.mxu0 0.0
        %1632 = vmatprep.subr.mxu0 0.0
        %1633 = vmatpush1.xpose.msra.mxu0 0.0
        %1634 = vmatprep.subr.mxu0 0.0
        %1635 = vmatpush1.xpose.msra.mxu0 0.0
        %1636 = vmatprep.subr.mxu0 0.0
        %1637 = vmatpush1.xpose.msra.mxu0 0.0
        %1638 = vmatprep.subr.mxu0 0.0
        %1639 = vmatpush1.xpose.msra.mxu0 0.0
        %1640 = vmatprep.subr.mxu0 0.0
        %1641 = vmatpush1.xpose.msra.mxu0 0.0
        %1642 = vmatprep.subr.mxu0 0.0
        %1643 = vmatpush1.xpose.msra.mxu0 0.0
        %1644 = vmatprep.subr.mxu0 0.0
        %1645 = vmatpush1.xpose.msra.mxu0 0.0
        %1646 = vmatprep.subr.mxu0 0.0
        %1647 = vmatpush1.xpose.msra.mxu0 0.0
        %1648 = vmatprep.subr.mxu0 0.0
        %1649 = vmatpush1.xpose.msra.mxu0 0.0
        %1650 = vmatprep.subr.mxu0 0.0
        %1651 = vmatpush1.xpose.msra.mxu0 0.0
        %1652 = vmatprep.subr.mxu0 0.0
        %1653 = vmatpush1.xpose.msra.mxu0 0.0
        %1654 = vmatprep.subr.mxu0 0.0
        %1655 = vmatpush1.xpose.msra.mxu0 0.0
        %1656 = vmatprep.subr.mxu0 0.0
        %1657 = vmatpush1.xpose.msra.mxu0 0.0
        %1658 = vmatprep.subr.mxu0 0.0
        %1659 = vmatpush1.xpose.msra.mxu0 0.0
        %1660 = vmatprep.subr.mxu0 0.0
        %1661 = vmatpush1.xpose.msra.mxu0 0.0
        %1662 = vmatprep.subr.mxu0 0.0
        %1663 = vmatpush1.xpose.msra.mxu0 0.0
        %1664 = vmatprep.subr.mxu0 0.0
        %1665 = vmatpush1.xpose.msra.mxu0 0.0
        %1666 = vmatprep.subr.mxu0 0.0
        %1667 = vmatpush1.xpose.msra.mxu0 0.0
        %1668 = vmatprep.subr.mxu0 0.0
        %1669 = vmatpush1.xpose.msra.mxu0 0.0
        %1670 = vmatprep.subr.mxu0 0.0
        %1671 = vmatpush1.xpose.msra.mxu0 0.0
        %1672 = vmatprep.subr.mxu0 0.0
        %1673 = vmatpush1.xpose.msra.mxu0 0.0
        %1674 = vmatprep.mubr.f32.mxu0 0.0
        %1675 = vmatmul.mubr.f32.gmra.mrb[0].mxu0 %v1605
        %v1676 = vpop.f32.mrb[0].mxu0
        %v1677 = vadd.f32 0.0, %v1676
        %v1678 = vpop.f32.mrb[0].mxu0
        %1679 = vdwg.mxu0
        %v1681 = vsel %vm1451, %v850, 0
        %v1684 = vsel %vm1451, %v1149, 0
        %1686 = vmatprep.subr.mxu0 0.0
        %1687 = vmatpush1.xpose.msra.mxu0 %v1684
        %1688 = vmatprep.subr.mxu0 0.0
        %1689 = vmatpush1.xpose.msra.mxu0 0.0
        %1690 = vmatprep.subr.mxu0 0.0
        %1691 = vmatpush1.xpose.msra.mxu0 0.0
        %1692 = vmatprep.subr.mxu0 0.0
        %1693 = vmatpush1.xpose.msra.mxu0 0.0
        %1694 = vmatprep.subr.mxu0 0.0
        %1695 = vmatpush1.xpose.msra.mxu0 0.0
        %1696 = vmatprep.subr.mxu0 0.0
        %1697 = vmatpush1.xpose.msra.mxu0 0.0
        %1698 = vmatprep.subr.mxu0 0.0
        %1699 = vmatpush1.xpose.msra.mxu0 0.0
        %1700 = vmatprep.subr.mxu0 0.0
        %1701 = vmatpush1.xpose.msra.mxu0 0.0
        %1702 = vmatprep.subr.mxu0 0.0
        %1703 = vmatpush1.xpose.msra.mxu0 0.0
        %1704 = vmatprep.subr.mxu0 0.0
        %1705 = vmatpush1.xpose.msra.mxu0 0.0
        %1706 = vmatprep.subr.mxu0 0.0
        %1707 = vmatpush1.xpose.msra.mxu0 0.0
        %1708 = vmatprep.subr.mxu0 0.0
        %1709 = vmatpush1.xpose.msra.mxu0 0.0
        %1710 = vmatprep.subr.mxu0 0.0
        %1711 = vmatpush1.xpose.msra.mxu0 0.0
        %1712 = vmatprep.subr.mxu0 0.0
        %1713 = vmatpush1.xpose.msra.mxu0 0.0
        %1714 = vmatprep.subr.mxu0 0.0
        %1715 = vmatpush1.xpose.msra.mxu0 0.0
        %1716 = vmatprep.subr.mxu0 0.0
        %1717 = vmatpush1.xpose.msra.mxu0 0.0
        %1718 = vmatprep.subr.mxu0 0.0
        %1719 = vmatpush1.xpose.msra.mxu0 0.0
        %1720 = vmatprep.subr.mxu0 0.0
        %1721 = vmatpush1.xpose.msra.mxu0 0.0
        %1722 = vmatprep.subr.mxu0 0.0
        %1723 = vmatpush1.xpose.msra.mxu0 0.0
        %1724 = vmatprep.subr.mxu0 0.0
        %1725 = vmatpush1.xpose.msra.mxu0 0.0
        %1726 = vmatprep.subr.mxu0 0.0
        %1727 = vmatpush1.xpose.msra.mxu0 0.0
        %1728 = vmatprep.subr.mxu0 0.0
        %1729 = vmatpush1.xpose.msra.mxu0 0.0
        %1730 = vmatprep.subr.mxu0 0.0
        %1731 = vmatpush1.xpose.msra.mxu0 0.0
        %1732 = vmatprep.subr.mxu0 0.0
        %1733 = vmatpush1.xpose.msra.mxu0 0.0
        %1734 = vmatprep.subr.mxu0 0.0
        %1735 = vmatpush1.xpose.msra.mxu0 0.0
        %1736 = vmatprep.subr.mxu0 0.0
        %1737 = vmatpush1.xpose.msra.mxu0 0.0
        %1738 = vmatprep.subr.mxu0 0.0
        %1739 = vmatpush1.xpose.msra.mxu0 0.0
        %1740 = vmatprep.subr.mxu0 0.0
        %1741 = vmatpush1.xpose.msra.mxu0 0.0
        %1742 = vmatprep.subr.mxu0 0.0
        %1743 = vmatpush1.xpose.msra.mxu0 0.0
        %1744 = vmatprep.subr.mxu0 0.0
        %1745 = vmatpush1.xpose.msra.mxu0 0.0
        %1746 = vmatprep.subr.mxu0 0.0
        %1747 = vmatpush1.xpose.msra.mxu0 0.0
        %1748 = vmatprep.subr.mxu0 0.0
        %1749 = vmatpush1.xpose.msra.mxu0 0.0
        %1750 = vmatprep.mubr.f32.mxu0 0.0
        %1751 = vmatmul.mubr.f32.gmra.mrb[0].mxu0 %v1681
        %v1752 = vpop.f32.mrb[0].mxu0
        %v1753 = vadd.f32 0.0, %v1752
        %v1754 = vpop.f32.mrb[0].mxu0
        %1755 = vdwg.mxu0
        %v1756 = vld [vmem:[%s4] sm:$0xff]
        %v1757 = vmul.f32 %v1525, %v1756
        %v1758 = vmul.f32 %v1601, %v1756
        %v1759 = vmul.f32 %v1677, %v1756
        %v1760 = vmul.f32 %v1753, %v1756
        %v1761 = vsel %vm1451, %v1757, 0.0
        %1762 = vadd.xlane.f32.xlu0 %v1761
        %v1763 = vpop.xlane.xlu0 %1762
        %v1764 = vsel %vm1451, %v1758, 0.0
        %1765 = vadd.xlane.f32.xlu0 %v1764
        %v1766 = vpop.xlane.xlu0 %1765
        %v1767 = vsel %vm1451, %v1759, 0.0
        %1768 = vadd.xlane.f32.xlu0 %v1767
        %v1769 = vpop.xlane.xlu0 %1768
        %v1770 = vsel %vm1451, %v1760, 0.0
        %1771 = vadd.xlane.f32.xlu0 %v1770
        %v1772 = vpop.xlane.xlu0 %1771
        %vm1773 = vcmp.gt.f32.partialorder %v1756, 0.0
        %v1774 = vsel %vm1773, 1, 0
        %vm1775 = vcmp.eq.s32.totalorder %v1774, 1
        %v1776 = vsel %vm1775, %v1525, -1e+30
        %v1777 = vsel %vm1775, %v1601, -1e+30
        %v1778 = vsel %vm1775, %v1677, -1e+30
        %v1779 = vsel %vm1775, %v1753, -1e+30
        %v1780 = vsel %vm1451, %v1776, -inf
        %1781 = vmax.xlane.f32.xlu0 %v1780
        %v1782 = vpop.xlane.xlu0 %1781
        %v1783 = vsel %vm1451, %v1777, -inf
        %1784 = vmax.xlane.f32.xlu0 %v1783
        %v1785 = vpop.xlane.xlu0 %1784
        %v1786 = vsel %vm1451, %v1778, -inf
        %1787 = vmax.xlane.f32.xlu0 %v1786
        %v1788 = vpop.xlane.xlu0 %1787
        %v1789 = vsel %vm1451, %v1779, -inf
        %1790 = vmax.xlane.f32.xlu0 %v1789
        %v1791 = vpop.xlane.xlu0 %1790
        %v1792 = vmul.f32 %v1763, 0.25
        %v1793 = vmul.f32 %v1766, 0.25
        %v1794 = vmul.f32 %v1769, 0.25
        %v1795 = vmul.f32 %v1772, 0.25
        %v1796 = vsub.f32 %v1782, %v1792
        %v1797 = vsub.f32 %v1785, %v1793
        %v1798 = vsub.f32 %v1788, %v1794
        %v1799 = vsub.f32 %v1791, %v1795
        %v1800 = vlaneseq
        %v1801 = vshrl.u32 %v1800, 7
        %v1802 = vlaneseq
        %v1803 = vand.u32 %v1802, 127
        %v1808 = vlaneseq
        %v1809 = vshrl.u32 %v1808, 7
        %v1810 = vsub.s32 0, %v1809
        %v1811 = vrot.slane %v1796, %v1810
        %v1812 = vlaneseq
        %v1813 = vshrl.u32 %v1812, 7
        %v1814 = vsub.s32 1, %v1813
        %v1815 = vrot.slane %v1796, %v1814
        %v1816 = vlaneseq
        %v1817 = vshrl.u32 %v1816, 7
        %v1818 = vsub.s32 2, %v1817
        %v1819 = vrot.slane %v1796, %v1818
        %v1820 = vlaneseq
        %v1821 = vshrl.u32 %v1820, 7
        %v1822 = vsub.s32 3, %v1821
        %v1823 = vrot.slane %v1796, %v1822
        %v1824 = vlaneseq
        %v1825 = vshrl.u32 %v1824, 7
        %v1826 = vsub.s32 4, %v1825
        %v1827 = vrot.slane %v1796, %v1826
        %v1828 = vlaneseq
        %v1829 = vshrl.u32 %v1828, 7
        %v1830 = vsub.s32 5, %v1829
        %v1831 = vrot.slane %v1796, %v1830
        %v1832 = vlaneseq
        %v1833 = vshrl.u32 %v1832, 7
        %v1834 = vsub.s32 6, %v1833
        %v1835 = vrot.slane %v1796, %v1834
        %v1836 = vlaneseq
        %v1837 = vshrl.u32 %v1836, 7
        %v1838 = vsub.s32 7, %v1837
        %v1839 = vrot.slane %v1796, %v1838
        %v1840 = vlaneseq
        %v1841 = vshrl.u32 %v1840, 7
        %v1842 = vsub.s32 0, %v1841
        %v1843 = vrot.slane %v1797, %v1842
        %v1844 = vlaneseq
        %v1845 = vshrl.u32 %v1844, 7
        %v1846 = vsub.s32 1, %v1845
        %v1847 = vrot.slane %v1797, %v1846
        %v1848 = vlaneseq
        %v1849 = vshrl.u32 %v1848, 7
        %v1850 = vsub.s32 2, %v1849
        %v1851 = vrot.slane %v1797, %v1850
        %v1852 = vlaneseq
        %v1853 = vshrl.u32 %v1852, 7
        %v1854 = vsub.s32 3, %v1853
        %v1855 = vrot.slane %v1797, %v1854
        %v1856 = vlaneseq
        %v1857 = vshrl.u32 %v1856, 7
        %v1858 = vsub.s32 4, %v1857
        %v1859 = vrot.slane %v1797, %v1858
        %v1860 = vlaneseq
        %v1861 = vshrl.u32 %v1860, 7
        %v1862 = vsub.s32 5, %v1861
        %v1863 = vrot.slane %v1797, %v1862
        %v1864 = vlaneseq
        %v1865 = vshrl.u32 %v1864, 7
        %v1866 = vsub.s32 6, %v1865
        %v1867 = vrot.slane %v1797, %v1866
        %v1868 = vlaneseq
        %v1869 = vshrl.u32 %v1868, 7
        %v1870 = vsub.s32 7, %v1869
        %v1871 = vrot.slane %v1797, %v1870
        %v1872 = vlaneseq
        %v1873 = vshrl.u32 %v1872, 7
        %v1874 = vsub.s32 0, %v1873
        %v1875 = vrot.slane %v1798, %v1874
        %v1876 = vlaneseq
        %v1877 = vshrl.u32 %v1876, 7
        %v1878 = vsub.s32 1, %v1877
        %v1879 = vrot.slane %v1798, %v1878
        %v1880 = vlaneseq
        %v1881 = vshrl.u32 %v1880, 7
        %v1882 = vsub.s32 2, %v1881
        %v1883 = vrot.slane %v1798, %v1882
        %v1884 = vlaneseq
        %v1885 = vshrl.u32 %v1884, 7
        %v1886 = vsub.s32 3, %v1885
        %v1887 = vrot.slane %v1798, %v1886
        %v1888 = vlaneseq
        %v1889 = vshrl.u32 %v1888, 7
        %v1890 = vsub.s32 4, %v1889
        %v1891 = vrot.slane %v1798, %v1890
        %v1892 = vlaneseq
        %v1893 = vshrl.u32 %v1892, 7
        %v1894 = vsub.s32 5, %v1893
        %v1895 = vrot.slane %v1798, %v1894
        %v1896 = vlaneseq
        %v1897 = vshrl.u32 %v1896, 7
        %v1898 = vsub.s32 6, %v1897
        %v1899 = vrot.slane %v1798, %v1898
        %v1900 = vlaneseq
        %v1901 = vshrl.u32 %v1900, 7
        %v1902 = vsub.s32 7, %v1901
        %v1903 = vrot.slane %v1798, %v1902
        %v1904 = vlaneseq
        %v1905 = vshrl.u32 %v1904, 7
        %v1906 = vsub.s32 0, %v1905
        %v1907 = vrot.slane %v1799, %v1906
        %v1908 = vlaneseq
        %v1909 = vshrl.u32 %v1908, 7
        %v1910 = vsub.s32 1, %v1909
        %v1911 = vrot.slane %v1799, %v1910
        %v1912 = vlaneseq
        %v1913 = vshrl.u32 %v1912, 7
        %v1914 = vsub.s32 2, %v1913
        %v1915 = vrot.slane %v1799, %v1914
        %v1916 = vlaneseq
        %v1917 = vshrl.u32 %v1916, 7
        %v1918 = vsub.s32 3, %v1917
        %v1919 = vrot.slane %v1799, %v1918
        %v1920 = vlaneseq
        %v1921 = vshrl.u32 %v1920, 7
        %v1922 = vsub.s32 4, %v1921
        %v1923 = vrot.slane %v1799, %v1922
        %v1924 = vlaneseq
        %v1925 = vshrl.u32 %v1924, 7
        %v1926 = vsub.s32 5, %v1925
        %v1927 = vrot.slane %v1799, %v1926
        %v1928 = vlaneseq
        %v1929 = vshrl.u32 %v1928, 7
        %v1930 = vsub.s32 6, %v1929
        %v1931 = vrot.slane %v1799, %v1930
        %v1932 = vlaneseq
        %v1933 = vshrl.u32 %v1932, 7
        %v1934 = vsub.s32 7, %v1933
        %v1935 = vrot.slane %v1799, %v1934
        %vm1968 = vcmp.gt.f32.partialorder %v1796, %v1811
        %vm1969 = vcmp.gt.f32.partialorder %v1796, %v1815
        %vm1970 = vcmp.gt.f32.partialorder %v1796, %v1819
        %vm1971 = vcmp.gt.f32.partialorder %v1796, %v1823
        %vm1972 = vcmp.gt.f32.partialorder %v1796, %v1827
        %vm1973 = vcmp.gt.f32.partialorder %v1796, %v1831
        %vm1974 = vcmp.gt.f32.partialorder %v1796, %v1835
        %vm1975 = vcmp.gt.f32.partialorder %v1796, %v1839
        %vm1976 = vcmp.gt.f32.partialorder %v1797, %v1843
        %vm1977 = vcmp.gt.f32.partialorder %v1797, %v1847
        %vm1978 = vcmp.gt.f32.partialorder %v1797, %v1851
        %vm1979 = vcmp.gt.f32.partialorder %v1797, %v1855
        %vm1980 = vcmp.gt.f32.partialorder %v1797, %v1859
        %vm1981 = vcmp.gt.f32.partialorder %v1797, %v1863
        %vm1982 = vcmp.gt.f32.partialorder %v1797, %v1867
        %vm1983 = vcmp.gt.f32.partialorder %v1797, %v1871
        %vm1984 = vcmp.gt.f32.partialorder %v1798, %v1875
        %vm1985 = vcmp.gt.f32.partialorder %v1798, %v1879
        %vm1986 = vcmp.gt.f32.partialorder %v1798, %v1883
        %vm1987 = vcmp.gt.f32.partialorder %v1798, %v1887
        %vm1988 = vcmp.gt.f32.partialorder %v1798, %v1891
        %vm1989 = vcmp.gt.f32.partialorder %v1798, %v1895
        %vm1990 = vcmp.gt.f32.partialorder %v1798, %v1899
        %vm1991 = vcmp.gt.f32.partialorder %v1798, %v1903
        %vm1992 = vcmp.gt.f32.partialorder %v1799, %v1907
        %vm1993 = vcmp.gt.f32.partialorder %v1799, %v1911
        %vm1994 = vcmp.gt.f32.partialorder %v1799, %v1915
        %vm1995 = vcmp.gt.f32.partialorder %v1799, %v1919
        %vm1996 = vcmp.gt.f32.partialorder %v1799, %v1923
        %vm1997 = vcmp.gt.f32.partialorder %v1799, %v1927
        %vm1998 = vcmp.gt.f32.partialorder %v1799, %v1931
        %vm1999 = vcmp.gt.f32.partialorder %v1799, %v1935
        %vm2000 = vcmp.eq.f32.partialorder %v1796, %v1811
        %vm2001 = vcmp.eq.f32.partialorder %v1796, %v1815
        %vm2002 = vcmp.eq.f32.partialorder %v1796, %v1819
        %vm2003 = vcmp.eq.f32.partialorder %v1796, %v1823
        %vm2004 = vcmp.eq.f32.partialorder %v1796, %v1827
        %vm2005 = vcmp.eq.f32.partialorder %v1796, %v1831
        %vm2006 = vcmp.eq.f32.partialorder %v1796, %v1835
        %vm2007 = vcmp.eq.f32.partialorder %v1796, %v1839
        %vm2008 = vcmp.eq.f32.partialorder %v1797, %v1843
        %vm2009 = vcmp.eq.f32.partialorder %v1797, %v1847
        %vm2010 = vcmp.eq.f32.partialorder %v1797, %v1851
        %vm2011 = vcmp.eq.f32.partialorder %v1797, %v1855
        %vm2012 = vcmp.eq.f32.partialorder %v1797, %v1859
        %vm2013 = vcmp.eq.f32.partialorder %v1797, %v1863
        %vm2014 = vcmp.eq.f32.partialorder %v1797, %v1867
        %vm2015 = vcmp.eq.f32.partialorder %v1797, %v1871
        %vm2016 = vcmp.eq.f32.partialorder %v1798, %v1875
        %vm2017 = vcmp.eq.f32.partialorder %v1798, %v1879
        %vm2018 = vcmp.eq.f32.partialorder %v1798, %v1883
        %vm2019 = vcmp.eq.f32.partialorder %v1798, %v1887
        %vm2020 = vcmp.eq.f32.partialorder %v1798, %v1891
        %vm2021 = vcmp.eq.f32.partialorder %v1798, %v1895
        %vm2022 = vcmp.eq.f32.partialorder %v1798, %v1899
        %vm2023 = vcmp.eq.f32.partialorder %v1798, %v1903
        %vm2024 = vcmp.eq.f32.partialorder %v1799, %v1907
        %vm2025 = vcmp.eq.f32.partialorder %v1799, %v1911
        %vm2026 = vcmp.eq.f32.partialorder %v1799, %v1915
        %vm2027 = vcmp.eq.f32.partialorder %v1799, %v1919
        %vm2028 = vcmp.eq.f32.partialorder %v1799, %v1923
        %vm2029 = vcmp.eq.f32.partialorder %v1799, %v1927
        %vm2030 = vcmp.eq.f32.partialorder %v1799, %v1931
        %vm2031 = vcmp.eq.f32.partialorder %v1799, %v1935
        %vm2032 = vcmp.lt.s32.totalorder %v1803, %v1801
        %v2033 = vsel %vm2032, 1, 0
        %vm2034 = vcmp.eq.s32.totalorder %v2033, 1
        %v2035 = vsel %vm2034, 1, 0
        %v2036 = vlaneseq
        %v2037 = vshrl.u32 %v2036, 7
        %v2038 = vsub.s32 0, %v2037
        %v2039 = vrot.slane %v2035, %v2038
        %2041 = vbcast.lane.b32.xlu0 %v2039, 256
        %v2042 = vpop.permute.xlu0 %2041
        %v2043 = vlaneseq
        %v2044 = vshrl.u32 %v2043, 7
        %v2045 = vsub.s32 1, %v2044
        %v2046 = vrot.slane %v2035, %v2045
        %2048 = vbcast.lane.b32.xlu0 %v2046, 256
        %v2049 = vpop.permute.xlu0 %2048
        %v2050 = vlaneseq
        %v2051 = vshrl.u32 %v2050, 7
        %v2052 = vsub.s32 2, %v2051
        %v2053 = vrot.slane %v2035, %v2052
        %2055 = vbcast.lane.b32.xlu0 %v2053, 256
        %v2056 = vpop.permute.xlu0 %2055
        %v2057 = vlaneseq
        %v2058 = vshrl.u32 %v2057, 7
        %v2059 = vsub.s32 3, %v2058
        %v2060 = vrot.slane %v2035, %v2059
        %2062 = vbcast.lane.b32.xlu0 %v2060, 256
        %v2063 = vpop.permute.xlu0 %2062
        %v2064 = vlaneseq
        %v2065 = vshrl.u32 %v2064, 7
        %v2066 = vsub.s32 4, %v2065
        %v2067 = vrot.slane %v2035, %v2066
        %2069 = vbcast.lane.b32.xlu0 %v2067, 256
        %v2070 = vpop.permute.xlu0 %2069
        %v2071 = vlaneseq
        %v2072 = vshrl.u32 %v2071, 7
        %v2073 = vsub.s32 5, %v2072
        %v2074 = vrot.slane %v2035, %v2073
        %2076 = vbcast.lane.b32.xlu0 %v2074, 256
        %v2077 = vpop.permute.xlu0 %2076
        %v2078 = vlaneseq
        %v2079 = vshrl.u32 %v2078, 7
        %v2080 = vsub.s32 6, %v2079
        %v2081 = vrot.slane %v2035, %v2080
        %2083 = vbcast.lane.b32.xlu0 %v2081, 256
        %v2084 = vpop.permute.xlu0 %2083
        %v2085 = vlaneseq
        %v2086 = vshrl.u32 %v2085, 7
        %v2087 = vsub.s32 7, %v2086
        %v2088 = vrot.slane %v2035, %v2087
        %2090 = vbcast.lane.b32.xlu0 %v2088, 256
        %v2091 = vpop.permute.xlu0 %2090
        %vm2092 = vcmp.ne.s32.totalorder %v2042, 0
        %vm2093 = vcmp.ne.s32.totalorder %v2049, 0
        %vm2094 = vcmp.ne.s32.totalorder %v2056, 0
        %vm2095 = vcmp.ne.s32.totalorder %v2063, 0
        %vm2096 = vcmp.ne.s32.totalorder %v2070, 0
        %vm2097 = vcmp.ne.s32.totalorder %v2077, 0
        %vm2098 = vcmp.ne.s32.totalorder %v2084, 0
        %vm2099 = vcmp.ne.s32.totalorder %v2091, 0
        %vm2100 = vmand %vm2000, %vm2092
        %vm2101 = vmand %vm2001, %vm2093
        %vm2102 = vmand %vm2002, %vm2094
        %vm2103 = vmand %vm2003, %vm2095
        %vm2104 = vmand %vm2004, %vm2096
        %vm2105 = vmand %vm2005, %vm2097
        %vm2106 = vmand %vm2006, %vm2098
        %vm2107 = vmand %vm2007, %vm2099
        %vm2108 = vmand %vm2008, %vm2092
        %vm2109 = vmand %vm2009, %vm2093
        %vm2110 = vmand %vm2010, %vm2094
        %vm2111 = vmand %vm2011, %vm2095
        %vm2112 = vmand %vm2012, %vm2096
        %vm2113 = vmand %vm2013, %vm2097
        %vm2114 = vmand %vm2014, %vm2098
        %vm2115 = vmand %vm2015, %vm2099
        %vm2116 = vmand %vm2016, %vm2092
        %vm2117 = vmand %vm2017, %vm2093
        %vm2118 = vmand %vm2018, %vm2094
        %vm2119 = vmand %vm2019, %vm2095
        %vm2120 = vmand %vm2020, %vm2096
        %vm2121 = vmand %vm2021, %vm2097
        %vm2122 = vmand %vm2022, %vm2098
        %vm2123 = vmand %vm2023, %vm2099
        %vm2124 = vmand %vm2024, %vm2092
        %vm2125 = vmand %vm2025, %vm2093
        %vm2126 = vmand %vm2026, %vm2094
        %vm2127 = vmand %vm2027, %vm2095
        %vm2128 = vmand %vm2028, %vm2096
        %vm2129 = vmand %vm2029, %vm2097
        %vm2130 = vmand %vm2030, %vm2098
        %vm2131 = vmand %vm2031, %vm2099
        %vm2132 = vmor %vm1968, %vm2100
        %vm2133 = vmor %vm1969, %vm2101
        %vm2134 = vmor %vm1970, %vm2102
        %vm2135 = vmor %vm1971, %vm2103
        %vm2136 = vmor %vm1972, %vm2104
        %vm2137 = vmor %vm1973, %vm2105
        %vm2138 = vmor %vm1974, %vm2106
        %vm2139 = vmor %vm1975, %vm2107
        %vm2140 = vmor %vm1976, %vm2108
        %vm2141 = vmor %vm1977, %vm2109
        %vm2142 = vmor %vm1978, %vm2110
        %vm2143 = vmor %vm1979, %vm2111
        %vm2144 = vmor %vm1980, %vm2112
        %vm2145 = vmor %vm1981, %vm2113
        %vm2146 = vmor %vm1982, %vm2114
        %vm2147 = vmor %vm1983, %vm2115
        %vm2148 = vmor %vm1984, %vm2116
        %vm2149 = vmor %vm1985, %vm2117
        %vm2150 = vmor %vm1986, %vm2118
        %vm2151 = vmor %vm1987, %vm2119
        %vm2152 = vmor %vm1988, %vm2120
        %vm2153 = vmor %vm1989, %vm2121
        %vm2154 = vmor %vm1990, %vm2122
        %vm2155 = vmor %vm1991, %vm2123
        %vm2156 = vmor %vm1992, %vm2124
        %vm2157 = vmor %vm1993, %vm2125
        %vm2158 = vmor %vm1994, %vm2126
        %vm2159 = vmor %vm1995, %vm2127
        %vm2160 = vmor %vm1996, %vm2128
        %vm2161 = vmor %vm1997, %vm2129
        %vm2162 = vmor %vm1998, %vm2130
        %vm2163 = vmor %vm1999, %vm2131
        %v2164 = vsel %vm2132, 1, 0
        %v2165 = vsel %vm2133, 1, 0
        %v2166 = vsel %vm2134, 1, 0
        %v2167 = vsel %vm2135, 1, 0
        %v2168 = vsel %vm2136, 1, 0
        %v2169 = vsel %vm2137, 1, 0
        %v2170 = vsel %vm2138, 1, 0
        %v2171 = vsel %vm2139, 1, 0
        %v2172 = vsel %vm2140, 1, 0
        %v2173 = vsel %vm2141, 1, 0
        %v2174 = vsel %vm2142, 1, 0
        %v2175 = vsel %vm2143, 1, 0
        %v2176 = vsel %vm2144, 1, 0
        %v2177 = vsel %vm2145, 1, 0
        %v2178 = vsel %vm2146, 1, 0
        %v2179 = vsel %vm2147, 1, 0
        %v2180 = vsel %vm2148, 1, 0
        %v2181 = vsel %vm2149, 1, 0
        %v2182 = vsel %vm2150, 1, 0
        %v2183 = vsel %vm2151, 1, 0
        %v2184 = vsel %vm2152, 1, 0
        %v2185 = vsel %vm2153, 1, 0
        %v2186 = vsel %vm2154, 1, 0
        %v2187 = vsel %vm2155, 1, 0
        %v2188 = vsel %vm2156, 1, 0
        %v2189 = vsel %vm2157, 1, 0
        %v2190 = vsel %vm2158, 1, 0
        %v2191 = vsel %vm2159, 1, 0
        %v2192 = vsel %vm2160, 1, 0
        %v2193 = vsel %vm2161, 1, 0
        %v2194 = vsel %vm2162, 1, 0
        %v2195 = vsel %vm2163, 1, 0
        %v2196 = vcvt.s32.f32 %v2164
        %v2197 = vcvt.s32.f32 %v2165
        %v2198 = vcvt.s32.f32 %v2166
        %v2199 = vcvt.s32.f32 %v2167
        %v2200 = vcvt.s32.f32 %v2168
        %v2201 = vcvt.s32.f32 %v2169
        %v2202 = vcvt.s32.f32 %v2170
        %v2203 = vcvt.s32.f32 %v2171
        %v2204 = vcvt.s32.f32 %v2172
        %v2205 = vcvt.s32.f32 %v2173
        %v2206 = vcvt.s32.f32 %v2174
        %v2207 = vcvt.s32.f32 %v2175
        %v2208 = vcvt.s32.f32 %v2176
        %v2209 = vcvt.s32.f32 %v2177
        %v2210 = vcvt.s32.f32 %v2178
        %v2211 = vcvt.s32.f32 %v2179
        %v2212 = vcvt.s32.f32 %v2180
        %v2213 = vcvt.s32.f32 %v2181
        %v2214 = vcvt.s32.f32 %v2182
        %v2215 = vcvt.s32.f32 %v2183
        %v2216 = vcvt.s32.f32 %v2184
        %v2217 = vcvt.s32.f32 %v2185
        %v2218 = vcvt.s32.f32 %v2186
        %v2219 = vcvt.s32.f32 %v2187
        %v2220 = vcvt.s32.f32 %v2188
        %v2221 = vcvt.s32.f32 %v2189
        %v2222 = vcvt.s32.f32 %v2190
        %v2223 = vcvt.s32.f32 %v2191
        %v2224 = vcvt.s32.f32 %v2192
        %v2225 = vcvt.s32.f32 %v2193
        %v2226 = vcvt.s32.f32 %v2194
        %v2227 = vcvt.s32.f32 %v2195
        %2260 = vset.pattern.permute.xlu0 0
        %2261 = vperm.xlu0 %2260, %v2196
        %v2262 = vpop.permute.xlu0 %2261
        %2263 = vset.pattern.permute.xlu0 0
        %2264 = vperm.xlu0 %2263, %v2197
        %v2265 = vpop.permute.xlu0 %2264
        %2266 = vset.pattern.permute.xlu0 0
        %2267 = vperm.xlu0 %2266, %v2198
        %v2268 = vpop.permute.xlu0 %2267
        %2269 = vset.pattern.permute.xlu0 0
        %2270 = vperm.xlu0 %2269, %v2199
        %v2271 = vpop.permute.xlu0 %2270
        %2272 = vset.pattern.permute.xlu0 0
        %2273 = vperm.xlu0 %2272, %v2200
        %v2274 = vpop.permute.xlu0 %2273
        %2275 = vset.pattern.permute.xlu0 0
        %2276 = vperm.xlu0 %2275, %v2201
        %v2277 = vpop.permute.xlu0 %2276
        %2278 = vset.pattern.permute.xlu0 0
        %2279 = vperm.xlu0 %2278, %v2202
        %v2280 = vpop.permute.xlu0 %2279
        %2281 = vset.pattern.permute.xlu0 0
        %2282 = vperm.xlu0 %2281, %v2203
        %v2283 = vpop.permute.xlu0 %2282
        %2284 = vset.pattern.permute.xlu0 0
        %2285 = vperm.xlu0 %2284, %v2204
        %v2286 = vpop.permute.xlu0 %2285
        %2287 = vset.pattern.permute.xlu0 0
        %2288 = vperm.xlu0 %2287, %v2205
        %v2289 = vpop.permute.xlu0 %2288
        %2290 = vset.pattern.permute.xlu0 0
        %2291 = vperm.xlu0 %2290, %v2206
        %v2292 = vpop.permute.xlu0 %2291
        %2293 = vset.pattern.permute.xlu0 0
        %2294 = vperm.xlu0 %2293, %v2207
        %v2295 = vpop.permute.xlu0 %2294
        %2296 = vset.pattern.permute.xlu0 0
        %2297 = vperm.xlu0 %2296, %v2208
        %v2298 = vpop.permute.xlu0 %2297
        %2299 = vset.pattern.permute.xlu0 0
        %2300 = vperm.xlu0 %2299, %v2209
        %v2301 = vpop.permute.xlu0 %2300
        %2302 = vset.pattern.permute.xlu0 0
        %2303 = vperm.xlu0 %2302, %v2210
        %v2304 = vpop.permute.xlu0 %2303
        %2305 = vset.pattern.permute.xlu0 0
        %2306 = vperm.xlu0 %2305, %v2211
        %v2307 = vpop.permute.xlu0 %2306
        %2308 = vset.pattern.permute.xlu0 0
        %2309 = vperm.xlu0 %2308, %v2212
        %v2310 = vpop.permute.xlu0 %2309
        %2311 = vset.pattern.permute.xlu0 0
        %2312 = vperm.xlu0 %2311, %v2213
        %v2313 = vpop.permute.xlu0 %2312
        %2314 = vset.pattern.permute.xlu0 0
        %2315 = vperm.xlu0 %2314, %v2214
        %v2316 = vpop.permute.xlu0 %2315
        %2317 = vset.pattern.permute.xlu0 0
        %2318 = vperm.xlu0 %2317, %v2215
        %v2319 = vpop.permute.xlu0 %2318
        %2320 = vset.pattern.permute.xlu0 0
        %2321 = vperm.xlu0 %2320, %v2216
        %v2322 = vpop.permute.xlu0 %2321
        %2323 = vset.pattern.permute.xlu0 0
        %2324 = vperm.xlu0 %2323, %v2217
        %v2325 = vpop.permute.xlu0 %2324
        %2326 = vset.pattern.permute.xlu0 0
        %2327 = vperm.xlu0 %2326, %v2218
        %v2328 = vpop.permute.xlu0 %2327
        %2329 = vset.pattern.permute.xlu0 0
        %2330 = vperm.xlu0 %2329, %v2219
        %v2331 = vpop.permute.xlu0 %2330
        %2332 = vset.pattern.permute.xlu0 0
        %2333 = vperm.xlu0 %2332, %v2220
        %v2334 = vpop.permute.xlu0 %2333
        %2335 = vset.pattern.permute.xlu0 0
        %2336 = vperm.xlu0 %2335, %v2221
        %v2337 = vpop.permute.xlu0 %2336
        %2338 = vset.pattern.permute.xlu0 0
        %2339 = vperm.xlu0 %2338, %v2222
        %v2340 = vpop.permute.xlu0 %2339
        %2341 = vset.pattern.permute.xlu0 0
        %2342 = vperm.xlu0 %2341, %v2223
        %v2343 = vpop.permute.xlu0 %2342
        %2344 = vset.pattern.permute.xlu0 0
        %2345 = vperm.xlu0 %2344, %v2224
        %v2346 = vpop.permute.xlu0 %2345
        %2347 = vset.pattern.permute.xlu0 0
        %2348 = vperm.xlu0 %2347, %v2225
        %v2349 = vpop.permute.xlu0 %2348
        %2350 = vset.pattern.permute.xlu0 0
        %2351 = vperm.xlu0 %2350, %v2226
        %v2352 = vpop.permute.xlu0 %2351
        %2353 = vset.pattern.permute.xlu0 0
        %2354 = vperm.xlu0 %2353, %v2227
        %v2355 = vpop.permute.xlu0 %2354
        %v2356 = vlaneseq
        %v2357 = vshrl.u32 %v2356, 7
        %v2358 = vsub.s32 %v1803, %v2357
        %v2359 = vrot.slane %v2262, %v2358
        %v2360 = vlaneseq
        %v2361 = vshrl.u32 %v2360, 7
        %v2362 = vsub.s32 %v1803, %v2361
        %v2363 = vrot.slane %v2265, %v2362
        %v2364 = vlaneseq
        %v2365 = vshrl.u32 %v2364, 7
        %v2366 = vsub.s32 %v1803, %v2365
        %v2367 = vrot.slane %v2268, %v2366
        %v2368 = vlaneseq
        %v2369 = vshrl.u32 %v2368, 7
        %v2370 = vsub.s32 %v1803, %v2369
        %v2371 = vrot.slane %v2271, %v2370
        %v2372 = vlaneseq
        %v2373 = vshrl.u32 %v2372, 7
        %v2374 = vsub.s32 %v1803, %v2373
        %v2375 = vrot.slane %v2274, %v2374
        %v2376 = vlaneseq
        %v2377 = vshrl.u32 %v2376, 7
        %v2378 = vsub.s32 %v1803, %v2377
        %v2379 = vrot.slane %v2277, %v2378
        %v2380 = vlaneseq
        %v2381 = vshrl.u32 %v2380, 7
        %v2382 = vsub.s32 %v1803, %v2381
        %v2383 = vrot.slane %v2280, %v2382
        %v2384 = vlaneseq
        %v2385 = vshrl.u32 %v2384, 7
        %v2386 = vsub.s32 %v1803, %v2385
        %v2387 = vrot.slane %v2283, %v2386
        %v2388 = vlaneseq
        %v2389 = vshrl.u32 %v2388, 7
        %v2390 = vsub.s32 %v1803, %v2389
        %v2391 = vrot.slane %v2286, %v2390
        %v2392 = vlaneseq
        %v2393 = vshrl.u32 %v2392, 7
        %v2394 = vsub.s32 %v1803, %v2393
        %v2395 = vrot.slane %v2289, %v2394
        %v2396 = vlaneseq
        %v2397 = vshrl.u32 %v2396, 7
        %v2398 = vsub.s32 %v1803, %v2397
        %v2399 = vrot.slane %v2292, %v2398
        %v2400 = vlaneseq
        %v2401 = vshrl.u32 %v2400, 7
        %v2402 = vsub.s32 %v1803, %v2401
        %v2403 = vrot.slane %v2295, %v2402
        %v2404 = vlaneseq
        %v2405 = vshrl.u32 %v2404, 7
        %v2406 = vsub.s32 %v1803, %v2405
        %v2407 = vrot.slane %v2298, %v2406
        %v2408 = vlaneseq
        %v2409 = vshrl.u32 %v2408, 7
        %v2410 = vsub.s32 %v1803, %v2409
        %v2411 = vrot.slane %v2301, %v2410
        %v2412 = vlaneseq
        %v2413 = vshrl.u32 %v2412, 7
        %v2414 = vsub.s32 %v1803, %v2413
        %v2415 = vrot.slane %v2304, %v2414
        %v2416 = vlaneseq
        %v2417 = vshrl.u32 %v2416, 7
        %v2418 = vsub.s32 %v1803, %v2417
        %v2419 = vrot.slane %v2307, %v2418
        %v2420 = vlaneseq
        %v2421 = vshrl.u32 %v2420, 7
        %v2422 = vsub.s32 %v1803, %v2421
        %v2423 = vrot.slane %v2310, %v2422
        %v2424 = vlaneseq
        %v2425 = vshrl.u32 %v2424, 7
        %v2426 = vsub.s32 %v1803, %v2425
        %v2427 = vrot.slane %v2313, %v2426
        %v2428 = vlaneseq
        %v2429 = vshrl.u32 %v2428, 7
        %v2430 = vsub.s32 %v1803, %v2429
        %v2431 = vrot.slane %v2316, %v2430
        %v2432 = vlaneseq
        %v2433 = vshrl.u32 %v2432, 7
        %v2434 = vsub.s32 %v1803, %v2433
        %v2435 = vrot.slane %v2319, %v2434
        %v2436 = vlaneseq
        %v2437 = vshrl.u32 %v2436, 7
        %v2438 = vsub.s32 %v1803, %v2437
        %v2439 = vrot.slane %v2322, %v2438
        %v2440 = vlaneseq
        %v2441 = vshrl.u32 %v2440, 7
        %v2442 = vsub.s32 %v1803, %v2441
        %v2443 = vrot.slane %v2325, %v2442
        %v2444 = vlaneseq
        %v2445 = vshrl.u32 %v2444, 7
        %v2446 = vsub.s32 %v1803, %v2445
        %v2447 = vrot.slane %v2328, %v2446
        %v2448 = vlaneseq
        %v2449 = vshrl.u32 %v2448, 7
        %v2450 = vsub.s32 %v1803, %v2449
        %v2451 = vrot.slane %v2331, %v2450
        %v2452 = vlaneseq
        %v2453 = vshrl.u32 %v2452, 7
        %v2454 = vsub.s32 %v1803, %v2453
        %v2455 = vrot.slane %v2334, %v2454
        %v2456 = vlaneseq
        %v2457 = vshrl.u32 %v2456, 7
        %v2458 = vsub.s32 %v1803, %v2457
        %v2459 = vrot.slane %v2337, %v2458
        %v2460 = vlaneseq
        %v2461 = vshrl.u32 %v2460, 7
        %v2462 = vsub.s32 %v1803, %v2461
        %v2463 = vrot.slane %v2340, %v2462
        %v2464 = vlaneseq
        %v2465 = vshrl.u32 %v2464, 7
        %v2466 = vsub.s32 %v1803, %v2465
        %v2467 = vrot.slane %v2343, %v2466
        %v2468 = vlaneseq
        %v2469 = vshrl.u32 %v2468, 7
        %v2470 = vsub.s32 %v1803, %v2469
        %v2471 = vrot.slane %v2346, %v2470
        %v2472 = vlaneseq
        %v2473 = vshrl.u32 %v2472, 7
        %v2474 = vsub.s32 %v1803, %v2473
        %v2475 = vrot.slane %v2349, %v2474
        %v2476 = vlaneseq
        %v2477 = vshrl.u32 %v2476, 7
        %v2478 = vsub.s32 %v1803, %v2477
        %v2479 = vrot.slane %v2352, %v2478
        %v2480 = vlaneseq
        %v2481 = vshrl.u32 %v2480, 7
        %v2482 = vsub.s32 %v1803, %v2481
        %v2483 = vrot.slane %v2355, %v2482
        %vm2484 = vcmask 1041409
        %v2485 = vsel %vm2484, %v2363, %v2359
        %vm2486 = vcmask 1042434
        %v2487 = vsel %vm2486, %v2367, %v2485
        %vm2488 = vcmask 1043459
        %v2489 = vsel %vm2488, %v2371, %v2487
        %vm2490 = vcmask 1044484
        %v2491 = vsel %vm2490, %v2375, %v2489
        %vm2492 = vcmask 1045509
        %v2493 = vsel %vm2492, %v2379, %v2491
        %vm2494 = vcmask 1046534
        %v2495 = vsel %vm2494, %v2383, %v2493
        %vm2496 = vcmask 1047559
        %v2497 = vsel %vm2496, %v2387, %v2495
        %v2498 = vsel %vm2484, %v2395, %v2391
        %v2499 = vsel %vm2486, %v2399, %v2498
        %v2500 = vsel %vm2488, %v2403, %v2499
        %v2501 = vsel %vm2490, %v2407, %v2500
        %v2502 = vsel %vm2492, %v2411, %v2501
        %v2503 = vsel %vm2494, %v2415, %v2502
        %v2504 = vsel %vm2496, %v2419, %v2503
        %v2505 = vsel %vm2484, %v2427, %v2423
        %v2506 = vsel %vm2486, %v2431, %v2505
        %v2507 = vsel %vm2488, %v2435, %v2506
        %v2508 = vsel %vm2490, %v2439, %v2507
        %v2509 = vsel %vm2492, %v2443, %v2508
        %v2510 = vsel %vm2494, %v2447, %v2509
        %v2511 = vsel %vm2496, %v2451, %v2510
        %v2512 = vsel %vm2484, %v2459, %v2455
        %v2513 = vsel %vm2486, %v2463, %v2512
        %v2514 = vsel %vm2488, %v2467, %v2513
        %v2515 = vsel %vm2490, %v2471, %v2514
        %v2516 = vsel %vm2492, %v2475, %v2515
        %v2517 = vsel %vm2494, %v2479, %v2516
        %v2518 = vsel %vm2496, %v2483, %v2517
        %v2523 = vsel %vm1451, %v2497, 0.0
        %2524 = vadd.xlane.f32.xlu0 %v2523
        %v2525 = vpop.xlane.xlu0 %2524
        %v2526 = vsel %vm1451, %v2504, 0.0
        %2527 = vadd.xlane.f32.xlu0 %v2526
        %v2528 = vpop.xlane.xlu0 %2527
        %v2529 = vsel %vm1451, %v2511, 0.0
        %2530 = vadd.xlane.f32.xlu0 %v2529
        %v2531 = vpop.xlane.xlu0 %2530
        %v2532 = vsel %vm1451, %v2518, 0.0
        %2533 = vadd.xlane.f32.xlu0 %v2532
        %v2534 = vpop.xlane.xlu0 %2533
        %vm2535 = vcmp.lt.f32.partialorder %v2525, 4.0
        %vm2536 = vcmp.lt.f32.partialorder %v2528, 4.0
        %vm2537 = vcmp.lt.f32.partialorder %v2531, 4.0
        %vm2538 = vcmp.lt.f32.partialorder %v2534, 4.0
        %v2539 = vld [vmem:[%s547] sm:$0x3]
        %vm2540 = vnez %v2539
        %v2541 = vsel %vm2540, 16843009, 0
        %v2542 = vunpack.c.0.s8 %v2541
        %vm2543 = vcmp.ne.s32.totalorder %v2542, 0
        %v2544 = vsel %vm2543, 1, 0
        %vm2545 = vcmp.eq.s32.totalorder %v2544, 1
        %v2546 = vsel %vm2545, -1e+30, %v1525
        %v2547 = vsel %vm2545, -1e+30, %v1601
        %v2548 = vsel %vm2545, -1e+30, %v1677
        %v2549 = vsel %vm2545, -1e+30, %v1753
        %v2550 = vsel %vm1451, %v2546, -inf
        %2551 = vmax.xlane.f32.xlu0 %v2550
        %v2552 = vpop.xlane.xlu0 %2551
        %v2553 = vsel %vm1451, %v2547, -inf
        %2554 = vmax.xlane.f32.xlu0 %v2553
        %v2555 = vpop.xlane.xlu0 %2554
        %v2556 = vsel %vm1451, %v2548, -inf
        %2557 = vmax.xlane.f32.xlu0 %v2556
        %v2558 = vpop.xlane.xlu0 %2557
        %v2559 = vsel %vm1451, %v2549, -inf
        %2560 = vmax.xlane.f32.xlu0 %v2559
        %v2561 = vpop.xlane.xlu0 %2560
        %v2562 = vsub.f32 %v2546, %v2552
        %v2563 = vsub.f32 %v2547, %v2555
        %v2564 = vsub.f32 %v2548, %v2558
        %v2565 = vsub.f32 %v2549, %v2561
        %v2566 = vmul.f32 %v2562, 1.442695
        %v2567 = vpow.pop %v2566
        %v2568 = vmul.f32 %v2563, 1.442695
        %v2569 = vpow.pop %v2568
        %v2570 = vmul.f32 %v2564, 1.442695
        %v2571 = vpow.pop %v2570
        %v2572 = vmul.f32 %v2565, 1.442695
        %v2573 = vpow.pop %v2572
        %v2574 = vsel %vm1451, %v2567, 0.0
        %2575 = vadd.xlane.f32.xlu0 %v2574
        %v2576 = vpop.xlane.xlu0 %2575
        %v2577 = vsel %vm1451, %v2569, 0.0
        %2578 = vadd.xlane.f32.xlu0 %v2577
        %v2579 = vpop.xlane.xlu0 %2578
        %v2580 = vsel %vm1451, %v2571, 0.0
        %2581 = vadd.xlane.f32.xlu0 %v2580
        %v2582 = vpop.xlane.xlu0 %2581
        %v2583 = vsel %vm1451, %v2573, 0.0
        %2584 = vadd.xlane.f32.xlu0 %v2583
        %v2585 = vpop.xlane.xlu0 %2584
        %vm2586 = vcmp.ge.s32.totalorder %v1801, %v1803
        %v2587 = vsel %vm2586, 1, 0
        %v2588 = vcvt.s32.f32 %v2587
        %v2589 = vsel %vm2535, 1, 0
        %v2590 = vsel %vm2536, 1, 0
        %v2591 = vsel %vm2537, 1, 0
        %v2592 = vsel %vm2538, 1, 0
        %vm2593 = vcmp.eq.s32.totalorder %v2589, 1
        %vm2594 = vcmp.eq.s32.totalorder %v2590, 1
        %vm2595 = vcmp.eq.s32.totalorder %v2591, 1
        %vm2596 = vcmp.eq.s32.totalorder %v2592, 1
        %v2597 = vsel %vm2593, %v2567, %v2588
        %v2598 = vsel %vm2594, %v2569, %v2588
        %v2599 = vsel %vm2595, %v2571, %v2588
        %v2600 = vsel %vm2596, %v2573, %v2588
        %v2602 = vsel %vm1451, %v2597, 0
        %2604 = vmatprep.subr.mxu0 0.0
        %2605 = vmatpush1.msra.mxu0 %v1229
        %2606 = vmatprep.subr.mxu0 0.0
        %2607 = vmatpush1.msra.mxu0 0.0
        %2608 = vmatprep.subr.mxu0 0.0
        %2609 = vmatpush1.msra.mxu0 0.0
        %2610 = vmatprep.subr.mxu0 0.0
        %2611 = vmatpush1.msra.mxu0 0.0
        %2612 = vmatprep.subr.mxu0 0.0
        %2613 = vmatpush1.msra.mxu0 0.0
        %2614 = vmatprep.subr.mxu0 0.0
        %2615 = vmatpush1.msra.mxu0 0.0
        %2616 = vmatprep.subr.mxu0 0.0
        %2617 = vmatpush1.msra.mxu0 0.0
        %2618 = vmatprep.subr.mxu0 0.0
        %2619 = vmatpush1.msra.mxu0 0.0
        %2620 = vmatprep.subr.mxu0 0.0
        %2621 = vmatpush1.msra.mxu0 0.0
        %2622 = vmatprep.subr.mxu0 0.0
        %2623 = vmatpush1.msra.mxu0 0.0
        %2624 = vmatprep.subr.mxu0 0.0
        %2625 = vmatpush1.msra.mxu0 0.0
        %2626 = vmatprep.subr.mxu0 0.0
        %2627 = vmatpush1.msra.mxu0 0.0
        %2628 = vmatprep.subr.mxu0 0.0
        %2629 = vmatpush1.msra.mxu0 0.0
        %2630 = vmatprep.subr.mxu0 0.0
        %2631 = vmatpush1.msra.mxu0 0.0
        %2632 = vmatprep.subr.mxu0 0.0
        %2633 = vmatpush1.msra.mxu0 0.0
        %2634 = vmatprep.subr.mxu0 0.0
        %2635 = vmatpush1.msra.mxu0 0.0
        %2636 = vmatprep.subr.mxu0 0.0
        %2637 = vmatpush1.msra.mxu0 0.0
        %2638 = vmatprep.subr.mxu0 0.0
        %2639 = vmatpush1.msra.mxu0 0.0
        %2640 = vmatprep.subr.mxu0 0.0
        %2641 = vmatpush1.msra.mxu0 0.0
        %2642 = vmatprep.subr.mxu0 0.0
        %2643 = vmatpush1.msra.mxu0 0.0
        %2644 = vmatprep.subr.mxu0 0.0
        %2645 = vmatpush1.msra.mxu0 0.0
        %2646 = vmatprep.subr.mxu0 0.0
        %2647 = vmatpush1.msra.mxu0 0.0
        %2648 = vmatprep.subr.mxu0 0.0
        %2649 = vmatpush1.msra.mxu0 0.0
        %2650 = vmatprep.subr.mxu0 0.0
        %2651 = vmatpush1.msra.mxu0 0.0
        %2652 = vmatprep.subr.mxu0 0.0
        %2653 = vmatpush1.msra.mxu0 0.0
        %2654 = vmatprep.subr.mxu0 0.0
        %2655 = vmatpush1.msra.mxu0 0.0
        %2656 = vmatprep.subr.mxu0 0.0
        %2657 = vmatpush1.msra.mxu0 0.0
        %2658 = vmatprep.subr.mxu0 0.0
        %2659 = vmatpush1.msra.mxu0 0.0
        %2660 = vmatprep.subr.mxu0 0.0
        %2661 = vmatpush1.msra.mxu0 0.0
        %2662 = vmatprep.subr.mxu0 0.0
        %2663 = vmatpush1.msra.mxu0 0.0
        %2664 = vmatprep.subr.mxu0 0.0
        %2665 = vmatpush1.msra.mxu0 0.0
        %2666 = vmatprep.subr.mxu0 0.0
        %2667 = vmatpush1.msra.mxu0 0.0
        %2668 = vmatprep.mubr.f32.mxu0 0.0
        %2669 = vmatmul.mubr.f32.gmra.mrb[0].mxu0 %v2602
        %v2670 = vpop.f32.mrb[0].mxu0
        %v2671 = vadd.f32 0.0, %v2670
        %v2672 = vpop.f32.mrb[0].mxu0
        %2673 = vdwg.mxu0
        %v2675 = vsel %vm1451, %v2598, 0
        %2677 = vmatprep.subr.mxu0 0.0
        %2678 = vmatpush1.msra.mxu0 %v1302
        %2679 = vmatprep.subr.mxu0 0.0
        %2680 = vmatpush1.msra.mxu0 0.0
        %2681 = vmatprep.subr.mxu0 0.0
        %2682 = vmatpush1.msra.mxu0 0.0
        %2683 = vmatprep.subr.mxu0 0.0
        %2684 = vmatpush1.msra.mxu0 0.0
        %2685 = vmatprep.subr.mxu0 0.0
        %2686 = vmatpush1.msra.mxu0 0.0
        %2687 = vmatprep.subr.mxu0 0.0
        %2688 = vmatpush1.msra.mxu0 0.0
        %2689 = vmatprep.subr.mxu0 0.0
        %2690 = vmatpush1.msra.mxu0 0.0
        %2691 = vmatprep.subr.mxu0 0.0
        %2692 = vmatpush1.msra.mxu0 0.0
        %2693 = vmatprep.subr.mxu0 0.0
        %2694 = vmatpush1.msra.mxu0 0.0
        %2695 = vmatprep.subr.mxu0 0.0
        %2696 = vmatpush1.msra.mxu0 0.0
        %2697 = vmatprep.subr.mxu0 0.0
        %2698 = vmatpush1.msra.mxu0 0.0
        %2699 = vmatprep.subr.mxu0 0.0
        %2700 = vmatpush1.msra.mxu0 0.0
        %2701 = vmatprep.subr.mxu0 0.0
        %2702 = vmatpush1.msra.mxu0 0.0
        %2703 = vmatprep.subr.mxu0 0.0
        %2704 = vmatpush1.msra.mxu0 0.0
        %2705 = vmatprep.subr.mxu0 0.0
        %2706 = vmatpush1.msra.mxu0 0.0
        %2707 = vmatprep.subr.mxu0 0.0
        %2708 = vmatpush1.msra.mxu0 0.0
        %2709 = vmatprep.subr.mxu0 0.0
        %2710 = vmatpush1.msra.mxu0 0.0
        %2711 = vmatprep.subr.mxu0 0.0
        %2712 = vmatpush1.msra.mxu0 0.0
        %2713 = vmatprep.subr.mxu0 0.0
        %2714 = vmatpush1.msra.mxu0 0.0
        %2715 = vmatprep.subr.mxu0 0.0
        %2716 = vmatpush1.msra.mxu0 0.0
        %2717 = vmatprep.subr.mxu0 0.0
        %2718 = vmatpush1.msra.mxu0 0.0
        %2719 = vmatprep.subr.mxu0 0.0
        %2720 = vmatpush1.msra.mxu0 0.0
        %2721 = vmatprep.subr.mxu0 0.0
        %2722 = vmatpush1.msra.mxu0 0.0
        %2723 = vmatprep.subr.mxu0 0.0
        %2724 = vmatpush1.msra.mxu0 0.0
        %2725 = vmatprep.subr.mxu0 0.0
        %2726 = vmatpush1.msra.mxu0 0.0
        %2727 = vmatprep.subr.mxu0 0.0
        %2728 = vmatpush1.msra.mxu0 0.0
        %2729 = vmatprep.subr.mxu0 0.0
        %2730 = vmatpush1.msra.mxu0 0.0
        %2731 = vmatprep.subr.mxu0 0.0
        %2732 = vmatpush1.msra.mxu0 0.0
        %2733 = vmatprep.subr.mxu0 0.0
        %2734 = vmatpush1.msra.mxu0 0.0
        %2735 = vmatprep.subr.mxu0 0.0
        %2736 = vmatpush1.msra.mxu0 0.0
        %2737 = vmatprep.subr.mxu0 0.0
        %2738 = vmatpush1.msra.mxu0 0.0
        %2739 = vmatprep.subr.mxu0 0.0
        %2740 = vmatpush1.msra.mxu0 0.0
        %2741 = vmatprep.mubr.f32.mxu0 0.0
        %2742 = vmatmul.mubr.f32.gmra.mrb[0].mxu0 %v2675
        %v2743 = vpop.f32.mrb[0].mxu0
        %v2744 = vadd.f32 0.0, %v2743
        %v2745 = vpop.f32.mrb[0].mxu0
        %2746 = vdwg.mxu0
        %v2748 = vsel %vm1451, %v2599, 0
        %2750 = vmatprep.subr.mxu0 0.0
        %2751 = vmatpush1.msra.mxu0 %v1375
        %2752 = vmatprep.subr.mxu0 0.0
        %2753 = vmatpush1.msra.mxu0 0.0
        %2754 = vmatprep.subr.mxu0 0.0
        %2755 = vmatpush1.msra.mxu0 0.0
        %2756 = vmatprep.subr.mxu0 0.0
        %2757 = vmatpush1.msra.mxu0 0.0
        %2758 = vmatprep.subr.mxu0 0.0
        %2759 = vmatpush1.msra.mxu0 0.0
        %2760 = vmatprep.subr.mxu0 0.0
        %2761 = vmatpush1.msra.mxu0 0.0
        %2762 = vmatprep.subr.mxu0 0.0
        %2763 = vmatpush1.msra.mxu0 0.0
        %2764 = vmatprep.subr.mxu0 0.0
        %2765 = vmatpush1.msra.mxu0 0.0
        %2766 = vmatprep.subr.mxu0 0.0
        %2767 = vmatpush1.msra.mxu0 0.0
        %2768 = vmatprep.subr.mxu0 0.0
        %2769 = vmatpush1.msra.mxu0 0.0
        %2770 = vmatprep.subr.mxu0 0.0
        %2771 = vmatpush1.msra.mxu0 0.0
        %2772 = vmatprep.subr.mxu0 0.0
        %2773 = vmatpush1.msra.mxu0 0.0
        %2774 = vmatprep.subr.mxu0 0.0
        %2775 = vmatpush1.msra.mxu0 0.0
        %2776 = vmatprep.subr.mxu0 0.0
        %2777 = vmatpush1.msra.mxu0 0.0
        %2778 = vmatprep.subr.mxu0 0.0
        %2779 = vmatpush1.msra.mxu0 0.0
        %2780 = vmatprep.subr.mxu0 0.0
        %2781 = vmatpush1.msra.mxu0 0.0
        %2782 = vmatprep.subr.mxu0 0.0
        %2783 = vmatpush1.msra.mxu0 0.0
        %2784 = vmatprep.subr.mxu0 0.0
        %2785 = vmatpush1.msra.mxu0 0.0
        %2786 = vmatprep.subr.mxu0 0.0
        %2787 = vmatpush1.msra.mxu0 0.0
        %2788 = vmatprep.subr.mxu0 0.0
        %2789 = vmatpush1.msra.mxu0 0.0
        %2790 = vmatprep.subr.mxu0 0.0
        %2791 = vmatpush1.msra.mxu0 0.0
        %2792 = vmatprep.subr.mxu0 0.0
        %2793 = vmatpush1.msra.mxu0 0.0
        %2794 = vmatprep.subr.mxu0 0.0
        %2795 = vmatpush1.msra.mxu0 0.0
        %2796 = vmatprep.subr.mxu0 0.0
        %2797 = vmatpush1.msra.mxu0 0.0
        %2798 = vmatprep.subr.mxu0 0.0
        %2799 = vmatpush1.msra.mxu0 0.0
        %2800 = vmatprep.subr.mxu0 0.0
        %2801 = vmatpush1.msra.mxu0 0.0
        %2802 = vmatprep.subr.mxu0 0.0
        %2803 = vmatpush1.msra.mxu0 0.0
        %2804 = vmatprep.subr.mxu0 0.0
        %2805 = vmatpush1.msra.mxu0 0.0
        %2806 = vmatprep.subr.mxu0 0.0
        %2807 = vmatpush1.msra.mxu0 0.0
        %2808 = vmatprep.subr.mxu0 0.0
        %2809 = vmatpush1.msra.mxu0 0.0
        %2810 = vmatprep.subr.mxu0 0.0
        %2811 = vmatpush1.msra.mxu0 0.0
        %2812 = vmatprep.subr.mxu0 0.0
        %2813 = vmatpush1.msra.mxu0 0.0
        %2814 = vmatprep.mubr.f32.mxu0 0.0
        %2815 = vmatmul.mubr.f32.gmra.mrb[0].mxu0 %v2748
        %v2816 = vpop.f32.mrb[0].mxu0
        %v2817 = vadd.f32 0.0, %v2816
        %v2818 = vpop.f32.mrb[0].mxu0
        %2819 = vdwg.mxu0
        %v2821 = vsel %vm1451, %v2600, 0
        %2823 = vmatprep.subr.mxu0 0.0
        %2824 = vmatpush1.msra.mxu0 %v1448
        %2825 = vmatprep.subr.mxu0 0.0
        %2826 = vmatpush1.msra.mxu0 0.0
        %2827 = vmatprep.subr.mxu0 0.0
        %2828 = vmatpush1.msra.mxu0 0.0
        %2829 = vmatprep.subr.mxu0 0.0
        %2830 = vmatpush1.msra.mxu0 0.0
        %2831 = vmatprep.subr.mxu0 0.0
        %2832 = vmatpush1.msra.mxu0 0.0
        %2833 = vmatprep.subr.mxu0 0.0
        %2834 = vmatpush1.msra.mxu0 0.0
        %2835 = vmatprep.subr.mxu0 0.0
        %2836 = vmatpush1.msra.mxu0 0.0
        %2837 = vmatprep.subr.mxu0 0.0
        %2838 = vmatpush1.msra.mxu0 0.0
        %2839 = vmatprep.subr.mxu0 0.0
        %2840 = vmatpush1.msra.mxu0 0.0
        %2841 = vmatprep.subr.mxu0 0.0
        %2842 = vmatpush1.msra.mxu0 0.0
        %2843 = vmatprep.subr.mxu0 0.0
        %2844 = vmatpush1.msra.mxu0 0.0
        %2845 = vmatprep.subr.mxu0 0.0
        %2846 = vmatpush1.msra.mxu0 0.0
        %2847 = vmatprep.subr.mxu0 0.0
        %2848 = vmatpush1.msra.mxu0 0.0
        %2849 = vmatprep.subr.mxu0 0.0
        %2850 = vmatpush1.msra.mxu0 0.0
        %2851 = vmatprep.subr.mxu0 0.0
        %2852 = vmatpush1.msra.mxu0 0.0
        %2853 = vmatprep.subr.mxu0 0.0
        %2854 = vmatpush1.msra.mxu0 0.0
        %2855 = vmatprep.subr.mxu0 0.0
        %2856 = vmatpush1.msra.mxu0 0.0
        %2857 = vmatprep.subr.mxu0 0.0
        %2858 = vmatpush1.msra.mxu0 0.0
        %2859 = vmatprep.subr.mxu0 0.0
        %2860 = vmatpush1.msra.mxu0 0.0
        %2861 = vmatprep.subr.mxu0 0.0
        %2862 = vmatpush1.msra.mxu0 0.0
        %2863 = vmatprep.subr.mxu0 0.0
        %2864 = vmatpush1.msra.mxu0 0.0
        %2865 = vmatprep.subr.mxu0 0.0
        %2866 = vmatpush1.msra.mxu0 0.0
        %2867 = vmatprep.subr.mxu0 0.0
        %2868 = vmatpush1.msra.mxu0 0.0
        %2869 = vmatprep.subr.mxu0 0.0
        %2870 = vmatpush1.msra.mxu0 0.0
        %2871 = vmatprep.subr.mxu0 0.0
        %2872 = vmatpush1.msra.mxu0 0.0
        %2873 = vmatprep.subr.mxu0 0.0
        %2874 = vmatpush1.msra.mxu0 0.0
        %2875 = vmatprep.subr.mxu0 0.0
        %2876 = vmatpush1.msra.mxu0 0.0
        %2877 = vmatprep.subr.mxu0 0.0
        %2878 = vmatpush1.msra.mxu0 0.0
        %2879 = vmatprep.subr.mxu0 0.0
        %2880 = vmatpush1.msra.mxu0 0.0
        %2881 = vmatprep.subr.mxu0 0.0
        %2882 = vmatpush1.msra.mxu0 0.0
        %2883 = vmatprep.subr.mxu0 0.0
        %2884 = vmatpush1.msra.mxu0 0.0
        %2885 = vmatprep.subr.mxu0 0.0
        %2886 = vmatpush1.msra.mxu0 0.0
        %2887 = vmatprep.mubr.f32.mxu0 0.0
        %2888 = vmatmul.mubr.f32.gmra.mrb[0].mxu0 %v2821
        %v2889 = vpop.f32.mrb[0].mxu0
        %v2890 = vadd.f32 0.0, %v2889
        %v2891 = vpop.f32.mrb[0].mxu0
        %2892 = vdwg.mxu0
        %v2893 = vrcp.pop %v2576
        %v2894 = vmul.f32 1.0, %v2893
        %v2895 = vrcp.pop %v2579
        %v2896 = vmul.f32 1.0, %v2895
        %v2897 = vrcp.pop %v2582
        %v2898 = vmul.f32 1.0, %v2897
        %v2899 = vrcp.pop %v2585
        %v2900 = vmul.f32 1.0, %v2899
        %v2901 = vsel %vm2535, %v2894, 1.0
        %v2902 = vsel %vm2536, %v2896, 1.0
        %v2903 = vsel %vm2537, %v2898, 1.0
        %v2904 = vsel %vm2538, %v2900, 1.0
        %v2905 = vmul.f32 %v2671, %v2901
        %v2906 = vmul.f32 %v2744, %v2902
        %v2907 = vmul.f32 %v2817, %v2903
        %v2908 = vmul.f32 %v2890, %v2904
        %v2909 = vld [vmem:[#allocation13] sm:$0xff]
        %v2910 = vld [vmem:[#allocation13 + $0x8] sm:$0xff]
        %v2911 = vld [vmem:[#allocation13 + $0x10] sm:$0xff]
        %v2912 = vld [vmem:[#allocation13 + $0x18] sm:$0xff]
        %v2914 = vsel %vm1451, %v2905, 0
        %2916 = vmatprep.subr.mxu0 0.0
        %2917 = vmatpush1.msra.mxu0 %v2909
        %2918 = vmatprep.subr.mxu0 0.0
        %2919 = vmatpush1.msra.mxu0 0.0
        %2920 = vmatprep.subr.mxu0 0.0
        %2921 = vmatpush1.msra.mxu0 0.0
        %2922 = vmatprep.subr.mxu0 0.0
        %2923 = vmatpush1.msra.mxu0 0.0
        %2924 = vmatprep.subr.mxu0 0.0
        %2925 = vmatpush1.msra.mxu0 0.0
        %2926 = vmatprep.subr.mxu0 0.0
        %2927 = vmatpush1.msra.mxu0 0.0
        %2928 = vmatprep.subr.mxu0 0.0
        %2929 = vmatpush1.msra.mxu0 0.0
        %2930 = vmatprep.subr.mxu0 0.0
        %2931 = vmatpush1.msra.mxu0 0.0
        %2932 = vmatprep.subr.mxu0 0.0
        %2933 = vmatpush1.msra.mxu0 0.0
        %2934 = vmatprep.subr.mxu0 0.0
        %2935 = vmatpush1.msra.mxu0 0.0
        %2936 = vmatprep.subr.mxu0 0.0
        %2937 = vmatpush1.msra.mxu0 0.0
        %2938 = vmatprep.subr.mxu0 0.0
        %2939 = vmatpush1.msra.mxu0 0.0
        %2940 = vmatprep.subr.mxu0 0.0
        %2941 = vmatpush1.msra.mxu0 0.0
        %2942 = vmatprep.subr.mxu0 0.0
        %2943 = vmatpush1.msra.mxu0 0.0
        %2944 = vmatprep.subr.mxu0 0.0
        %2945 = vmatpush1.msra.mxu0 0.0
        %2946 = vmatprep.subr.mxu0 0.0
        %2947 = vmatpush1.msra.mxu0 0.0
        %2948 = vmatprep.subr.mxu0 0.0
        %2949 = vmatpush1.msra.mxu0 0.0
        %2950 = vmatprep.subr.mxu0 0.0
        %2951 = vmatpush1.msra.mxu0 0.0
        %2952 = vmatprep.subr.mxu0 0.0
        %2953 = vmatpush1.msra.mxu0 0.0
        %2954 = vmatprep.subr.mxu0 0.0
        %2955 = vmatpush1.msra.mxu0 0.0
        %2956 = vmatprep.subr.mxu0 0.0
        %2957 = vmatpush1.msra.mxu0 0.0
        %2958 = vmatprep.subr.mxu0 0.0
        %2959 = vmatpush1.msra.mxu0 0.0
        %2960 = vmatprep.subr.mxu0 0.0
        %2961 = vmatpush1.msra.mxu0 0.0
        %2962 = vmatprep.subr.mxu0 0.0
        %2963 = vmatpush1.msra.mxu0 0.0
        %2964 = vmatprep.subr.mxu0 0.0
        %2965 = vmatpush1.msra.mxu0 0.0
        %2966 = vmatprep.subr.mxu0 0.0
        %2967 = vmatpush1.msra.mxu0 0.0
        %2968 = vmatprep.subr.mxu0 0.0
        %2969 = vmatpush1.msra.mxu0 0.0
        %2970 = vmatprep.subr.mxu0 0.0
        %2971 = vmatpush1.msra.mxu0 0.0
        %2972 = vmatprep.subr.mxu0 0.0
        %2973 = vmatpush1.msra.mxu0 0.0
        %2974 = vmatprep.subr.mxu0 0.0
        %2975 = vmatpush1.msra.mxu0 0.0
        %2976 = vmatprep.subr.mxu0 0.0
        %2977 = vmatpush1.msra.mxu0 0.0
        %2978 = vmatprep.subr.mxu0 0.0
        %2979 = vmatpush1.msra.mxu0 0.0
        %2980 = vmatprep.mubr.f32.mxu0 0.0
        %2981 = vmatmul.mubr.f32.gmra.mrb[0].mxu0 %v2914
        %v2982 = vpop.f32.mrb[0].mxu0
        %v2983 = vadd.f32 0.0, %v2982
        %v2984 = vpop.f32.mrb[0].mxu0
        %2985 = vdwg.mxu0
        %v2987 = vsel %vm1451, %v2906, 0
        %2989 = vmatprep.subr.mxu0 0.0
        %2990 = vmatpush1.msra.mxu0 %v2910
        %2991 = vmatprep.subr.mxu0 0.0
        %2992 = vmatpush1.msra.mxu0 0.0
        %2993 = vmatprep.subr.mxu0 0.0
        %2994 = vmatpush1.msra.mxu0 0.0
        %2995 = vmatprep.subr.mxu0 0.0
        %2996 = vmatpush1.msra.mxu0 0.0
        %2997 = vmatprep.subr.mxu0 0.0
        %2998 = vmatpush1.msra.mxu0 0.0
        %2999 = vmatprep.subr.mxu0 0.0
        %3000 = vmatpush1.msra.mxu0 0.0
        %3001 = vmatprep.subr.mxu0 0.0
        %3002 = vmatpush1.msra.mxu0 0.0
        %3003 = vmatprep.subr.mxu0 0.0
        %3004 = vmatpush1.msra.mxu0 0.0
        %3005 = vmatprep.subr.mxu0 0.0
        %3006 = vmatpush1.msra.mxu0 0.0
        %3007 = vmatprep.subr.mxu0 0.0
        %3008 = vmatpush1.msra.mxu0 0.0
        %3009 = vmatprep.subr.mxu0 0.0
        %3010 = vmatpush1.msra.mxu0 0.0
        %3011 = vmatprep.subr.mxu0 0.0
        %3012 = vmatpush1.msra.mxu0 0.0
        %3013 = vmatprep.subr.mxu0 0.0
        %3014 = vmatpush1.msra.mxu0 0.0
        %3015 = vmatprep.subr.mxu0 0.0
        %3016 = vmatpush1.msra.mxu0 0.0
        %3017 = vmatprep.subr.mxu0 0.0
        %3018 = vmatpush1.msra.mxu0 0.0
        %3019 = vmatprep.subr.mxu0 0.0
        %3020 = vmatpush1.msra.mxu0 0.0
        %3021 = vmatprep.subr.mxu0 0.0
        %3022 = vmatpush1.msra.mxu0 0.0
        %3023 = vmatprep.subr.mxu0 0.0
        %3024 = vmatpush1.msra.mxu0 0.0
        %3025 = vmatprep.subr.mxu0 0.0
        %3026 = vmatpush1.msra.mxu0 0.0
        %3027 = vmatprep.subr.mxu0 0.0
        %3028 = vmatpush1.msra.mxu0 0.0
        %3029 = vmatprep.subr.mxu0 0.0
        %3030 = vmatpush1.msra.mxu0 0.0
        %3031 = vmatprep.subr.mxu0 0.0
        %3032 = vmatpush1.msra.mxu0 0.0
        %3033 = vmatprep.subr.mxu0 0.0
        %3034 = vmatpush1.msra.mxu0 0.0
        %3035 = vmatprep.subr.mxu0 0.0
        %3036 = vmatpush1.msra.mxu0 0.0
        %3037 = vmatprep.subr.mxu0 0.0
        %3038 = vmatpush1.msra.mxu0 0.0
        %3039 = vmatprep.subr.mxu0 0.0
        %3040 = vmatpush1.msra.mxu0 0.0
        %3041 = vmatprep.subr.mxu0 0.0
        %3042 = vmatpush1.msra.mxu0 0.0
        %3043 = vmatprep.subr.mxu0 0.0
        %3044 = vmatpush1.msra.mxu0 0.0
        %3045 = vmatprep.subr.mxu0 0.0
        %3046 = vmatpush1.msra.mxu0 0.0
        %3047 = vmatprep.subr.mxu0 0.0
        %3048 = vmatpush1.msra.mxu0 0.0
        %3049 = vmatprep.subr.mxu0 0.0
        %3050 = vmatpush1.msra.mxu0 0.0
        %3051 = vmatprep.subr.mxu0 0.0
        %3052 = vmatpush1.msra.mxu0 0.0
        %3053 = vmatprep.mubr.f32.mxu0 0.0
        %3054 = vmatmul.mubr.f32.gmra.mrb[0].mxu0 %v2987
        %v3055 = vpop.f32.mrb[0].mxu0
        %v3056 = vadd.f32 0.0, %v3055
        %v3057 = vpop.f32.mrb[0].mxu0
        %3058 = vdwg.mxu0
        %v3060 = vsel %vm1451, %v2907, 0
        %3062 = vmatprep.subr.mxu0 0.0
        %3063 = vmatpush1.msra.mxu0 %v2911
        %3064 = vmatprep.subr.mxu0 0.0
        %3065 = vmatpush1.msra.mxu0 0.0
        %3066 = vmatprep.subr.mxu0 0.0
        %3067 = vmatpush1.msra.mxu0 0.0
        %3068 = vmatprep.subr.mxu0 0.0
        %3069 = vmatpush1.msra.mxu0 0.0
        %3070 = vmatprep.subr.mxu0 0.0
        %3071 = vmatpush1.msra.mxu0 0.0
        %3072 = vmatprep.subr.mxu0 0.0
        %3073 = vmatpush1.msra.mxu0 0.0
        %3074 = vmatprep.subr.mxu0 0.0
        %3075 = vmatpush1.msra.mxu0 0.0
        %3076 = vmatprep.subr.mxu0 0.0
        %3077 = vmatpush1.msra.mxu0 0.0
        %3078 = vmatprep.subr.mxu0 0.0
        %3079 = vmatpush1.msra.mxu0 0.0
        %3080 = vmatprep.subr.mxu0 0.0
        %3081 = vmatpush1.msra.mxu0 0.0
        %3082 = vmatprep.subr.mxu0 0.0
        %3083 = vmatpush1.msra.mxu0 0.0
        %3084 = vmatprep.subr.mxu0 0.0
        %3085 = vmatpush1.msra.mxu0 0.0
        %3086 = vmatprep.subr.mxu0 0.0
        %3087 = vmatpush1.msra.mxu0 0.0
        %3088 = vmatprep.subr.mxu0 0.0
        %3089 = vmatpush1.msra.mxu0 0.0
        %3090 = vmatprep.subr.mxu0 0.0
        %3091 = vmatpush1.msra.mxu0 0.0
        %3092 = vmatprep.subr.mxu0 0.0
        %3093 = vmatpush1.msra.mxu0 0.0
        %3094 = vmatprep.subr.mxu0 0.0
        %3095 = vmatpush1.msra.mxu0 0.0
        %3096 = vmatprep.subr.mxu0 0.0
        %3097 = vmatpush1.msra.mxu0 0.0
        %3098 = vmatprep.subr.mxu0 0.0
        %3099 = vmatpush1.msra.mxu0 0.0
        %3100 = vmatprep.subr.mxu0 0.0
        %3101 = vmatpush1.msra.mxu0 0.0
        %3102 = vmatprep.subr.mxu0 0.0
        %3103 = vmatpush1.msra.mxu0 0.0
        %3104 = vmatprep.subr.mxu0 0.0
        %3105 = vmatpush1.msra.mxu0 0.0
        %3106 = vmatprep.subr.mxu0 0.0
        %3107 = vmatpush1.msra.mxu0 0.0
        %3108 = vmatprep.subr.mxu0 0.0
        %3109 = vmatpush1.msra.mxu0 0.0
        %3110 = vmatprep.subr.mxu0 0.0
        %3111 = vmatpush1.msra.mxu0 0.0
        %3112 = vmatprep.subr.mxu0 0.0
        %3113 = vmatpush1.msra.mxu0 0.0
        %3114 = vmatprep.subr.mxu0 0.0
        %3115 = vmatpush1.msra.mxu0 0.0
        %3116 = vmatprep.subr.mxu0 0.0
        %3117 = vmatpush1.msra.mxu0 0.0
        %3118 = vmatprep.subr.mxu0 0.0
        %3119 = vmatpush1.msra.mxu0 0.0
        %3120 = vmatprep.subr.mxu0 0.0
        %3121 = vmatpush1.msra.mxu0 0.0
        %3122 = vmatprep.subr.mxu0 0.0
        %3123 = vmatpush1.msra.mxu0 0.0
        %3124 = vmatprep.subr.mxu0 0.0
        %3125 = vmatpush1.msra.mxu0 0.0
        %3126 = vmatprep.mubr.f32.mxu0 0.0
        %3127 = vmatmul.mubr.f32.gmra.mrb[0].mxu0 %v3060
        %v3128 = vpop.f32.mrb[0].mxu0
        %v3129 = vadd.f32 0.0, %v3128
        %v3130 = vpop.f32.mrb[0].mxu0
        %3131 = vdwg.mxu0
        %v3133 = vsel %vm1451, %v2908, 0
        %3135 = vmatprep.subr.mxu0 0.0
        %3136 = vmatpush1.msra.mxu0 %v2912
        %3137 = vmatprep.subr.mxu0 0.0
        %3138 = vmatpush1.msra.mxu0 0.0
        %3139 = vmatprep.subr.mxu0 0.0
        %3140 = vmatpush1.msra.mxu0 0.0
        %3141 = vmatprep.subr.mxu0 0.0
        %3142 = vmatpush1.msra.mxu0 0.0
        %3143 = vmatprep.subr.mxu0 0.0
        %3144 = vmatpush1.msra.mxu0 0.0
        %3145 = vmatprep.subr.mxu0 0.0
        %3146 = vmatpush1.msra.mxu0 0.0
        %3147 = vmatprep.subr.mxu0 0.0
        %3148 = vmatpush1.msra.mxu0 0.0
        %3149 = vmatprep.subr.mxu0 0.0
        %3150 = vmatpush1.msra.mxu0 0.0
        %3151 = vmatprep.subr.mxu0 0.0
        %3152 = vmatpush1.msra.mxu0 0.0
        %3153 = vmatprep.subr.mxu0 0.0
        %3154 = vmatpush1.msra.mxu0 0.0
        %3155 = vmatprep.subr.mxu0 0.0
        %3156 = vmatpush1.msra.mxu0 0.0
        %3157 = vmatprep.subr.mxu0 0.0
        %3158 = vmatpush1.msra.mxu0 0.0
        %3159 = vmatprep.subr.mxu0 0.0
        %3160 = vmatpush1.msra.mxu0 0.0
        %3161 = vmatprep.subr.mxu0 0.0
        %3162 = vmatpush1.msra.mxu0 0.0
        %3163 = vmatprep.subr.mxu0 0.0
        %3164 = vmatpush1.msra.mxu0 0.0
        %3165 = vmatprep.subr.mxu0 0.0
        %3166 = vmatpush1.msra.mxu0 0.0
        %3167 = vmatprep.subr.mxu0 0.0
        %3168 = vmatpush1.msra.mxu0 0.0
        %3169 = vmatprep.subr.mxu0 0.0
        %3170 = vmatpush1.msra.mxu0 0.0
        %3171 = vmatprep.subr.mxu0 0.0
        %3172 = vmatpush1.msra.mxu0 0.0
        %3173 = vmatprep.subr.mxu0 0.0
        %3174 = vmatpush1.msra.mxu0 0.0
        %3175 = vmatprep.subr.mxu0 0.0
        %3176 = vmatpush1.msra.mxu0 0.0
        %3177 = vmatprep.subr.mxu0 0.0
        %3178 = vmatpush1.msra.mxu0 0.0
        %3179 = vmatprep.subr.mxu0 0.0
        %3180 = vmatpush1.msra.mxu0 0.0
        %3181 = vmatprep.subr.mxu0 0.0
        %3182 = vmatpush1.msra.mxu0 0.0
        %3183 = vmatprep.subr.mxu0 0.0
        %3184 = vmatpush1.msra.mxu0 0.0
        %3185 = vmatprep.subr.mxu0 0.0
        %3186 = vmatpush1.msra.mxu0 0.0
        %3187 = vmatprep.subr.mxu0 0.0
        %3188 = vmatpush1.msra.mxu0 0.0
        %3189 = vmatprep.subr.mxu0 0.0
        %3190 = vmatpush1.msra.mxu0 0.0
        %3191 = vmatprep.subr.mxu0 0.0
        %3192 = vmatpush1.msra.mxu0 0.0
        %3193 = vmatprep.subr.mxu0 0.0
        %3194 = vmatpush1.msra.mxu0 0.0
        %3195 = vmatprep.subr.mxu0 0.0
        %3196 = vmatpush1.msra.mxu0 0.0
        %3197 = vmatprep.subr.mxu0 0.0
        %3198 = vmatpush1.msra.mxu0 0.0
        %3199 = vmatprep.mubr.f32.mxu0 0.0
        %3200 = vmatmul.mubr.f32.gmra.mrb[0].mxu0 %v3133
        %v3201 = vpop.f32.mrb[0].mxu0
        %v3202 = vadd.f32 0.0, %v3201
        %v3203 = vpop.f32.mrb[0].mxu0
        %3204 = vdwg.mxu0
        %v3205 = vsel %vm557, %v2983, 0.0
        %v3206 = vsel %vm557, %v3056, 0.0
        %v3207 = vadd.f32 %v3205, %v3206
        %v3208 = vsel %vm557, %v3129, 0.0
        %v3209 = vadd.f32 %v3207, %v3208
        %v3210 = vsel %vm557, %v3202, 0.0
        %v3211 = vadd.f32 %v3209, %v3210
        %v3212 = vadd.f32 %v3211, %v550
        %v3213 = vsel %vm557, %v3212, 0.0
        %3214 = vadd.xlane.f32.xlu0 %v3213
        %v3215 = vpop.xlane.xlu0 %3214
        %v3216 = vrcp.pop 32.0
        %v3217 = vmul.f32 %v3215, %v3216
        %v3218 = vsub.f32 %v3212, %v3217
        %v3219 = vmul.f32 %v3218, %v3218
        %v3220 = vsel %vm557, %v3219, 0.0
        %3221 = vadd.xlane.f32.xlu0 %v3220
        %v3222 = vpop.xlane.xlu0 %3221
        %v3223 = vmul.f32 %v3222, %v3216
        %v3224 = vadd.f32 %v3223, 1e-05
        %v3225 = vrsqrt.pop %v3224
        %v3226 = vmul.f32 %v3218, %v3225
        %v3227 = vld [vmem:[%s9] sm:$0x1]
        %v3229 = vlaneseq
        %v3230 = vshrl.u32 %v3229, 7
        %v3231 = vsub.s32 0, %v3230
        %v3232 = vrot.slane %v3227, %v3231
        %v3234 = vmul.f32 %v3226, %v3232
        %v3235 = vld [vmem:[%s10] sm:$0x1]
        %v3237 = vlaneseq
        %v3238 = vshrl.u32 %v3237, 7
        %v3239 = vsub.s32 0, %v3238
        %v3240 = vrot.slane %v3235, %v3239
        %v3242 = vadd.f32 %v3234, %v3240
        %3243 = vst.msk [vmem:[%s543] sm:$0xff] %vm557, %v3242
        %s3244 = sand.u32 %s292, 1
        %s3245 = scalar_lea.sflag [#allocation4], %s3244
        %s3246 = sand.u32 %s292, 1
        %s3247 = smul.addr %s3246, 8
        %s3248 = scalar_lea.vmem [#allocation14], %s3247
        // Predicated region
        $region93: #{tpu_custom_call.1} parent=63 // pred_check
          %p3249 = pneg %p302
        $region94: #{tpu_custom_call.1} parent=63 // pred_check_branch
          %3251 = sbr.rel (%p3249) target = $region96
        $region95: #{tpu_custom_call.1} parent=63 // pred_region
          %s3253 = ssub.s32 128, 128
          %3254 = vsyncadd %s3245, %s3253
          %s3255 = smul.addr %s33, 128
          %s3256 = scalar_lea.hbm %s11, %s3255
          %s3258 = sshll.u32 %s3248, 4
          %s3259 = int_to_ptr.vmem [resolvable:$true] %s3258
          %3261 = dma.vmem_to_hbm [thread:$0]  %s3259, 128, %s3256, %s3245
        $region96: #{tpu_custom_call.1} parent=63 // pred_fallthru
          _
      $region64: #{tpu_custom_call.1} parent=5 // pred_fallthru
        _
      %p3262 = scmp.le.s32.totalorder 2, %s28
      // Predicated region
      $region97: #{tpu_custom_call.1} parent=5 // pred_check
        %p3263 = pneg %p3262
      $region98: #{tpu_custom_call.1} parent=5 // pred_check_branch
        %3265 = sbr.rel (%p3263) target = $region100
      $region99: #{tpu_custom_call.1} parent=5 // pred_region
        %s3266 = ssub.s32 %s28, 2
        // Predicated region
        $region101: #{tpu_custom_call.1} parent=99 // pred_check
          %p3267 = pneg %p308
        $region102: #{tpu_custom_call.1} parent=99 // pred_check_branch
          %3269 = sbr.rel (%p3267) target = $region104
        $region103: #{tpu_custom_call.1} parent=99 // pred_region
          %s3270 = sand.u32 %s293, 1
          %s3271 = scalar_lea.sflag [#allocation4], %s3270
          %s3272 = sand.u32 %s293, 1
          %s3273 = smul.addr %s3272, 8
          %s3274 = scalar_lea.vmem [#allocation14], %s3273
          %3275 = dma.done %s3271, 128
        $region104: #{tpu_custom_call.1} parent=99 // pred_fallthru
          _
      $region100: #{tpu_custom_call.1} parent=5 // pred_fallthru
        _
    $region6: #{tpu_custom_call.1} parent=1 // loop_footer
      %s32 = sadd.s32 1, %s28
    $region7: #{tpu_custom_call.1} parent=1 // loop_footer_branch
      %27 = sbr.rel target = $region3
    $region8: #{tpu_custom_call.1} parent=1 // loop_exit
      _
    %3276 = vsyncpa [#allocation3], 1
    %s3277 = scalar_lea.sflag [#allocation3], 1
    %3278 = vsyncpa %s3277, 1
    %3279 = vsyncpa [#allocation6], 1
    %s3280 = scalar_lea.sflag [#allocation6], 1
    %3281 = vsyncpa %s3280, 1
    %3282 = vsyncpa [#allocation9], 1
    %3283 = vsyncpa [#allocation12], 1
    %3284 = vsyncpa [#allocation4], 1
    %s3285 = scalar_lea.sflag [#allocation4], 1
    %3286 = vsyncpa %s3285, 1

</llo_original>
